<compile_context>
chip_gen: v7x
topology: tpu7x:2x2x1
jax: 0.10.0
libtpu: 0.0.40
codegen_flags: <defaults>
</compile_context>

<pallas_src>
import functools

import jax
import jax.numpy as jnp
from jax.experimental import pallas as pl
from jax.experimental.pallas import tpu as pltpu

D_VALS = (1.5, 0.75, 0.3725, 0.18625, 0.093125)   # K = 5 decay/threshold schedule
LANE = 128
SUBLANE = 8
BN_EPS = 1e-5
DEFAULT_TB = 1024                                  # row tile for the 1x1 path
VMEM_LIMIT = 32 * 1024 * 1024                      # explicit scoped-VMEM limit (safe on all gens)


def _round_up(x, m):
    return (x + m - 1) // m * m


def _pad2d(a, rows, cols):
    r, c = a.shape
    return jnp.pad(a, ((0, rows - r), (0, cols - c)))


def _row_tiling(n_rows, tb):
    tb = min(tb, _round_up(n_rows, SUBLANE))
    n_pad = _round_up(n_rows, tb)
    return tb, n_pad, n_pad // tb


def _bn_fold(bn):
    gamma, beta, mean, var = bn
    scale = gamma / jnp.sqrt(var + BN_EPS)
    return scale, beta - mean * scale


# ---------------------------------------------------------------------------
# Kernel bodies
# ---------------------------------------------------------------------------

def _fs_code(act):
    """5-step FS coding on activation act (rows, C).

    Returns (sum_k d_k*z_k, per-lane spike counts (1, C)).  Uses the cheaper
    dz = where(c > d, d, 0) form; counts recovered via sum(dz) * (1/d).
    """
    c = act
    zw = jnp.zeros_like(act)
    spk = jnp.zeros((1, act.shape[-1]), jnp.float32)
    for d in D_VALS:
        dz = jnp.where(c > d, d, 0.0)        # == d * (c - d > 0)
        c = c - dz
        zw = zw + dz
        spk = spk + jnp.sum(dz, axis=0, keepdims=True) * (1.0 / d)
    return zw, spk


def _bn_code_matmul_kernel(x_ref, scale_ref, shift_ref, w_ref, out_ref, spk_ref):
    """BN + ReLU + FS-coding + ONE d-weighted matmul (the 1x1 spiking conv)."""
    act = jnp.maximum(x_ref[...] * scale_ref[...] + shift_ref[...], 0.0)
    zw, spk = _fs_code(act)
    out_ref[...] = jnp.dot(zw, w_ref[...], preferred_element_type=jnp.float32)
    spk_ref[0] = spk                          # lane-dense per-tile partial counts


def _bn_code_conv3x3_kernel(y_ref, scale_ref, shift_ref, mask_ref, w_ref,
                            out_ref, spk_ref, zbuf, *, width, n_rows, margin):
    """BN + ReLU + FS-coding + 3x3 conv (padding=1), one full image per grid step.

    y_ref holds one image in spatially zero-padded, flattened (H+2)*(W+2) layout.
    The coded map is stored into a VMEM margin buffer; each of the 9 taps is a
    statically-offset load from that buffer feeding one accumulated matmul.
    """
    p, m = n_rows, margin
    c1p = zbuf.shape[1]
    c2p = out_ref.shape[2]

    act = jnp.maximum(y_ref[0] * scale_ref[...] + shift_ref[...], 0.0) * mask_ref[...]
    zw, spk = _fs_code(act)

    # margin buffer: zeros above/below, coded map in the middle
    zbuf[pl.ds(0, m), :] = jnp.zeros((m, c1p), jnp.float32)
    zbuf[pl.ds(m + p, m), :] = jnp.zeros((m, c1p), jnp.float32)
    zbuf[pl.ds(m, p), :] = zw

    acc = jnp.zeros((p, c2p), jnp.float32)
    for t in range(9):
        ky, kx = t // 3, t % 3
        off = m + (ky - 1) * (width + 2) + (kx - 1)
        acc = acc + jnp.dot(zbuf[pl.ds(off, p), :], w_ref[t],
                            preferred_element_type=jnp.float32)
    out_ref[0] = acc
    spk_ref[0] = spk


# ---------------------------------------------------------------------------
# pallas_call wrappers
# ---------------------------------------------------------------------------

def _pad_row_spike_count(shift_row):
    """Spikes produced by one all-zero (row-padded) input row: activation = relu(shift)."""
    c = jnp.maximum(shift_row, 0.0)
    total = jnp.float32(0.0)
    for d in D_VALS:
        dz = jnp.where(c > d, d, 0.0)
        c = c - dz
        total = total + jnp.sum(dz) * (1.0 / d)
    return total


def spiking_conv1x1_from_slab(slab, c_l, w1_oihw, bn1, *, tb, nt, n, n_pad):
    """relu(bn1(x)) -> spiking 1x1 conv, reading the first c_l channels of the slab.

    slab: (n_pad, c_total_p) zero-initialized feature slab; only the 128-aligned
    channel prefix round_up(c_l, 128) is DMA'd per tile (BlockSpec prefix read).
    Returns (out (n_pad, cmidp), spike_sum).
    """
    c_mid = w1_oihw.shape[0]
    cpref = _round_up(c_l, LANE)
    cmidp = _round_up(c_mid, LANE)
    scale, shift = _bn_fold(bn1)
    scale_p = _pad2d(scale.reshape(1, c_l), 1, cpref)
    shift_p = _pad2d(shift.reshape(1, c_l), 1, cpref)
    w_p = _pad2d(jnp.transpose(w1_oihw[:, :, 0, 0]), cpref, cmidp)     # (c_l, c_mid) padded

    out, spk = pl.pallas_call(
        _bn_code_matmul_kernel,
        grid=(nt,),
        in_specs=[
            pl.BlockSpec((tb, cpref), lambda i: (i, 0)),     # channel-prefix of the slab
            pl.BlockSpec((1, cpref), lambda i: (0, 0)),      # BN scale (resident)
            pl.BlockSpec((1, cpref), lambda i: (0, 0)),      # BN shift (resident)
            pl.BlockSpec((cpref, cmidp), lambda i: (0, 0)),  # weight (resident)
        ],
        out_specs=(
            pl.BlockSpec((tb, cmidp), lambda i: (i, 0)),
            pl.BlockSpec((1, 1, cpref), lambda i: (i, 0, 0)),
        ),
        out_shape=(
            jax.ShapeDtypeStruct((n_pad, cmidp), jnp.float32),
            jax.ShapeDtypeStruct((nt, 1, cpref), jnp.float32),
        ),
        compiler_params=pltpu.CompilerParams(
            dimension_semantics=("parallel",), vmem_limit_bytes=VMEM_LIMIT),
    )(slab, scale_p, shift_p, w_p)

    spk_total = jnp.sum(spk)
    if n_pad > n:
        # Padded rows are all-zero; their (identical) spike count is subtracted exactly,
        # so the hot path needs no in-kernel row-validity mask.
        spk_total = spk_total - (n_pad - n) * _pad_row_spike_count(shift_p)
    return out, spk_total


def spiking_conv3x3(y_mid, w2_oihw, bn2, *, b, h, w, n):
    """relu(bn2(y)) -> spiking 3x3 conv, padding=1, fully fused in one Pallas kernel.

    y_mid: (n_pad, cmidp) channel-padded output of the 1x1 path.
    Returns (out (n, growth), spike_sum, spike_numel).
    """
    growth, c_mid = w2_oihw.shape[0], w2_oihw.shape[1]
    cmidp = y_mid.shape[1]
    c2p = _round_up(growth, LANE)
    scale, shift = _bn_fold(bn2)
    scale_p = _pad2d(scale.reshape(1, c_mid), 1, cmidp)
    shift_p = _pad2d(shift.reshape(1, c_mid), 1, cmidp)

    # per-tap weights: (9, cmidp, c2p), tap t = ky*3 + kx
    w9 = jnp.transpose(w2_oihw, (2, 3, 1, 0)).reshape(9, c_mid, growth)
    w9 = jnp.pad(w9, ((0, 0), (0, cmidp - c_mid), (0, c2p - growth)))

    hp, wp = h + 2, w + 2
    p_rows = hp * wp
    m = _round_up(w + 3, SUBLANE)       # margin >= max |tap offset| = w + 3

    # spatially zero-padded layout (conv padding=1), flattened per image
    y_sp = jnp.pad(y_mid[:n].reshape(b, h, w, cmidp), ((0, 0), (1, 1), (1, 1), (0, 0)))
    y_sp = y_sp.reshape(b, p_rows, cmidp)

    # interior mask: kills spikes/contributions from the spatial zero-padding ring
    hh = jnp.arange(hp).reshape(hp, 1)
    ww = jnp.arange(wp).reshape(1, wp)
    mask = ((hh >= 1) & (hh <= h) & (ww >= 1) & (ww <= w)).astype(jnp.float32)
    mask = mask.reshape(p_rows, 1)

    kernel = functools.partial(_bn_code_conv3x3_kernel,
                               width=w, n_rows=p_rows, margin=m)
    out_p, spk = pl.pallas_call(
        kernel,
        grid=(b,),
        in_specs=[
            pl.BlockSpec((1, p_rows, cmidp), lambda i: (i, 0, 0)),
            pl.BlockSpec((1, cmidp), lambda i: (0, 0)),
            pl.BlockSpec((1, cmidp), lambda i: (0, 0)),
            pl.BlockSpec((p_rows, 1), lambda i: (0, 0)),
            pl.BlockSpec((9, cmidp, c2p), lambda i: (0, 0, 0)),
        ],
        out_specs=(
            pl.BlockSpec((1, p_rows, c2p), lambda i: (i, 0, 0)),
            pl.BlockSpec((1, 1, cmidp), lambda i: (i, 0, 0)),
        ),
        out_shape=(
            jax.ShapeDtypeStruct((b, p_rows, c2p), jnp.float32),
            jax.ShapeDtypeStruct((b, 1, cmidp), jnp.float32),
        ),
        scratch_shapes=[pltpu.VMEM((p_rows + 2 * m, cmidp), jnp.float32)],
        compiler_params=pltpu.CompilerParams(
            dimension_semantics=("parallel",), vmem_limit_bytes=VMEM_LIMIT),
    )(y_sp, scale_p, shift_p, mask, w9)

    out = out_p.reshape(b, hp, wp, c2p)[:, 1:h + 1, 1:w + 1, :growth]
    return out.reshape(b * h * w, growth), jnp.sum(spk), b * h * w * c_mid


# ---------------------------------------------------------------------------
# Module-level forward (channels-last internally; channels on the lane axis)
# ---------------------------------------------------------------------------

def dense_block_forward(x_nchw, layer_params):
    """DenseBlock.forward.  x_nchw: (B, C, H, W).  Returns (x_out NCHW, c_spikes, c_spike_n)."""
    b, c_in, h, w = x_nchw.shape
    growth = layer_params[0]["w2"].shape[0]
    n = b * h * w
    c_total = c_in + len(layer_params) * growth
    c_total_p = _round_up(c_total, LANE)
    tb, n_pad, nt = _row_tiling(n, DEFAULT_TB)

    # One channel-padded slab for the whole block: layers read a channel prefix directly
    # (BlockSpec prefix read) and write their growth-wide output into their slice, so the
    # growing feature map is never re-padded or re-concatenated.
    x2d = jnp.transpose(x_nchw, (0, 2, 3, 1)).reshape(n, c_in)
    slab = jnp.zeros((n_pad, c_total_p), jnp.float32)
    slab = jax.lax.dynamic_update_slice(slab, x2d, (0, 0))

    c_spikes = jnp.float32(0.0)
    c_spike_n = jnp.float32(0.0)
    c_l = c_in
    for p in layer_params:
        y_mid, spk1 = spiking_conv1x1_from_slab(slab, c_l, p["w1"], p["bn1"],
                                                tb=tb, nt=nt, n=n, n_pad=n_pad)
        y_out, spk2, n2 = spiking_conv3x3(y_mid, p["w2"], p["bn2"], b=b, h=h, w=w, n=n)
        cs = spk1 + spk2
        cn = cs + n2                       # faithful to the original code (reuses c_spikes)
        c_spikes = c_spikes + cs
        c_spike_n = c_spike_n + cn
        slab = jax.lax.dynamic_update_slice(slab, y_out, (0, c_l))
        c_l += growth

    out = slab[:n, :c_total].reshape(b, h, w, c_total)
    return jnp.transpose(out, (0, 3, 1, 2)), c_spikes, c_spike_n


# ---------------------------------------------------------------------------
# Pure-JAX reference (mirrors the PyTorch module op-for-op)
# ---------------------------------------------------------------------------

def _spiking_conv_ref(x, w_oihw, pad):
    c = x
    spikes = jnp.zeros_like(c)
    w_hwio = jnp.transpose(w_oihw, (2, 3, 1, 0))
    out = 0.0
    for d in D_VALS:
        z = (c - d > 0.0).astype(jnp.float32)
        c = c - d * z
        spikes = spikes + z
        out = out + d * jax.lax.conv_general_dilated(
            z, w_hwio, window_strides=(1, 1), padding=[(pad, pad), (pad, pad)],
            dimension_numbers=("NHWC", "HWIO", "NHWC"),
            precision=jax.lax.Precision.HIGHEST)
    return out, jnp.sum(spikes), z.size


def _bn_relu_ref(x, bn):
    scale, shift = _bn_fold(bn)
    return jnp.maximum(x * scale + shift, 0.0)


def dense_block_ref(x_nchw, layer_params):
    x = jnp.transpose(x_nchw, (0, 2, 3, 1))
    c_spikes = 0.0
    c_spike_n = 0.0
    for p in layer_params:
        y = _bn_relu_ref(x, p["bn1"])
        y, s1, _n1 = _spiking_conv_ref(y, p["w1"], pad=0)
        y = _bn_relu_ref(y, p["bn2"])
        y, s2, n2 = _spiking_conv_ref(y, p["w2"], pad=1)
        cs = s1 + s2
        cn = cs + n2
        x = jnp.concatenate([x, y], axis=-1)
        c_spikes = c_spikes + cs
        c_spike_n = c_spike_n + cn
    return jnp.transpose(x, (0, 3, 1, 2)), c_spikes, c_spike_n


if __name__ == "__main__":
    # Small DenseBlock: 2 layers, inplanes=16, growth_rate=4, bn_size=4, batch=2, 8x8 spatial.
    B, C_IN, H, W = 2, 16, 8, 8
    NUM_LAYERS, GROWTH, BN_SIZE = 2, 4, 4

    key = jax.random.PRNGKey(0)

    def make_bn(k, c):
        k1, k2, k3, k4 = jax.random.split(k, 4)
        return (jax.random.uniform(k1, (c,), minval=0.8, maxval=1.2).astype(jnp.float32),
                jax.random.uniform(k2, (c,), minval=-0.1, maxval=0.3).astype(jnp.float32),
                (jax.random.normal(k3, (c,)) * 0.1).astype(jnp.float32),
                jax.random.uniform(k4, (c,), minval=0.5, maxval=1.5).astype(jnp.float32))

    layer_params = []
    for i in range(NUM_LAYERS):
        inpl = C_IN + i * GROWTH
        mid = BN_SIZE * GROWTH
        key, kb1, kw1, kb2, kw2 = jax.random.split(key, 5)
        layer_params.append({
            "bn1": make_bn(kb1, inpl),
            "w1": (jax.random.normal(kw1, (mid, inpl, 1, 1)) / jnp.sqrt(inpl)).astype(jnp.float32),
            "bn2": make_bn(kb2, mid),
            "w2": (jax.random.normal(kw2, (GROWTH, mid, 3, 3)) / jnp.sqrt(9.0 * mid)).astype(jnp.float32),
        })

    key, kx = jax.random.split(key)
    x = jax.random.normal(kx, (B, C_IN, H, W), dtype=jnp.float32)

    fwd = jax.jit(dense_block_forward)
    out, c_spikes, c_spike_n = fwd(x, layer_params)
    jax.block_until_ready((out, c_spikes, c_spike_n))

    out_ref, cs_ref, cn_ref = dense_block_ref(x, layer_params)

    assert out.shape == (B, C_IN + NUM_LAYERS * GROWTH, H, W)
    # FS coding is a hard-threshold nonlinearity: ulp-level accumulation-order differences
    # between the fused Pallas matmul path and the XLA conv reference can flip an isolated
    # spike, so allow a small number of localized outliers while still catching any
    # systematic error (wrong BN fold / weight layout / tap offsets would corrupt >=512
    # elements and shift spike counts by hundreds).
    diff = jnp.abs(out - out_ref)
    tol = 1e-3 + 1e-3 * jnp.abs(out_ref)
    n_bad = int(jnp.sum(diff > tol))
    assert n_bad <= 300, f"{n_bad} mismatching elements (max diff {float(diff.max()):.3e})"
    assert float(jnp.abs(c_spikes - cs_ref)) <= 100.0, (float(c_spikes), float(cs_ref))
    assert float(jnp.abs(c_spike_n - cn_ref)) <= 200.0, (float(c_spike_n), float(cn_ref))

    print("KERNEL_OK")
</pallas_src>

<mosaic_0001>
module attributes {stable_mosaic.version = 11 : i64} {
  func.func @_bn_code_matmul_kernel(%arg0: i32, %arg1: memref<128x128xf32, #tpu.memory_space<vmem>>, %arg2: memref<1x128xf32, #tpu.memory_space<vmem>>, %arg3: memref<1x128xf32, #tpu.memory_space<vmem>>, %arg4: memref<128x128xf32, #tpu.memory_space<vmem>>, %arg5: memref<128x128xf32, #tpu.memory_space<vmem>>, %arg6: memref<1x1x128xf32, #tpu.memory_space<vmem>>) attributes {dimension_semantics = [#tpu.dimension_semantics<parallel>], iteration_bounds = array<i64: 1>, scalar_prefetch = 0 : i64, scratch_operands = 0 : i64, tpu.core_type = #tpu.core_type<tc>, window_params = [{transform_indices = @transform_0, window_bounds = array<i64: 128, 128>}, {pipeline_mode = #tpu.pipeline_mode<synchronous>, transform_indices = @transform_1, window_bounds = array<i64: 1, 128>}, {pipeline_mode = #tpu.pipeline_mode<synchronous>, transform_indices = @transform_2, window_bounds = array<i64: 1, 128>}, {pipeline_mode = #tpu.pipeline_mode<synchronous>, transform_indices = @transform_3, window_bounds = array<i64: 128, 128>}, {transform_indices = @transform_4, window_bounds = array<i64: 128, 128>}, {transform_indices = @transform_5, window_bounds = array<i64: 1, 1, 128>}]} {
    %c0 = arith.constant 0 : index
    %c0_0 = arith.constant 0 : index
    %0 = vector.load %arg1[%c0, %c0_0] : memref<128x128xf32, #tpu.memory_space<vmem>>, vector<128x128xf32>
    %c0_1 = arith.constant 0 : index
    %c0_2 = arith.constant 0 : index
    %1 = vector.load %arg2[%c0_1, %c0_2] : memref<1x128xf32, #tpu.memory_space<vmem>>, vector<1x128xf32>
    %2 = vector.broadcast %1 : vector<1x128xf32> to vector<128x128xf32>
    %3 = arith.mulf %0, %2 : vector<128x128xf32>
    %c0_3 = arith.constant 0 : index
    %c0_4 = arith.constant 0 : index
    %4 = vector.load %arg3[%c0_3, %c0_4] : memref<1x128xf32, #tpu.memory_space<vmem>>, vector<1x128xf32>
    %5 = vector.broadcast %4 : vector<1x128xf32> to vector<128x128xf32>
    %6 = arith.addf %3, %5 : vector<128x128xf32>
    %cst = arith.constant 0.000000e+00 : f32
    %7 = vector.broadcast %cst : f32 to vector<128x128xf32>
    %8 = arith.maximumf %6, %7 : vector<128x128xf32>
    %cst_5 = arith.constant 0.000000e+00 : f32
    %9 = vector.broadcast %cst_5 : f32 to vector<128x128xf32>
    %cst_6 = arith.constant 0.000000e+00 : f32
    %10 = vector.broadcast %cst_6 : f32 to vector<1x128xf32>
    %cst_7 = arith.constant 1.500000e+00 : f32
    %11 = vector.broadcast %cst_7 : f32 to vector<128x128xf32>
    %12 = arith.cmpf ogt, %8, %11 : vector<128x128xf32>
    %cst_8 = arith.constant 1.500000e+00 : f32
    %cst_9 = arith.constant 0.000000e+00 : f32
    %13 = vector.broadcast %cst_8 : f32 to vector<128x128xf32>
    %14 = vector.broadcast %cst_9 : f32 to vector<128x128xf32>
    %15 = arith.select %12, %13, %14 : vector<128x128xi1>, vector<128x128xf32>
    %16 = arith.subf %8, %15 : vector<128x128xf32>
    %17 = arith.addf %9, %15 : vector<128x128xf32>
    %cst_10 = arith.constant dense<0.000000e+00> : vector<128xf32>
    %18 = vector.multi_reduction <add>, %15, %cst_10 [0] : vector<128x128xf32> to vector<128xf32>
    %19 = vector.shape_cast %18 : vector<128xf32> to vector<1x128xf32>
    %cst_11 = arith.constant 0.666666686 : f32
    %20 = vector.broadcast %cst_11 : f32 to vector<1x128xf32>
    %21 = arith.mulf %19, %20 : vector<1x128xf32>
    %22 = arith.addf %10, %21 : vector<1x128xf32>
    %cst_12 = arith.constant 7.500000e-01 : f32
    %23 = vector.broadcast %cst_12 : f32 to vector<128x128xf32>
    %24 = arith.cmpf ogt, %16, %23 : vector<128x128xf32>
    %cst_13 = arith.constant 7.500000e-01 : f32
    %cst_14 = arith.constant 0.000000e+00 : f32
    %25 = vector.broadcast %cst_13 : f32 to vector<128x128xf32>
    %26 = vector.broadcast %cst_14 : f32 to vector<128x128xf32>
    %27 = arith.select %24, %25, %26 : vector<128x128xi1>, vector<128x128xf32>
    %28 = arith.subf %16, %27 : vector<128x128xf32>
    %29 = arith.addf %17, %27 : vector<128x128xf32>
    %cst_15 = arith.constant dense<0.000000e+00> : vector<128xf32>
    %30 = vector.multi_reduction <add>, %27, %cst_15 [0] : vector<128x128xf32> to vector<128xf32>
    %31 = vector.shape_cast %30 : vector<128xf32> to vector<1x128xf32>
    %cst_16 = arith.constant 1.33333337 : f32
    %32 = vector.broadcast %cst_16 : f32 to vector<1x128xf32>
    %33 = arith.mulf %31, %32 : vector<1x128xf32>
    %34 = arith.addf %22, %33 : vector<1x128xf32>
    %cst_17 = arith.constant 3.725000e-01 : f32
    %35 = vector.broadcast %cst_17 : f32 to vector<128x128xf32>
    %36 = arith.cmpf ogt, %28, %35 : vector<128x128xf32>
    %cst_18 = arith.constant 3.725000e-01 : f32
    %cst_19 = arith.constant 0.000000e+00 : f32
    %37 = vector.broadcast %cst_18 : f32 to vector<128x128xf32>
    %38 = vector.broadcast %cst_19 : f32 to vector<128x128xf32>
    %39 = arith.select %36, %37, %38 : vector<128x128xi1>, vector<128x128xf32>
    %40 = arith.subf %28, %39 : vector<128x128xf32>
    %41 = arith.addf %29, %39 : vector<128x128xf32>
    %cst_20 = arith.constant dense<0.000000e+00> : vector<128xf32>
    %42 = vector.multi_reduction <add>, %39, %cst_20 [0] : vector<128x128xf32> to vector<128xf32>
    %43 = vector.shape_cast %42 : vector<128xf32> to vector<1x128xf32>
    %cst_21 = arith.constant 2.68456388 : f32
    %44 = vector.broadcast %cst_21 : f32 to vector<1x128xf32>
    %45 = arith.mulf %43, %44 : vector<1x128xf32>
    %46 = arith.addf %34, %45 : vector<1x128xf32>
    %cst_22 = arith.constant 1.862500e-01 : f32
    %47 = vector.broadcast %cst_22 : f32 to vector<128x128xf32>
    %48 = arith.cmpf ogt, %40, %47 : vector<128x128xf32>
    %cst_23 = arith.constant 1.862500e-01 : f32
    %cst_24 = arith.constant 0.000000e+00 : f32
    %49 = vector.broadcast %cst_23 : f32 to vector<128x128xf32>
    %50 = vector.broadcast %cst_24 : f32 to vector<128x128xf32>
    %51 = arith.select %48, %49, %50 : vector<128x128xi1>, vector<128x128xf32>
    %52 = arith.subf %40, %51 : vector<128x128xf32>
    %53 = arith.addf %41, %51 : vector<128x128xf32>
    %cst_25 = arith.constant dense<0.000000e+00> : vector<128xf32>
    %54 = vector.multi_reduction <add>, %51, %cst_25 [0] : vector<128x128xf32> to vector<128xf32>
    %55 = vector.shape_cast %54 : vector<128xf32> to vector<1x128xf32>
    %cst_26 = arith.constant 5.36912775 : f32
    %56 = vector.broadcast %cst_26 : f32 to vector<1x128xf32>
    %57 = arith.mulf %55, %56 : vector<1x128xf32>
    %58 = arith.addf %46, %57 : vector<1x128xf32>
    %cst_27 = arith.constant 9.312500e-02 : f32
    %59 = vector.broadcast %cst_27 : f32 to vector<128x128xf32>
    %60 = arith.cmpf ogt, %52, %59 : vector<128x128xf32>
    %cst_28 = arith.constant 9.312500e-02 : f32
    %cst_29 = arith.constant 0.000000e+00 : f32
    %61 = vector.broadcast %cst_28 : f32 to vector<128x128xf32>
    %62 = vector.broadcast %cst_29 : f32 to vector<128x128xf32>
    %63 = arith.select %60, %61, %62 : vector<128x128xi1>, vector<128x128xf32>
    %64 = arith.addf %53, %63 : vector<128x128xf32>
    %cst_30 = arith.constant dense<0.000000e+00> : vector<128xf32>
    %65 = vector.multi_reduction <add>, %63, %cst_30 [0] : vector<128x128xf32> to vector<128xf32>
    %66 = vector.shape_cast %65 : vector<128xf32> to vector<1x128xf32>
    %cst_31 = arith.constant 10.7382555 : f32
    %67 = vector.broadcast %cst_31 : f32 to vector<1x128xf32>
    %68 = arith.mulf %66, %67 : vector<1x128xf32>
    %69 = arith.addf %58, %68 : vector<1x128xf32>
    %c0_32 = arith.constant 0 : index
    %c0_33 = arith.constant 0 : index
    %70 = vector.load %arg4[%c0_32, %c0_33] : memref<128x128xf32, #tpu.memory_space<vmem>>, vector<128x128xf32>
    %cst_34 = arith.constant dense<0.000000e+00> : vector<128x128xf32>
    %71 = tpu.matmul %64, %70, %cst_34 {dimension_numbers = #tpu.dot_dimension_numbers<[1], [0], [0], [1], [0, 0, 1, 1], [], []>} : vector<128x128xf32>, vector<128x128xf32>, vector<128x128xf32> -> vector<128x128xf32>
    %c0_35 = arith.constant 0 : index
    %c0_36 = arith.constant 0 : index
    %72 = vector.load %arg5[%c0_35, %c0_36] : memref<128x128xf32, #tpu.memory_space<vmem>>, vector<128x128xf32>
    tpu.vector_store %arg5[%c0_35, %c0_36], %71 {strides = array<i32>} : memref<128x128xf32, #tpu.memory_space<vmem>>, vector<128x128xf32>,
    %c0_37 = arith.constant 0 : index
    %c0_38 = arith.constant 0 : index
    %c0_39 = arith.constant 0 : index
    %73 = vector.load %arg6[%c0_37, %c0_38, %c0_39] : memref<1x1x128xf32, #tpu.memory_space<vmem>>, vector<1x1x128xf32>
    %74 = vector.shape_cast %73 : vector<1x1x128xf32> to vector<1x128xf32>
    %75 = vector.shape_cast %69 : vector<1x128xf32> to vector<1x1x128xf32>
    tpu.vector_store %arg6[%c0_37, %c0_38, %c0_39], %75 {strides = array<i32>} : memref<1x1x128xf32, #tpu.memory_space<vmem>>, vector<1x1x128xf32>,
    return
  }
  func.func @transform_0(%arg0: i32) -> (i32, i32) {
    %c0_i32 = arith.constant 0 : i32
    %c0_i32_0 = arith.constant 0 : i32
    return %arg0, %c0_i32 : i32, i32
  }
  func.func @transform_1(%arg0: i32) -> (i32, i32) {
    %c0_i32 = arith.constant 0 : i32
    %c0_i32_0 = arith.constant 0 : i32
    %c0_i32_1 = arith.constant 0 : i32
    return %c0_i32, %c0_i32_0 : i32, i32
  }
  func.func @transform_2(%arg0: i32) -> (i32, i32) {
    %c0_i32 = arith.constant 0 : i32
    %c0_i32_0 = arith.constant 0 : i32
    %c0_i32_1 = arith.constant 0 : i32
    return %c0_i32, %c0_i32_0 : i32, i32
  }
  func.func @transform_3(%arg0: i32) -> (i32, i32) {
    %c0_i32 = arith.constant 0 : i32
    %c0_i32_0 = arith.constant 0 : i32
    %c0_i32_1 = arith.constant 0 : i32
    return %c0_i32, %c0_i32_0 : i32, i32
  }
  func.func @transform_4(%arg0: i32) -> (i32, i32) {
    %c0_i32 = arith.constant 0 : i32
    %c0_i32_0 = arith.constant 0 : i32
    return %arg0, %c0_i32 : i32, i32
  }
  func.func @transform_5(%arg0: i32) -> (i32, i32, i32) {
    %c0_i32 = arith.constant 0 : i32
    %c0_i32_0 = arith.constant 0 : i32
    %c0_i32_1 = arith.constant 0 : i32
    return %arg0, %c0_i32, %c0_i32_0 : i32, i32, i32
  }
}

module attributes {stable_mosaic.version = 11 : i64} {
  func.func @_bn_code_conv3x3_kernel(%arg0: i32, %arg1: memref<1x100x128xf32, #tpu.memory_space<vmem>>, %arg2: memref<1x128xf32, #tpu.memory_space<vmem>>, %arg3: memref<1x128xf32, #tpu.memory_space<vmem>>, %arg4: memref<100x1xf32, #tpu.memory_space<vmem>>, %arg5: memref<9x128x128xf32, #tpu.memory_space<vmem>>, %arg6: memref<1x100x128xf32, #tpu.memory_space<vmem>>, %arg7: memref<1x1x128xf32, #tpu.memory_space<vmem>>, %arg8: memref<132x128xf32, #tpu.memory_space<vmem>>) attributes {dimension_semantics = [#tpu.dimension_semantics<parallel>], iteration_bounds = array<i64: 2>, scalar_prefetch = 0 : i64, scratch_operands = 1 : i64, tpu.core_type = #tpu.core_type<tc>, window_params = [{transform_indices = @transform_0, window_bounds = array<i64: 1, 100, 128>}, {pipeline_mode = #tpu.pipeline_mode<synchronous>, transform_indices = @transform_1, window_bounds = array<i64: 1, 128>}, {pipeline_mode = #tpu.pipeline_mode<synchronous>, transform_indices = @transform_2, window_bounds = array<i64: 1, 128>}, {pipeline_mode = #tpu.pipeline_mode<synchronous>, transform_indices = @transform_3, window_bounds = array<i64: 100, 1>}, {pipeline_mode = #tpu.pipeline_mode<synchronous>, transform_indices = @transform_4, window_bounds = array<i64: 9, 128, 128>}, {transform_indices = @transform_5, window_bounds = array<i64: 1, 100, 128>}, {transform_indices = @transform_6, window_bounds = array<i64: 1, 1, 128>}]} {
    %c0 = arith.constant 0 : index
    %c0_0 = arith.constant 0 : index
    %c0_1 = arith.constant 0 : index
    %0 = vector.load %arg1[%c0, %c0_0, %c0_1] : memref<1x100x128xf32, #tpu.memory_space<vmem>>, vector<1x100x128xf32>
    %1 = vector.shape_cast %0 : vector<1x100x128xf32> to vector<100x128xf32>
    %c0_2 = arith.constant 0 : index
    %c0_3 = arith.constant 0 : index
    %2 = vector.load %arg2[%c0_2, %c0_3] : memref<1x128xf32, #tpu.memory_space<vmem>>, vector<1x128xf32>
    %3 = vector.broadcast %2 : vector<1x128xf32> to vector<100x128xf32>
    %4 = arith.mulf %1, %3 : vector<100x128xf32>
    %c0_4 = arith.constant 0 : index
    %c0_5 = arith.constant 0 : index
    %5 = vector.load %arg3[%c0_4, %c0_5] : memref<1x128xf32, #tpu.memory_space<vmem>>, vector<1x128xf32>
    %6 = vector.broadcast %5 : vector<1x128xf32> to vector<100x128xf32>
    %7 = arith.addf %4, %6 : vector<100x128xf32>
    %cst = arith.constant 0.000000e+00 : f32
    %8 = vector.broadcast %cst : f32 to vector<100x128xf32>
    %9 = arith.maximumf %7, %8 : vector<100x128xf32>
    %c0_6 = arith.constant 0 : index
    %c0_7 = arith.constant 0 : index
    %10 = vector.load %arg4[%c0_6, %c0_7] : memref<100x1xf32, #tpu.memory_space<vmem>>, vector<100x1xf32>
    %11 = vector.broadcast %10 : vector<100x1xf32> to vector<100x128xf32>
    %12 = arith.mulf %9, %11 : vector<100x128xf32>
    %cst_8 = arith.constant 0.000000e+00 : f32
    %13 = vector.broadcast %cst_8 : f32 to vector<100x128xf32>
    %cst_9 = arith.constant 0.000000e+00 : f32
    %14 = vector.broadcast %cst_9 : f32 to vector<1x128xf32>
    %cst_10 = arith.constant 1.500000e+00 : f32
    %15 = vector.broadcast %cst_10 : f32 to vector<100x128xf32>
    %16 = arith.cmpf ogt, %12, %15 : vector<100x128xf32>
    %cst_11 = arith.constant 1.500000e+00 : f32
    %cst_12 = arith.constant 0.000000e+00 : f32
    %17 = vector.broadcast %cst_11 : f32 to vector<100x128xf32>
    %18 = vector.broadcast %cst_12 : f32 to vector<100x128xf32>
    %19 = arith.select %16, %17, %18 : vector<100x128xi1>, vector<100x128xf32>
    %20 = arith.subf %12, %19 : vector<100x128xf32>
    %21 = arith.addf %13, %19 : vector<100x128xf32>
    %cst_13 = arith.constant dense<0.000000e+00> : vector<128xf32>
    %22 = vector.multi_reduction <add>, %19, %cst_13 [0] : vector<100x128xf32> to vector<128xf32>
    %23 = vector.shape_cast %22 : vector<128xf32> to vector<1x128xf32>
    %cst_14 = arith.constant 0.666666686 : f32
    %24 = vector.broadcast %cst_14 : f32 to vector<1x128xf32>
    %25 = arith.mulf %23, %24 : vector<1x128xf32>
    %26 = arith.addf %14, %25 : vector<1x128xf32>
    %cst_15 = arith.constant 7.500000e-01 : f32
    %27 = vector.broadcast %cst_15 : f32 to vector<100x128xf32>
    %28 = arith.cmpf ogt, %20, %27 : vector<100x128xf32>
    %cst_16 = arith.constant 7.500000e-01 : f32
    %cst_17 = arith.constant 0.000000e+00 : f32
    %29 = vector.broadcast %cst_16 : f32 to vector<100x128xf32>
    %30 = vector.broadcast %cst_17 : f32 to vector<100x128xf32>
    %31 = arith.select %28, %29, %30 : vector<100x128xi1>, vector<100x128xf32>
    %32 = arith.subf %20, %31 : vector<100x128xf32>
    %33 = arith.addf %21, %31 : vector<100x128xf32>
    %cst_18 = arith.constant dense<0.000000e+00> : vector<128xf32>
    %34 = vector.multi_reduction <add>, %31, %cst_18 [0] : vector<100x128xf32> to vector<128xf32>
    %35 = vector.shape_cast %34 : vector<128xf32> to vector<1x128xf32>
    %cst_19 = arith.constant 1.33333337 : f32
    %36 = vector.broadcast %cst_19 : f32 to vector<1x128xf32>
    %37 = arith.mulf %35, %36 : vector<1x128xf32>
    %38 = arith.addf %26, %37 : vector<1x128xf32>
    %cst_20 = arith.constant 3.725000e-01 : f32
    %39 = vector.broadcast %cst_20 : f32 to vector<100x128xf32>
    %40 = arith.cmpf ogt, %32, %39 : vector<100x128xf32>
    %cst_21 = arith.constant 3.725000e-01 : f32
    %cst_22 = arith.constant 0.000000e+00 : f32
    %41 = vector.broadcast %cst_21 : f32 to vector<100x128xf32>
    %42 = vector.broadcast %cst_22 : f32 to vector<100x128xf32>
    %43 = arith.select %40, %41, %42 : vector<100x128xi1>, vector<100x128xf32>
    %44 = arith.subf %32, %43 : vector<100x128xf32>
    %45 = arith.addf %33, %43 : vector<100x128xf32>
    %cst_23 = arith.constant dense<0.000000e+00> : vector<128xf32>
    %46 = vector.multi_reduction <add>, %43, %cst_23 [0] : vector<100x128xf32> to vector<128xf32>
    %47 = vector.shape_cast %46 : vector<128xf32> to vector<1x128xf32>
    %cst_24 = arith.constant 2.68456388 : f32
    %48 = vector.broadcast %cst_24 : f32 to vector<1x128xf32>
    %49 = arith.mulf %47, %48 : vector<1x128xf32>
    %50 = arith.addf %38, %49 : vector<1x128xf32>
    %cst_25 = arith.constant 1.862500e-01 : f32
    %51 = vector.broadcast %cst_25 : f32 to vector<100x128xf32>
    %52 = arith.cmpf ogt, %44, %51 : vector<100x128xf32>
    %cst_26 = arith.constant 1.862500e-01 : f32
    %cst_27 = arith.constant 0.000000e+00 : f32
    %53 = vector.broadcast %cst_26 : f32 to vector<100x128xf32>
    %54 = vector.broadcast %cst_27 : f32 to vector<100x128xf32>
    %55 = arith.select %52, %53, %54 : vector<100x128xi1>, vector<100x128xf32>
    %56 = arith.subf %44, %55 : vector<100x128xf32>
    %57 = arith.addf %45, %55 : vector<100x128xf32>
    %cst_28 = arith.constant dense<0.000000e+00> : vector<128xf32>
    %58 = vector.multi_reduction <add>, %55, %cst_28 [0] : vector<100x128xf32> to vector<128xf32>
    %59 = vector.shape_cast %58 : vector<128xf32> to vector<1x128xf32>
    %cst_29 = arith.constant 5.36912775 : f32
    %60 = vector.broadcast %cst_29 : f32 to vector<1x128xf32>
    %61 = arith.mulf %59, %60 : vector<1x128xf32>
    %62 = arith.addf %50, %61 : vector<1x128xf32>
    %cst_30 = arith.constant 9.312500e-02 : f32
    %63 = vector.broadcast %cst_30 : f32 to vector<100x128xf32>
    %64 = arith.cmpf ogt, %56, %63 : vector<100x128xf32>
    %cst_31 = arith.constant 9.312500e-02 : f32
    %cst_32 = arith.constant 0.000000e+00 : f32
    %65 = vector.broadcast %cst_31 : f32 to vector<100x128xf32>
    %66 = vector.broadcast %cst_32 : f32 to vector<100x128xf32>
    %67 = arith.select %64, %65, %66 : vector<100x128xi1>, vector<100x128xf32>
    %68 = arith.addf %57, %67 : vector<100x128xf32>
    %cst_33 = arith.constant dense<0.000000e+00> : vector<128xf32>
    %69 = vector.multi_reduction <add>, %67, %cst_33 [0] : vector<100x128xf32> to vector<128xf32>
    %70 = vector.shape_cast %69 : vector<128xf32> to vector<1x128xf32>
    %cst_34 = arith.constant 10.7382555 : f32
    %71 = vector.broadcast %cst_34 : f32 to vector<1x128xf32>
    %72 = arith.mulf %70, %71 : vector<1x128xf32>
    %73 = arith.addf %62, %72 : vector<1x128xf32>
    %cst_35 = arith.constant 0.000000e+00 : f32
    %74 = vector.broadcast %cst_35 : f32 to vector<16x128xf32>
    %c0_36 = arith.constant 0 : index
    %c0_37 = arith.constant 0 : index
    %75 = vector.load %arg8[%c0_36, %c0_37] : memref<132x128xf32, #tpu.memory_space<vmem>>, vector<16x128xf32>
    tpu.vector_store %arg8[%c0_36, %c0_37], %74 {strides = array<i32>} : memref<132x128xf32, #tpu.memory_space<vmem>>, vector<16x128xf32>,
    %cst_38 = arith.constant 0.000000e+00 : f32
    %76 = vector.broadcast %cst_38 : f32 to vector<16x128xf32>
    %c116 = arith.constant 116 : index
    %c0_39 = arith.constant 0 : index
    %77 = vector.load %arg8[%c116, %c0_39] : memref<132x128xf32, #tpu.memory_space<vmem>>, vector<16x128xf32>
    tpu.vector_store %arg8[%c116, %c0_39], %76 {strides = array<i32>} : memref<132x128xf32, #tpu.memory_space<vmem>>, vector<16x128xf32>,
    %c16 = arith.constant 16 : index
    %c0_40 = arith.constant 0 : index
    %78 = vector.load %arg8[%c16, %c0_40] : memref<132x128xf32, #tpu.memory_space<vmem>>, vector<100x128xf32>
    tpu.vector_store %arg8[%c16, %c0_40], %68 {strides = array<i32>} : memref<132x128xf32, #tpu.memory_space<vmem>>, vector<100x128xf32>,
    %cst_41 = arith.constant 0.000000e+00 : f32
    %79 = vector.broadcast %cst_41 : f32 to vector<100x128xf32>
    %c5 = arith.constant 5 : index
    %c0_42 = arith.constant 0 : index
    %80 = vector.load %arg8[%c5, %c0_42] : memref<132x128xf32, #tpu.memory_space<vmem>>, vector<100x128xf32>
    %c0_43 = arith.constant 0 : index
    %c0_44 = arith.constant 0 : index
    %c0_45 = arith.constant 0 : index
    %81 = vector.load %arg5[%c0_43, %c0_44, %c0_45] : memref<9x128x128xf32, #tpu.memory_space<vmem>>, vector<1x128x128xf32>
    %82 = vector.shape_cast %81 : vector<1x128x128xf32> to vector<128x128xf32>
    %cst_46 = arith.constant dense<0.000000e+00> : vector<100x128xf32>
    %83 = tpu.matmul %80, %82, %cst_46 {dimension_numbers = #tpu.dot_dimension_numbers<[1], [0], [0], [1], [0, 0, 1, 1], [], []>} : vector<100x128xf32>, vector<128x128xf32>, vector<100x128xf32> -> vector<100x128xf32>
    %84 = arith.addf %79, %83 : vector<100x128xf32>
    %c6 = arith.constant 6 : index
    %c0_47 = arith.constant 0 : index
    %85 = vector.load %arg8[%c6, %c0_47] : memref<132x128xf32, #tpu.memory_space<vmem>>, vector<100x128xf32>
    %c1 = arith.constant 1 : index
    %c0_48 = arith.constant 0 : index
    %c0_49 = arith.constant 0 : index
    %86 = vector.load %arg5[%c1, %c0_48, %c0_49] : memref<9x128x128xf32, #tpu.memory_space<vmem>>, vector<1x128x128xf32>
    %87 = vector.shape_cast %86 : vector<1x128x128xf32> to vector<128x128xf32>
    %cst_50 = arith.constant dense<0.000000e+00> : vector<100x128xf32>
    %88 = tpu.matmul %85, %87, %cst_50 {dimension_numbers = #tpu.dot_dimension_numbers<[1], [0], [0], [1], [0, 0, 1, 1], [], []>} : vector<100x128xf32>, vector<128x128xf32>, vector<100x128xf32> -> vector<100x128xf32>
    %89 = arith.addf %84, %88 : vector<100x128xf32>
    %c7 = arith.constant 7 : index
    %c0_51 = arith.constant 0 : index
    %90 = vector.load %arg8[%c7, %c0_51] : memref<132x128xf32, #tpu.memory_space<vmem>>, vector<100x128xf32>
    %c2 = arith.constant 2 : index
    %c0_52 = arith.constant 0 : index
    %c0_53 = arith.constant 0 : index
    %91 = vector.load %arg5[%c2, %c0_52, %c0_53] : memref<9x128x128xf32, #tpu.memory_space<vmem>>, vector<1x128x128xf32>
    %92 = vector.shape_cast %91 : vector<1x128x128xf32> to vector<128x128xf32>
    %cst_54 = arith.constant dense<0.000000e+00> : vector<100x128xf32>
    %93 = tpu.matmul %90, %92, %cst_54 {dimension_numbers = #tpu.dot_dimension_numbers<[1], [0], [0], [1], [0, 0, 1, 1], [], []>} : vector<100x128xf32>, vector<128x128xf32>, vector<100x128xf32> -> vector<100x128xf32>
    %94 = arith.addf %89, %93 : vector<100x128xf32>
    %c15 = arith.constant 15 : index
    %c0_55 = arith.constant 0 : index
    %95 = vector.load %arg8[%c15, %c0_55] : memref<132x128xf32, #tpu.memory_space<vmem>>, vector<100x128xf32>
    %c3 = arith.constant 3 : index
    %c0_56 = arith.constant 0 : index
    %c0_57 = arith.constant 0 : index
    %96 = vector.load %arg5[%c3, %c0_56, %c0_57] : memref<9x128x128xf32, #tpu.memory_space<vmem>>, vector<1x128x128xf32>
    %97 = vector.shape_cast %96 : vector<1x128x128xf32> to vector<128x128xf32>
    %cst_58 = arith.constant dense<0.000000e+00> : vector<100x128xf32>
    %98 = tpu.matmul %95, %97, %cst_58 {dimension_numbers = #tpu.dot_dimension_numbers<[1], [0], [0], [1], [0, 0, 1, 1], [], []>} : vector<100x128xf32>, vector<128x128xf32>, vector<100x128xf32> -> vector<100x128xf32>
    %99 = arith.addf %94, %98 : vector<100x128xf32>
    %c16_59 = arith.constant 16 : index
    %c0_60 = arith.constant 0 : index
    %100 = vector.load %arg8[%c16_59, %c0_60] : memref<132x128xf32, #tpu.memory_space<vmem>>, vector<100x128xf32>
    %c4 = arith.constant 4 : index
    %c0_61 = arith.constant 0 : index
    %c0_62 = arith.constant 0 : index
    %101 = vector.load %arg5[%c4, %c0_61, %c0_62] : memref<9x128x128xf32, #tpu.memory_space<vmem>>, vector<1x128x128xf32>
    %102 = vector.shape_cast %101 : vector<1x128x128xf32> to vector<128x128xf32>
    %cst_63 = arith.constant dense<0.000000e+00> : vector<100x128xf32>
    %103 = tpu.matmul %100, %102, %cst_63 {dimension_numbers = #tpu.dot_dimension_numbers<[1], [0], [0], [1], [0, 0, 1, 1], [], []>} : vector<100x128xf32>, vector<128x128xf32>, vector<100x128xf32> -> vector<100x128xf32>
    %104 = arith.addf %99, %103 : vector<100x128xf32>
    %c17 = arith.constant 17 : index
    %c0_64 = arith.constant 0 : index
    %105 = vector.load %arg8[%c17, %c0_64] : memref<132x128xf32, #tpu.memory_space<vmem>>, vector<100x128xf32>
    %c5_65 = arith.constant 5 : index
    %c0_66 = arith.constant 0 : index
    %c0_67 = arith.constant 0 : index
    %106 = vector.load %arg5[%c5_65, %c0_66, %c0_67] : memref<9x128x128xf32, #tpu.memory_space<vmem>>, vector<1x128x128xf32>
    %107 = vector.shape_cast %106 : vector<1x128x128xf32> to vector<128x128xf32>
    %cst_68 = arith.constant dense<0.000000e+00> : vector<100x128xf32>
    %108 = tpu.matmul %105, %107, %cst_68 {dimension_numbers = #tpu.dot_dimension_numbers<[1], [0], [0], [1], [0, 0, 1, 1], [], []>} : vector<100x128xf32>, vector<128x128xf32>, vector<100x128xf32> -> vector<100x128xf32>
    %109 = arith.addf %104, %108 : vector<100x128xf32>
    %c25 = arith.constant 25 : index
    %c0_69 = arith.constant 0 : index
    %110 = vector.load %arg8[%c25, %c0_69] : memref<132x128xf32, #tpu.memory_space<vmem>>, vector<100x128xf32>
    %c6_70 = arith.constant 6 : index
    %c0_71 = arith.constant 0 : index
    %c0_72 = arith.constant 0 : index
    %111 = vector.load %arg5[%c6_70, %c0_71, %c0_72] : memref<9x128x128xf32, #tpu.memory_space<vmem>>, vector<1x128x128xf32>
    %112 = vector.shape_cast %111 : vector<1x128x128xf32> to vector<128x128xf32>
    %cst_73 = arith.constant dense<0.000000e+00> : vector<100x128xf32>
    %113 = tpu.matmul %110, %112, %cst_73 {dimension_numbers = #tpu.dot_dimension_numbers<[1], [0], [0], [1], [0, 0, 1, 1], [], []>} : vector<100x128xf32>, vector<128x128xf32>, vector<100x128xf32> -> vector<100x128xf32>
    %114 = arith.addf %109, %113 : vector<100x128xf32>
    %c26 = arith.constant 26 : index
    %c0_74 = arith.constant 0 : index
    %115 = vector.load %arg8[%c26, %c0_74] : memref<132x128xf32, #tpu.memory_space<vmem>>, vector<100x128xf32>
    %c7_75 = arith.constant 7 : index
    %c0_76 = arith.constant 0 : index
    %c0_77 = arith.constant 0 : index
    %116 = vector.load %arg5[%c7_75, %c0_76, %c0_77] : memref<9x128x128xf32, #tpu.memory_space<vmem>>, vector<1x128x128xf32>
    %117 = vector.shape_cast %116 : vector<1x128x128xf32> to vector<128x128xf32>
    %cst_78 = arith.constant dense<0.000000e+00> : vector<100x128xf32>
    %118 = tpu.matmul %115, %117, %cst_78 {dimension_numbers = #tpu.dot_dimension_numbers<[1], [0], [0], [1], [0, 0, 1, 1], [], []>} : vector<100x128xf32>, vector<128x128xf32>, vector<100x128xf32> -> vector<100x128xf32>
    %119 = arith.addf %114, %118 : vector<100x128xf32>
    %c27 = arith.constant 27 : index
    %c0_79 = arith.constant 0 : index
    %120 = vector.load %arg8[%c27, %c0_79] : memref<132x128xf32, #tpu.memory_space<vmem>>, vector<100x128xf32>
    %c8 = arith.constant 8 : index
    %c0_80 = arith.constant 0 : index
    %c0_81 = arith.constant 0 : index
    %121 = vector.load %arg5[%c8, %c0_80, %c0_81] : memref<9x128x128xf32, #tpu.memory_space<vmem>>, vector<1x128x128xf32>
    %122 = vector.shape_cast %121 : vector<1x128x128xf32> to vector<128x128xf32>
    %cst_82 = arith.constant dense<0.000000e+00> : vector<100x128xf32>
    %123 = tpu.matmul %120, %122, %cst_82 {dimension_numbers = #tpu.dot_dimension_numbers<[1], [0], [0], [1], [0, 0, 1, 1], [], []>} : vector<100x128xf32>, vector<128x128xf32>, vector<100x128xf32> -> vector<100x128xf32>
    %124 = arith.addf %119, %123 : vector<100x128xf32>
    %c0_83 = arith.constant 0 : index
    %c0_84 = arith.constant 0 : index
    %c0_85 = arith.constant 0 : index
    %125 = vector.load %arg6[%c0_83, %c0_84, %c0_85] : memref<1x100x128xf32, #tpu.memory_space<vmem>>, vector<1x100x128xf32>
    %126 = vector.shape_cast %125 : vector<1x100x128xf32> to vector<100x128xf32>
    %127 = vector.shape_cast %124 : vector<100x128xf32> to vector<1x100x128xf32>
    tpu.vector_store %arg6[%c0_83, %c0_84, %c0_85], %127 {strides = array<i32>} : memref<1x100x128xf32, #tpu.memory_space<vmem>>, vector<1x100x128xf32>,
    %c0_86 = arith.constant 0 : index
    %c0_87 = arith.constant 0 : index
    %c0_88 = arith.constant 0 : index
    %128 = vector.load %arg7[%c0_86, %c0_87, %c0_88] : memref<1x1x128xf32, #tpu.memory_space<vmem>>, vector<1x1x128xf32>
    %129 = vector.shape_cast %128 : vector<1x1x128xf32> to vector<1x128xf32>
    %130 = vector.shape_cast %73 : vector<1x128xf32> to vector<1x1x128xf32>
    tpu.vector_store %arg7[%c0_86, %c0_87, %c0_88], %130 {strides = array<i32>} : memref<1x1x128xf32, #tpu.memory_space<vmem>>, vector<1x1x128xf32>,
    return
  }
  func.func @transform_0(%arg0: i32) -> (i32, i32, i32) {
    %c0_i32 = arith.constant 0 : i32
    %c0_i32_0 = arith.constant 0 : i32
    %c0_i32_1 = arith.constant 0 : i32
    return %arg0, %c0_i32, %c0_i32_0 : i32, i32, i32
  }
  func.func @transform_1(%arg0: i32) -> (i32, i32) {
    %c0_i32 = arith.constant 0 : i32
    %c0_i32_0 = arith.constant 0 : i32
    %c0_i32_1 = arith.constant 0 : i32
    return %c0_i32, %c0_i32_0 : i32, i32
  }
  func.func @transform_2(%arg0: i32) -> (i32, i32) {
    %c0_i32 = arith.constant 0 : i32
    %c0_i32_0 = arith.constant 0 : i32
    %c0_i32_1 = arith.constant 0 : i32
    return %c0_i32, %c0_i32_0 : i32, i32
  }
  func.func @transform_3(%arg0: i32) -> (i32, i32) {
    %c0_i32 = arith.constant 0 : i32
    %c0_i32_0 = arith.constant 0 : i32
    %c0_i32_1 = arith.constant 0 : i32
    return %c0_i32, %c0_i32_0 : i32, i32
  }
  func.func @transform_4(%arg0: i32) -> (i32, i32, i32) {
    %c0_i32 = arith.constant 0 : i32
    %c0_i32_0 = arith.constant 0 : i32
    %c0_i32_1 = arith.constant 0 : i32
    %c0_i32_2 = arith.constant 0 : i32
    return %c0_i32, %c0_i32_0, %c0_i32_1 : i32, i32, i32
  }
  func.func @transform_5(%arg0: i32) -> (i32, i32, i32) {
    %c0_i32 = arith.constant 0 : i32
    %c0_i32_0 = arith.constant 0 : i32
    %c0_i32_1 = arith.constant 0 : i32
    return %arg0, %c0_i32, %c0_i32_0 : i32, i32, i32
  }
  func.func @transform_6(%arg0: i32) -> (i32, i32, i32) {
    %c0_i32 = arith.constant 0 : i32
    %c0_i32_0 = arith.constant 0 : i32
    %c0_i32_1 = arith.constant 0 : i32
    return %arg0, %c0_i32, %c0_i32_0 : i32, i32, i32
  }
}

</mosaic_0001>

<llo_original>
// kernel: dense_block_forward.4
$region0: #{dense_block_forward.4}
  #allocation0 [shape = 'u32[]', space=smem, size = 0x4, offset = 0x4, fixed_abs, tag = 'smem constant byte address 0x4 - core index']
  #allocation1 [shape = 'u32[144,128]{1,0:T(1,128)}', space=vmem, size = 0x12000, scoped, tag = 'internal scratch']
  %s0 = inlined_call_operand.vmem [shape: f32[128,128], index: 0, kind: input, shape index: {}]
  %s1 = inlined_call_operand.vmem [shape: f32[1,128], index: 1, kind: input, shape index: {}]
  %s2 = inlined_call_operand.vmem [shape: f32[1,128], index: 2, kind: input, shape index: {}]
  %s3 = inlined_call_operand.vmem [shape: f32[128,128], index: 3, kind: input, shape index: {}]
  %s4 = inlined_call_operand.vmem [shape: f32[128,128], index: 4, kind: output, shape index: {0}]
  %s5 = inlined_call_operand.vmem [shape: f32[1,1,128], index: 5, kind: output, shape index: {1}]
  %6 = xla_tuple %s4, %s5
  %s7 = sld [smem:[#allocation0]]
  $region34: #{dense_block_forward.4} parent=0
    _
  %s9 = ssub.s32 1, %s7
  %s10 = scalar_select 0, %s9, %s7
  // Predicated region
  $region2: #{dense_block_forward.4} parent=0 // pred_check
    _
  $region3: #{dense_block_forward.4} parent=0 // pred_check_branch
    %12 = sbr.rel (0) target = $region5
  $region4: #{dense_block_forward.4} parent=0 // pred_region
    _
  $region5: #{dense_block_forward.4} parent=0 // pred_fallthru
    _
  // Predicated region
  $region6: #{dense_block_forward.4} parent=0 // pred_check
    _
  $region7: #{dense_block_forward.4} parent=0 // pred_check_branch
    %14 = sbr.rel (0) target = $region9
  $region8: #{dense_block_forward.4} parent=0 // pred_region
    _
  $region9: #{dense_block_forward.4} parent=0 // pred_fallthru
    _
  // Predicated region
  $region10: #{dense_block_forward.4} parent=0 // pred_check
    _
  $region11: #{dense_block_forward.4} parent=0 // pred_check_branch
    %16 = sbr.rel (0) target = $region13
  $region12: #{dense_block_forward.4} parent=0 // pred_region
    _
  $region13: #{dense_block_forward.4} parent=0 // pred_fallthru
    _
  // Predicated region
  $region14: #{dense_block_forward.4} parent=0 // pred_check
    _
  $region15: #{dense_block_forward.4} parent=0 // pred_check_branch
    %18 = sbr.rel (0) target = $region17
  $region16: #{dense_block_forward.4} parent=0 // pred_region
    _
  $region17: #{dense_block_forward.4} parent=0 // pred_fallthru
    _
  %v19 = vld [vmem:[%s0] sm:$0xff]
  %v20 = vld [vmem:[%s0 + $0x8] sm:$0xff]
  %v21 = vld [vmem:[%s0 + $0x10] sm:$0xff]
  %v22 = vld [vmem:[%s0 + $0x18] sm:$0xff]
  %v23 = vld [vmem:[%s0 + $0x20] sm:$0xff]
  %v24 = vld [vmem:[%s0 + $0x28] sm:$0xff]
  %v25 = vld [vmem:[%s0 + $0x30] sm:$0xff]
  %v26 = vld [vmem:[%s0 + $0x38] sm:$0xff]
  %v27 = vld [vmem:[%s0 + $0x40] sm:$0xff]
  %v28 = vld [vmem:[%s0 + $0x48] sm:$0xff]
  %v29 = vld [vmem:[%s0 + $0x50] sm:$0xff]
  %v30 = vld [vmem:[%s0 + $0x58] sm:$0xff]
  %v31 = vld [vmem:[%s0 + $0x60] sm:$0xff]
  %v32 = vld [vmem:[%s0 + $0x68] sm:$0xff]
  %v33 = vld [vmem:[%s0 + $0x70] sm:$0xff]
  %v34 = vld [vmem:[%s0 + $0x78] sm:$0xff]
  %v35 = vld [vmem:[%s1] sm:$0x1]
  %v37 = vlaneseq
  %v38 = vshrl.u32 %v37, 7
  %v39 = vsub.s32 0, %v38
  %v40 = vrot.slane %v35, %v39
  %v42 = vmul.f32 %v19, %v40
  %v43 = vmul.f32 %v20, %v40
  %v44 = vmul.f32 %v21, %v40
  %v45 = vmul.f32 %v22, %v40
  %v46 = vmul.f32 %v23, %v40
  %v47 = vmul.f32 %v24, %v40
  %v48 = vmul.f32 %v25, %v40
  %v49 = vmul.f32 %v26, %v40
  %v50 = vmul.f32 %v27, %v40
  %v51 = vmul.f32 %v28, %v40
  %v52 = vmul.f32 %v29, %v40
  %v53 = vmul.f32 %v30, %v40
  %v54 = vmul.f32 %v31, %v40
  %v55 = vmul.f32 %v32, %v40
  %v56 = vmul.f32 %v33, %v40
  %v57 = vmul.f32 %v34, %v40
  %v58 = vld [vmem:[%s2] sm:$0x1]
  %v60 = vlaneseq
  %v61 = vshrl.u32 %v60, 7
  %v62 = vsub.s32 0, %v61
  %v63 = vrot.slane %v58, %v62
  %v65 = vadd.f32 %v42, %v63
  %v66 = vadd.f32 %v43, %v63
  %v67 = vadd.f32 %v44, %v63
  %v68 = vadd.f32 %v45, %v63
  %v69 = vadd.f32 %v46, %v63
  %v70 = vadd.f32 %v47, %v63
  %v71 = vadd.f32 %v48, %v63
  %v72 = vadd.f32 %v49, %v63
  %v73 = vadd.f32 %v50, %v63
  %v74 = vadd.f32 %v51, %v63
  %v75 = vadd.f32 %v52, %v63
  %v76 = vadd.f32 %v53, %v63
  %v77 = vadd.f32 %v54, %v63
  %v78 = vadd.f32 %v55, %v63
  %v79 = vadd.f32 %v56, %v63
  %v80 = vadd.f32 %v57, %v63
  %v81 = vmax.f32 %v65, 0.0
  %v82 = vmax.f32 %v66, 0.0
  %v83 = vmax.f32 %v67, 0.0
  %v84 = vmax.f32 %v68, 0.0
  %v85 = vmax.f32 %v69, 0.0
  %v86 = vmax.f32 %v70, 0.0
  %v87 = vmax.f32 %v71, 0.0
  %v88 = vmax.f32 %v72, 0.0
  %v89 = vmax.f32 %v73, 0.0
  %v90 = vmax.f32 %v74, 0.0
  %v91 = vmax.f32 %v75, 0.0
  %v92 = vmax.f32 %v76, 0.0
  %v93 = vmax.f32 %v77, 0.0
  %v94 = vmax.f32 %v78, 0.0
  %v95 = vmax.f32 %v79, 0.0
  %v96 = vmax.f32 %v80, 0.0
  %vm97 = vcmp.gt.f32.partialorder %v81, 1.5
  %vm98 = vcmp.gt.f32.partialorder %v82, 1.5
  %vm99 = vcmp.gt.f32.partialorder %v83, 1.5
  %vm100 = vcmp.gt.f32.partialorder %v84, 1.5
  %vm101 = vcmp.gt.f32.partialorder %v85, 1.5
  %vm102 = vcmp.gt.f32.partialorder %v86, 1.5
  %vm103 = vcmp.gt.f32.partialorder %v87, 1.5
  %vm104 = vcmp.gt.f32.partialorder %v88, 1.5
  %vm105 = vcmp.gt.f32.partialorder %v89, 1.5
  %vm106 = vcmp.gt.f32.partialorder %v90, 1.5
  %vm107 = vcmp.gt.f32.partialorder %v91, 1.5
  %vm108 = vcmp.gt.f32.partialorder %v92, 1.5
  %vm109 = vcmp.gt.f32.partialorder %v93, 1.5
  %vm110 = vcmp.gt.f32.partialorder %v94, 1.5
  %vm111 = vcmp.gt.f32.partialorder %v95, 1.5
  %vm112 = vcmp.gt.f32.partialorder %v96, 1.5
  %v113 = vsel %vm97, 1.5, 0.0
  %v114 = vsel %vm98, 1.5, 0.0
  %v115 = vsel %vm99, 1.5, 0.0
  %v116 = vsel %vm100, 1.5, 0.0
  %v117 = vsel %vm101, 1.5, 0.0
  %v118 = vsel %vm102, 1.5, 0.0
  %v119 = vsel %vm103, 1.5, 0.0
  %v120 = vsel %vm104, 1.5, 0.0
  %v121 = vsel %vm105, 1.5, 0.0
  %v122 = vsel %vm106, 1.5, 0.0
  %v123 = vsel %vm107, 1.5, 0.0
  %v124 = vsel %vm108, 1.5, 0.0
  %v125 = vsel %vm109, 1.5, 0.0
  %v126 = vsel %vm110, 1.5, 0.0
  %v127 = vsel %vm111, 1.5, 0.0
  %v128 = vsel %vm112, 1.5, 0.0
  %v129 = vsub.f32 %v81, %v113
  %v130 = vsub.f32 %v82, %v114
  %v131 = vsub.f32 %v83, %v115
  %v132 = vsub.f32 %v84, %v116
  %v133 = vsub.f32 %v85, %v117
  %v134 = vsub.f32 %v86, %v118
  %v135 = vsub.f32 %v87, %v119
  %v136 = vsub.f32 %v88, %v120
  %v137 = vsub.f32 %v89, %v121
  %v138 = vsub.f32 %v90, %v122
  %v139 = vsub.f32 %v91, %v123
  %v140 = vsub.f32 %v92, %v124
  %v141 = vsub.f32 %v93, %v125
  %v142 = vsub.f32 %v94, %v126
  %v143 = vsub.f32 %v95, %v127
  %v144 = vsub.f32 %v96, %v128
  %v145 = vadd.f32 %v113, 0.0
  %v146 = vadd.f32 %v114, 0.0
  %v147 = vadd.f32 %v115, 0.0
  %v148 = vadd.f32 %v116, 0.0
  %v149 = vadd.f32 %v117, 0.0
  %v150 = vadd.f32 %v118, 0.0
  %v151 = vadd.f32 %v119, 0.0
  %v152 = vadd.f32 %v120, 0.0
  %v153 = vadd.f32 %v121, 0.0
  %v154 = vadd.f32 %v122, 0.0
  %v155 = vadd.f32 %v123, 0.0
  %v156 = vadd.f32 %v124, 0.0
  %v157 = vadd.f32 %v125, 0.0
  %v158 = vadd.f32 %v126, 0.0
  %v159 = vadd.f32 %v127, 0.0
  %v160 = vadd.f32 %v128, 0.0
  %v161 = vadd.f32 %v113, %v114
  %v162 = vadd.f32 %v161, %v115
  %v163 = vadd.f32 %v162, %v116
  %v164 = vadd.f32 %v163, %v117
  %v165 = vadd.f32 %v164, %v118
  %v166 = vadd.f32 %v165, %v119
  %v167 = vadd.f32 %v166, %v120
  %v168 = vadd.f32 %v167, %v121
  %v169 = vadd.f32 %v168, %v122
  %v170 = vadd.f32 %v169, %v123
  %v171 = vadd.f32 %v170, %v124
  %v172 = vadd.f32 %v171, %v125
  %v173 = vadd.f32 %v172, %v126
  %v174 = vadd.f32 %v173, %v127
  %v175 = vadd.f32 %v174, %v128
  %v176 = vrot.slane %v175, 4
  %v177 = vadd.f32 %v175, %v176
  %v178 = vrot.slane %v177, 2
  %v179 = vadd.f32 %v177, %v178
  %v180 = vrot.slane %v179, 1
  %v181 = vadd.f32 %v179, %v180
  %v182 = vmul.f32 %v181, 0.6666667
  %v183 = vadd.f32 %v182, 0.0
  %vm184 = vcmp.gt.f32.partialorder %v129, 0.75
  %vm185 = vcmp.gt.f32.partialorder %v130, 0.75
  %vm186 = vcmp.gt.f32.partialorder %v131, 0.75
  %vm187 = vcmp.gt.f32.partialorder %v132, 0.75
  %vm188 = vcmp.gt.f32.partialorder %v133, 0.75
  %vm189 = vcmp.gt.f32.partialorder %v134, 0.75
  %vm190 = vcmp.gt.f32.partialorder %v135, 0.75
  %vm191 = vcmp.gt.f32.partialorder %v136, 0.75
  %vm192 = vcmp.gt.f32.partialorder %v137, 0.75
  %vm193 = vcmp.gt.f32.partialorder %v138, 0.75
  %vm194 = vcmp.gt.f32.partialorder %v139, 0.75
  %vm195 = vcmp.gt.f32.partialorder %v140, 0.75
  %vm196 = vcmp.gt.f32.partialorder %v141, 0.75
  %vm197 = vcmp.gt.f32.partialorder %v142, 0.75
  %vm198 = vcmp.gt.f32.partialorder %v143, 0.75
  %vm199 = vcmp.gt.f32.partialorder %v144, 0.75
  %v200 = vsel %vm184, 0.75, 0.0
  %v201 = vsel %vm185, 0.75, 0.0
  %v202 = vsel %vm186, 0.75, 0.0
  %v203 = vsel %vm187, 0.75, 0.0
  %v204 = vsel %vm188, 0.75, 0.0
  %v205 = vsel %vm189, 0.75, 0.0
  %v206 = vsel %vm190, 0.75, 0.0
  %v207 = vsel %vm191, 0.75, 0.0
  %v208 = vsel %vm192, 0.75, 0.0
  %v209 = vsel %vm193, 0.75, 0.0
  %v210 = vsel %vm194, 0.75, 0.0
  %v211 = vsel %vm195, 0.75, 0.0
  %v212 = vsel %vm196, 0.75, 0.0
  %v213 = vsel %vm197, 0.75, 0.0
  %v214 = vsel %vm198, 0.75, 0.0
  %v215 = vsel %vm199, 0.75, 0.0
  %v216 = vsub.f32 %v129, %v200
  %v217 = vsub.f32 %v130, %v201
  %v218 = vsub.f32 %v131, %v202
  %v219 = vsub.f32 %v132, %v203
  %v220 = vsub.f32 %v133, %v204
  %v221 = vsub.f32 %v134, %v205
  %v222 = vsub.f32 %v135, %v206
  %v223 = vsub.f32 %v136, %v207
  %v224 = vsub.f32 %v137, %v208
  %v225 = vsub.f32 %v138, %v209
  %v226 = vsub.f32 %v139, %v210
  %v227 = vsub.f32 %v140, %v211
  %v228 = vsub.f32 %v141, %v212
  %v229 = vsub.f32 %v142, %v213
  %v230 = vsub.f32 %v143, %v214
  %v231 = vsub.f32 %v144, %v215
  %v232 = vadd.f32 %v145, %v200
  %v233 = vadd.f32 %v146, %v201
  %v234 = vadd.f32 %v147, %v202
  %v235 = vadd.f32 %v148, %v203
  %v236 = vadd.f32 %v149, %v204
  %v237 = vadd.f32 %v150, %v205
  %v238 = vadd.f32 %v151, %v206
  %v239 = vadd.f32 %v152, %v207
  %v240 = vadd.f32 %v153, %v208
  %v241 = vadd.f32 %v154, %v209
  %v242 = vadd.f32 %v155, %v210
  %v243 = vadd.f32 %v156, %v211
  %v244 = vadd.f32 %v157, %v212
  %v245 = vadd.f32 %v158, %v213
  %v246 = vadd.f32 %v159, %v214
  %v247 = vadd.f32 %v160, %v215
  %v248 = vadd.f32 %v200, %v201
  %v249 = vadd.f32 %v248, %v202
  %v250 = vadd.f32 %v249, %v203
  %v251 = vadd.f32 %v250, %v204
  %v252 = vadd.f32 %v251, %v205
  %v253 = vadd.f32 %v252, %v206
  %v254 = vadd.f32 %v253, %v207
  %v255 = vadd.f32 %v254, %v208
  %v256 = vadd.f32 %v255, %v209
  %v257 = vadd.f32 %v256, %v210
  %v258 = vadd.f32 %v257, %v211
  %v259 = vadd.f32 %v258, %v212
  %v260 = vadd.f32 %v259, %v213
  %v261 = vadd.f32 %v260, %v214
  %v262 = vadd.f32 %v261, %v215
  %v263 = vrot.slane %v262, 4
  %v264 = vadd.f32 %v262, %v263
  %v265 = vrot.slane %v264, 2
  %v266 = vadd.f32 %v264, %v265
  %v267 = vrot.slane %v266, 1
  %v268 = vadd.f32 %v266, %v267
  %v269 = vmul.f32 %v268, 1.3333334
  %v270 = vadd.f32 %v183, %v269
  %vm271 = vcmp.gt.f32.partialorder %v216, 0.3725
  %vm272 = vcmp.gt.f32.partialorder %v217, 0.3725
  %vm273 = vcmp.gt.f32.partialorder %v218, 0.3725
  %vm274 = vcmp.gt.f32.partialorder %v219, 0.3725
  %vm275 = vcmp.gt.f32.partialorder %v220, 0.3725
  %vm276 = vcmp.gt.f32.partialorder %v221, 0.3725
  %vm277 = vcmp.gt.f32.partialorder %v222, 0.3725
  %vm278 = vcmp.gt.f32.partialorder %v223, 0.3725
  %vm279 = vcmp.gt.f32.partialorder %v224, 0.3725
  %vm280 = vcmp.gt.f32.partialorder %v225, 0.3725
  %vm281 = vcmp.gt.f32.partialorder %v226, 0.3725
  %vm282 = vcmp.gt.f32.partialorder %v227, 0.3725
  %vm283 = vcmp.gt.f32.partialorder %v228, 0.3725
  %vm284 = vcmp.gt.f32.partialorder %v229, 0.3725
  %vm285 = vcmp.gt.f32.partialorder %v230, 0.3725
  %vm286 = vcmp.gt.f32.partialorder %v231, 0.3725
  %v287 = vsel %vm271, 0.3725, 0.0
  %v288 = vsel %vm272, 0.3725, 0.0
  %v289 = vsel %vm273, 0.3725, 0.0
  %v290 = vsel %vm274, 0.3725, 0.0
  %v291 = vsel %vm275, 0.3725, 0.0
  %v292 = vsel %vm276, 0.3725, 0.0
  %v293 = vsel %vm277, 0.3725, 0.0
  %v294 = vsel %vm278, 0.3725, 0.0
  %v295 = vsel %vm279, 0.3725, 0.0
  %v296 = vsel %vm280, 0.3725, 0.0
  %v297 = vsel %vm281, 0.3725, 0.0
  %v298 = vsel %vm282, 0.3725, 0.0
  %v299 = vsel %vm283, 0.3725, 0.0
  %v300 = vsel %vm284, 0.3725, 0.0
  %v301 = vsel %vm285, 0.3725, 0.0
  %v302 = vsel %vm286, 0.3725, 0.0
  %v303 = vsub.f32 %v216, %v287
  %v304 = vsub.f32 %v217, %v288
  %v305 = vsub.f32 %v218, %v289
  %v306 = vsub.f32 %v219, %v290
  %v307 = vsub.f32 %v220, %v291
  %v308 = vsub.f32 %v221, %v292
  %v309 = vsub.f32 %v222, %v293
  %v310 = vsub.f32 %v223, %v294
  %v311 = vsub.f32 %v224, %v295
  %v312 = vsub.f32 %v225, %v296
  %v313 = vsub.f32 %v226, %v297
  %v314 = vsub.f32 %v227, %v298
  %v315 = vsub.f32 %v228, %v299
  %v316 = vsub.f32 %v229, %v300
  %v317 = vsub.f32 %v230, %v301
  %v318 = vsub.f32 %v231, %v302
  %v319 = vadd.f32 %v232, %v287
  %v320 = vadd.f32 %v233, %v288
  %v321 = vadd.f32 %v234, %v289
  %v322 = vadd.f32 %v235, %v290
  %v323 = vadd.f32 %v236, %v291
  %v324 = vadd.f32 %v237, %v292
  %v325 = vadd.f32 %v238, %v293
  %v326 = vadd.f32 %v239, %v294
  %v327 = vadd.f32 %v240, %v295
  %v328 = vadd.f32 %v241, %v296
  %v329 = vadd.f32 %v242, %v297
  %v330 = vadd.f32 %v243, %v298
  %v331 = vadd.f32 %v244, %v299
  %v332 = vadd.f32 %v245, %v300
  %v333 = vadd.f32 %v246, %v301
  %v334 = vadd.f32 %v247, %v302
  %v335 = vadd.f32 %v287, %v288
  %v336 = vadd.f32 %v335, %v289
  %v337 = vadd.f32 %v336, %v290
  %v338 = vadd.f32 %v337, %v291
  %v339 = vadd.f32 %v338, %v292
  %v340 = vadd.f32 %v339, %v293
  %v341 = vadd.f32 %v340, %v294
  %v342 = vadd.f32 %v341, %v295
  %v343 = vadd.f32 %v342, %v296
  %v344 = vadd.f32 %v343, %v297
  %v345 = vadd.f32 %v344, %v298
  %v346 = vadd.f32 %v345, %v299
  %v347 = vadd.f32 %v346, %v300
  %v348 = vadd.f32 %v347, %v301
  %v349 = vadd.f32 %v348, %v302
  %v350 = vrot.slane %v349, 4
  %v351 = vadd.f32 %v349, %v350
  %v352 = vrot.slane %v351, 2
  %v353 = vadd.f32 %v351, %v352
  %v354 = vrot.slane %v353, 1
  %v355 = vadd.f32 %v353, %v354
  %v356 = vmul.f32 %v355, 2.6845639
  %v357 = vadd.f32 %v270, %v356
  %vm358 = vcmp.gt.f32.partialorder %v303, 0.18625
  %vm359 = vcmp.gt.f32.partialorder %v304, 0.18625
  %vm360 = vcmp.gt.f32.partialorder %v305, 0.18625
  %vm361 = vcmp.gt.f32.partialorder %v306, 0.18625
  %vm362 = vcmp.gt.f32.partialorder %v307, 0.18625
  %vm363 = vcmp.gt.f32.partialorder %v308, 0.18625
  %vm364 = vcmp.gt.f32.partialorder %v309, 0.18625
  %vm365 = vcmp.gt.f32.partialorder %v310, 0.18625
  %vm366 = vcmp.gt.f32.partialorder %v311, 0.18625
  %vm367 = vcmp.gt.f32.partialorder %v312, 0.18625
  %vm368 = vcmp.gt.f32.partialorder %v313, 0.18625
  %vm369 = vcmp.gt.f32.partialorder %v314, 0.18625
  %vm370 = vcmp.gt.f32.partialorder %v315, 0.18625
  %vm371 = vcmp.gt.f32.partialorder %v316, 0.18625
  %vm372 = vcmp.gt.f32.partialorder %v317, 0.18625
  %vm373 = vcmp.gt.f32.partialorder %v318, 0.18625
  %v374 = vsel %vm358, 0.18625, 0.0
  %v375 = vsel %vm359, 0.18625, 0.0
  %v376 = vsel %vm360, 0.18625, 0.0
  %v377 = vsel %vm361, 0.18625, 0.0
  %v378 = vsel %vm362, 0.18625, 0.0
  %v379 = vsel %vm363, 0.18625, 0.0
  %v380 = vsel %vm364, 0.18625, 0.0
  %v381 = vsel %vm365, 0.18625, 0.0
  %v382 = vsel %vm366, 0.18625, 0.0
  %v383 = vsel %vm367, 0.18625, 0.0
  %v384 = vsel %vm368, 0.18625, 0.0
  %v385 = vsel %vm369, 0.18625, 0.0
  %v386 = vsel %vm370, 0.18625, 0.0
  %v387 = vsel %vm371, 0.18625, 0.0
  %v388 = vsel %vm372, 0.18625, 0.0
  %v389 = vsel %vm373, 0.18625, 0.0
  %v390 = vsub.f32 %v303, %v374
  %v391 = vsub.f32 %v304, %v375
  %v392 = vsub.f32 %v305, %v376
  %v393 = vsub.f32 %v306, %v377
  %v394 = vsub.f32 %v307, %v378
  %v395 = vsub.f32 %v308, %v379
  %v396 = vsub.f32 %v309, %v380
  %v397 = vsub.f32 %v310, %v381
  %v398 = vsub.f32 %v311, %v382
  %v399 = vsub.f32 %v312, %v383
  %v400 = vsub.f32 %v313, %v384
  %v401 = vsub.f32 %v314, %v385
  %v402 = vsub.f32 %v315, %v386
  %v403 = vsub.f32 %v316, %v387
  %v404 = vsub.f32 %v317, %v388
  %v405 = vsub.f32 %v318, %v389
  %v406 = vadd.f32 %v319, %v374
  %v407 = vadd.f32 %v320, %v375
  %v408 = vadd.f32 %v321, %v376
  %v409 = vadd.f32 %v322, %v377
  %v410 = vadd.f32 %v323, %v378
  %v411 = vadd.f32 %v324, %v379
  %v412 = vadd.f32 %v325, %v380
  %v413 = vadd.f32 %v326, %v381
  %v414 = vadd.f32 %v327, %v382
  %v415 = vadd.f32 %v328, %v383
  %v416 = vadd.f32 %v329, %v384
  %v417 = vadd.f32 %v330, %v385
  %v418 = vadd.f32 %v331, %v386
  %v419 = vadd.f32 %v332, %v387
  %v420 = vadd.f32 %v333, %v388
  %v421 = vadd.f32 %v334, %v389
  %v422 = vadd.f32 %v374, %v375
  %v423 = vadd.f32 %v422, %v376
  %v424 = vadd.f32 %v423, %v377
  %v425 = vadd.f32 %v424, %v378
  %v426 = vadd.f32 %v425, %v379
  %v427 = vadd.f32 %v426, %v380
  %v428 = vadd.f32 %v427, %v381
  %v429 = vadd.f32 %v428, %v382
  %v430 = vadd.f32 %v429, %v383
  %v431 = vadd.f32 %v430, %v384
  %v432 = vadd.f32 %v431, %v385
  %v433 = vadd.f32 %v432, %v386
  %v434 = vadd.f32 %v433, %v387
  %v435 = vadd.f32 %v434, %v388
  %v436 = vadd.f32 %v435, %v389
  %v437 = vrot.slane %v436, 4
  %v438 = vadd.f32 %v436, %v437
  %v439 = vrot.slane %v438, 2
  %v440 = vadd.f32 %v438, %v439
  %v441 = vrot.slane %v440, 1
  %v442 = vadd.f32 %v440, %v441
  %v443 = vmul.f32 %v442, 5.3691278
  %v444 = vadd.f32 %v357, %v443
  %vm445 = vcmp.gt.f32.partialorder %v390, 0.093125
  %vm446 = vcmp.gt.f32.partialorder %v391, 0.093125
  %vm447 = vcmp.gt.f32.partialorder %v392, 0.093125
  %vm448 = vcmp.gt.f32.partialorder %v393, 0.093125
  %vm449 = vcmp.gt.f32.partialorder %v394, 0.093125
  %vm450 = vcmp.gt.f32.partialorder %v395, 0.093125
  %vm451 = vcmp.gt.f32.partialorder %v396, 0.093125
  %vm452 = vcmp.gt.f32.partialorder %v397, 0.093125
  %vm453 = vcmp.gt.f32.partialorder %v398, 0.093125
  %vm454 = vcmp.gt.f32.partialorder %v399, 0.093125
  %vm455 = vcmp.gt.f32.partialorder %v400, 0.093125
  %vm456 = vcmp.gt.f32.partialorder %v401, 0.093125
  %vm457 = vcmp.gt.f32.partialorder %v402, 0.093125
  %vm458 = vcmp.gt.f32.partialorder %v403, 0.093125
  %vm459 = vcmp.gt.f32.partialorder %v404, 0.093125
  %vm460 = vcmp.gt.f32.partialorder %v405, 0.093125
  %v461 = vsel %vm445, 0.093125, 0.0
  %v462 = vsel %vm446, 0.093125, 0.0
  %v463 = vsel %vm447, 0.093125, 0.0
  %v464 = vsel %vm448, 0.093125, 0.0
  %v465 = vsel %vm449, 0.093125, 0.0
  %v466 = vsel %vm450, 0.093125, 0.0
  %v467 = vsel %vm451, 0.093125, 0.0
  %v468 = vsel %vm452, 0.093125, 0.0
  %v469 = vsel %vm453, 0.093125, 0.0
  %v470 = vsel %vm454, 0.093125, 0.0
  %v471 = vsel %vm455, 0.093125, 0.0
  %v472 = vsel %vm456, 0.093125, 0.0
  %v473 = vsel %vm457, 0.093125, 0.0
  %v474 = vsel %vm458, 0.093125, 0.0
  %v475 = vsel %vm459, 0.093125, 0.0
  %v476 = vsel %vm460, 0.093125, 0.0
  %v477 = vadd.f32 %v406, %v461
  %v478 = vadd.f32 %v407, %v462
  %v479 = vadd.f32 %v408, %v463
  %v480 = vadd.f32 %v409, %v464
  %v481 = vadd.f32 %v410, %v465
  %v482 = vadd.f32 %v411, %v466
  %v483 = vadd.f32 %v412, %v467
  %v484 = vadd.f32 %v413, %v468
  %v485 = vadd.f32 %v414, %v469
  %v486 = vadd.f32 %v415, %v470
  %v487 = vadd.f32 %v416, %v471
  %v488 = vadd.f32 %v417, %v472
  %v489 = vadd.f32 %v418, %v473
  %v490 = vadd.f32 %v419, %v474
  %v491 = vadd.f32 %v420, %v475
  %v492 = vadd.f32 %v421, %v476
  %v493 = vadd.f32 %v461, %v462
  %v494 = vadd.f32 %v493, %v463
  %v495 = vadd.f32 %v494, %v464
  %v496 = vadd.f32 %v495, %v465
  %v497 = vadd.f32 %v496, %v466
  %v498 = vadd.f32 %v497, %v467
  %v499 = vadd.f32 %v498, %v468
  %v500 = vadd.f32 %v499, %v469
  %v501 = vadd.f32 %v500, %v470
  %v502 = vadd.f32 %v501, %v471
  %v503 = vadd.f32 %v502, %v472
  %v504 = vadd.f32 %v503, %v473
  %v505 = vadd.f32 %v504, %v474
  %v506 = vadd.f32 %v505, %v475
  %v507 = vadd.f32 %v506, %v476
  %v508 = vrot.slane %v507, 4
  %v509 = vadd.f32 %v507, %v508
  %v510 = vrot.slane %v509, 2
  %v511 = vadd.f32 %v509, %v510
  %v512 = vrot.slane %v511, 1
  %v513 = vadd.f32 %v511, %v512
  %v514 = vmul.f32 %v513, 10.7382555
  %v515 = vadd.f32 %v444, %v514
  %v516 = vld [vmem:[%s3] sm:$0xff]
  %v517 = vld [vmem:[%s3 + $0x8] sm:$0xff]
  %v518 = vld [vmem:[%s3 + $0x10] sm:$0xff]
  %v519 = vld [vmem:[%s3 + $0x18] sm:$0xff]
  %v520 = vld [vmem:[%s3 + $0x20] sm:$0xff]
  %v521 = vld [vmem:[%s3 + $0x28] sm:$0xff]
  %v522 = vld [vmem:[%s3 + $0x30] sm:$0xff]
  %v523 = vld [vmem:[%s3 + $0x38] sm:$0xff]
  %v524 = vld [vmem:[%s3 + $0x40] sm:$0xff]
  %v525 = vld [vmem:[%s3 + $0x48] sm:$0xff]
  %v526 = vld [vmem:[%s3 + $0x50] sm:$0xff]
  %v527 = vld [vmem:[%s3 + $0x58] sm:$0xff]
  %v528 = vld [vmem:[%s3 + $0x60] sm:$0xff]
  %v529 = vld [vmem:[%s3 + $0x68] sm:$0xff]
  %v530 = vld [vmem:[%s3 + $0x70] sm:$0xff]
  %v531 = vld [vmem:[%s3 + $0x78] sm:$0xff]
  %532 = vmatprep.subr.mxu0 0.0
  %533 = vmatpush1.msra.mxu0 %v516
  %534 = vmatprep.subr.mxu0 0.0
  %535 = vmatpush1.msra.mxu0 %v517
  %536 = vmatprep.subr.mxu0 0.0
  %537 = vmatpush1.msra.mxu0 %v518
  %538 = vmatprep.subr.mxu0 0.0
  %539 = vmatpush1.msra.mxu0 %v519
  %540 = vmatprep.subr.mxu0 0.0
  %541 = vmatpush1.msra.mxu0 %v520
  %542 = vmatprep.subr.mxu0 0.0
  %543 = vmatpush1.msra.mxu0 %v521
  %544 = vmatprep.subr.mxu0 0.0
  %545 = vmatpush1.msra.mxu0 %v522
  %546 = vmatprep.subr.mxu0 0.0
  %547 = vmatpush1.msra.mxu0 %v523
  %548 = vmatprep.subr.mxu0 0.0
  %549 = vmatpush1.msra.mxu0 %v524
  %550 = vmatprep.subr.mxu0 0.0
  %551 = vmatpush1.msra.mxu0 %v525
  %552 = vmatprep.subr.mxu0 0.0
  %553 = vmatpush1.msra.mxu0 %v526
  %554 = vmatprep.subr.mxu0 0.0
  %555 = vmatpush1.msra.mxu0 %v527
  %556 = vmatprep.subr.mxu0 0.0
  %557 = vmatpush1.msra.mxu0 %v528
  %558 = vmatprep.subr.mxu0 0.0
  %559 = vmatpush1.msra.mxu0 %v529
  %560 = vmatprep.subr.mxu0 0.0
  %561 = vmatpush1.msra.mxu0 %v530
  %562 = vmatprep.subr.mxu0 0.0
  %563 = vmatpush1.msra.mxu0 %v531
  %564 = vmatprep.subr.mxu0 0.0
  %565 = vmatpush1.msra.mxu0 0.0
  %566 = vmatprep.subr.mxu0 0.0
  %567 = vmatpush1.msra.mxu0 0.0
  %568 = vmatprep.subr.mxu0 0.0
  %569 = vmatpush1.msra.mxu0 0.0
  %570 = vmatprep.subr.mxu0 0.0
  %571 = vmatpush1.msra.mxu0 0.0
  %572 = vmatprep.subr.mxu0 0.0
  %573 = vmatpush1.msra.mxu0 0.0
  %574 = vmatprep.subr.mxu0 0.0
  %575 = vmatpush1.msra.mxu0 0.0
  %576 = vmatprep.subr.mxu0 0.0
  %577 = vmatpush1.msra.mxu0 0.0
  %578 = vmatprep.subr.mxu0 0.0
  %579 = vmatpush1.msra.mxu0 0.0
  %580 = vmatprep.subr.mxu0 0.0
  %581 = vmatpush1.msra.mxu0 0.0
  %582 = vmatprep.subr.mxu0 0.0
  %583 = vmatpush1.msra.mxu0 0.0
  %584 = vmatprep.subr.mxu0 0.0
  %585 = vmatpush1.msra.mxu0 0.0
  %586 = vmatprep.subr.mxu0 0.0
  %587 = vmatpush1.msra.mxu0 0.0
  %588 = vmatprep.subr.mxu0 0.0
  %589 = vmatpush1.msra.mxu0 0.0
  %590 = vmatprep.subr.mxu0 0.0
  %591 = vmatpush1.msra.mxu0 0.0
  %592 = vmatprep.subr.mxu0 0.0
  %593 = vmatpush1.msra.mxu0 0.0
  %594 = vmatprep.subr.mxu0 0.0
  %595 = vmatpush1.msra.mxu0 0.0
  %596 = vmatprep.mubr.f32.mxu0 0.0
  %597 = vmatmul.mubr.f32.gmra.mrb[0].mxu0 %v477
  %v598 = vpop.f32.mrb[0].mxu0
  %v599 = vadd.f32 0.0, %v598
  %v600 = vpop.f32.mrb[0].mxu0
  %601 = vmatprep.mubr.f32.mxu0 0.0
  %602 = vmatmul.mubr.f32.gmra.mrb[0].mxu0 %v478
  %v603 = vpop.f32.mrb[0].mxu0
  %v604 = vadd.f32 0.0, %v603
  %v605 = vpop.f32.mrb[0].mxu0
  %606 = vmatprep.mubr.f32.mxu0 0.0
  %607 = vmatmul.mubr.f32.gmra.mrb[0].mxu0 %v479
  %v608 = vpop.f32.mrb[0].mxu0
  %v609 = vadd.f32 0.0, %v608
  %v610 = vpop.f32.mrb[0].mxu0
  %611 = vmatprep.mubr.f32.mxu0 0.0
  %612 = vmatmul.mubr.f32.gmra.mrb[0].mxu0 %v480
  %v613 = vpop.f32.mrb[0].mxu0
  %v614 = vadd.f32 0.0, %v613
  %v615 = vpop.f32.mrb[0].mxu0
  %616 = vmatprep.mubr.f32.mxu0 0.0
  %617 = vmatmul.mubr.f32.gmra.mrb[0].mxu0 %v481
  %v618 = vpop.f32.mrb[0].mxu0
  %v619 = vadd.f32 0.0, %v618
  %v620 = vpop.f32.mrb[0].mxu0
  %621 = vmatprep.mubr.f32.mxu0 0.0
  %622 = vmatmul.mubr.f32.gmra.mrb[0].mxu0 %v482
  %v623 = vpop.f32.mrb[0].mxu0
  %v624 = vadd.f32 0.0, %v623
  %v625 = vpop.f32.mrb[0].mxu0
  %626 = vmatprep.mubr.f32.mxu0 0.0
  %627 = vmatmul.mubr.f32.gmra.mrb[0].mxu0 %v483
  %v628 = vpop.f32.mrb[0].mxu0
  %v629 = vadd.f32 0.0, %v628
  %v630 = vpop.f32.mrb[0].mxu0
  %631 = vmatprep.mubr.f32.mxu0 0.0
  %632 = vmatmul.mubr.f32.gmra.mrb[0].mxu0 %v484
  %v633 = vpop.f32.mrb[0].mxu0
  %v634 = vadd.f32 0.0, %v633
  %v635 = vpop.f32.mrb[0].mxu0
  %636 = vmatprep.mubr.f32.mxu0 0.0
  %637 = vmatmul.mubr.f32.gmra.mrb[0].mxu0 %v485
  %v638 = vpop.f32.mrb[0].mxu0
  %v639 = vadd.f32 0.0, %v638
  %v640 = vpop.f32.mrb[0].mxu0
  %641 = vmatprep.mubr.f32.mxu0 0.0
  %642 = vmatmul.mubr.f32.gmra.mrb[0].mxu0 %v486
  %v643 = vpop.f32.mrb[0].mxu0
  %v644 = vadd.f32 0.0, %v643
  %v645 = vpop.f32.mrb[0].mxu0
  %646 = vmatprep.mubr.f32.mxu0 0.0
  %647 = vmatmul.mubr.f32.gmra.mrb[0].mxu0 %v487
  %v648 = vpop.f32.mrb[0].mxu0
  %v649 = vadd.f32 0.0, %v648
  %v650 = vpop.f32.mrb[0].mxu0
  %651 = vmatprep.mubr.f32.mxu0 0.0
  %652 = vmatmul.mubr.f32.gmra.mrb[0].mxu0 %v488
  %v653 = vpop.f32.mrb[0].mxu0
  %v654 = vadd.f32 0.0, %v653
  %v655 = vpop.f32.mrb[0].mxu0
  %656 = vmatprep.mubr.f32.mxu0 0.0
  %657 = vmatmul.mubr.f32.gmra.mrb[0].mxu0 %v489
  %v658 = vpop.f32.mrb[0].mxu0
  %v659 = vadd.f32 0.0, %v658
  %v660 = vpop.f32.mrb[0].mxu0
  %661 = vmatprep.mubr.f32.mxu0 0.0
  %662 = vmatmul.mubr.f32.gmra.mrb[0].mxu0 %v490
  %v663 = vpop.f32.mrb[0].mxu0
  %v664 = vadd.f32 0.0, %v663
  %v665 = vpop.f32.mrb[0].mxu0
  %666 = vmatprep.mubr.f32.mxu0 0.0
  %667 = vmatmul.mubr.f32.gmra.mrb[0].mxu0 %v491
  %v668 = vpop.f32.mrb[0].mxu0
  %v669 = vadd.f32 0.0, %v668
  %v670 = vpop.f32.mrb[0].mxu0
  %671 = vmatprep.mubr.f32.mxu0 0.0
  %672 = vmatmul.mubr.f32.gmra.mrb[0].mxu0 %v492
  %v673 = vpop.f32.mrb[0].mxu0
  %v674 = vadd.f32 0.0, %v673
  %v675 = vpop.f32.mrb[0].mxu0
  %676 = vdwg.mxu0
  %677 = vst [vmem:[%s4] sm:$0xff] %v599
  %678 = vst [vmem:[%s4 + $0x8] sm:$0xff] %v604
  %679 = vst [vmem:[%s4 + $0x10] sm:$0xff] %v609
  %680 = vst [vmem:[%s4 + $0x18] sm:$0xff] %v614
  %681 = vst [vmem:[%s4 + $0x20] sm:$0xff] %v619
  %682 = vst [vmem:[%s4 + $0x28] sm:$0xff] %v624
  %683 = vst [vmem:[%s4 + $0x30] sm:$0xff] %v629
  %684 = vst [vmem:[%s4 + $0x38] sm:$0xff] %v634
  %685 = vst [vmem:[%s4 + $0x40] sm:$0xff] %v639
  %686 = vst [vmem:[%s4 + $0x48] sm:$0xff] %v644
  %687 = vst [vmem:[%s4 + $0x50] sm:$0xff] %v649
  %688 = vst [vmem:[%s4 + $0x58] sm:$0xff] %v654
  %689 = vst [vmem:[%s4 + $0x60] sm:$0xff] %v659
  %690 = vst [vmem:[%s4 + $0x68] sm:$0xff] %v664
  %691 = vst [vmem:[%s4 + $0x70] sm:$0xff] %v669
  %692 = vst [vmem:[%s4 + $0x78] sm:$0xff] %v674
  %693 = vst [vmem:[%s5] sm:$0x1] %v515
  // Predicated region
  $region18: #{dense_block_forward.4} parent=0 // pred_check
    _
  $region19: #{dense_block_forward.4} parent=0 // pred_check_branch
    %695 = sbr.rel (0) target = $region21
  $region20: #{dense_block_forward.4} parent=0 // pred_region
    _
  $region21: #{dense_block_forward.4} parent=0 // pred_fallthru
    _
  // Predicated region
  $region22: #{dense_block_forward.4} parent=0 // pred_check
    _
  $region23: #{dense_block_forward.4} parent=0 // pred_check_branch
    %697 = sbr.rel (0) target = $region25
  $region24: #{dense_block_forward.4} parent=0 // pred_region
    _
  $region25: #{dense_block_forward.4} parent=0 // pred_fallthru
    _
  // Predicated region
  $region26: #{dense_block_forward.4} parent=0 // pred_check
    _
  $region27: #{dense_block_forward.4} parent=0 // pred_check_branch
    %699 = sbr.rel (0) target = $region29
  $region28: #{dense_block_forward.4} parent=0 // pred_region
    _
  $region29: #{dense_block_forward.4} parent=0 // pred_fallthru
    _
  // Predicated region
  $region30: #{dense_block_forward.4} parent=0 // pred_check
    _
  $region31: #{dense_block_forward.4} parent=0 // pred_check_branch
    %701 = sbr.rel (0) target = $region33
  $region32: #{dense_block_forward.4} parent=0 // pred_region
    _
  $region33: #{dense_block_forward.4} parent=0 // pred_fallthru
    _

// kernel: dense_block_forward.5
$region0: #{dense_block_forward.5}
  #allocation0 [shape = 'u32[]', space=smem, size = 0x4, offset = 0x4, fixed_abs, tag = 'smem constant byte address 0x4 - core index']
  #allocation1 [shape = 'u32[144,128]{1,0:T(1,128)}', space=vmem, size = 0x12000, scoped, tag = 'internal scratch']
  #allocation2 [shape = 'f32[132,128]{1,0:T(8,128)}', space=vmem, size = 0x11000, scoped, tag = 'scratch operand']
  %s0 = inlined_call_operand.vmem [shape: f32[2,100,128], index: 0, kind: input, shape index: {}]
  %s1 = inlined_call_operand.vmem [shape: f32[1,128], index: 1, kind: input, shape index: {}]
  %s2 = inlined_call_operand.vmem [shape: f32[1,128], index: 2, kind: input, shape index: {}]
  %s3 = inlined_call_operand.vmem [shape: f32[100,1], index: 3, kind: input, shape index: {}]
  %s4 = inlined_call_operand.vmem [shape: f32[9,128,128], index: 4, kind: input, shape index: {}]
  %s5 = inlined_call_operand.vmem [shape: f32[2,100,128], index: 5, kind: output, shape index: {0}]
  %s6 = inlined_call_operand.vmem [shape: f32[2,1,128], index: 6, kind: output, shape index: {1}]
  %7 = xla_tuple %s5, %s6
  %s8 = sld [smem:[#allocation0]]
  $region61: #{dense_block_forward.5} parent=0
    _
  %s10 = ssub.s32 1, %s8
  %s11 = scalar_select 0, %s10, %s8
  loop: start=0, step=1, limit=4
  $region2: #{dense_block_forward.5} parent=0 // loop_pre_header
    _
  $region3: #{dense_block_forward.5} parent=0 // loop_header
    %s13 = sphi 0, %s17
    %p14 = scmp.ge.s32.totalorder %s13, 4
    %s23 = sphi 0, %s25
    %s26 = sphi 0, %s23
    %s27 = sphi 0, %s26
    %s43 = sphi 0, %s27
    %s47 = sphi 0, %s47
    %s49 = sphi 0, %s47
    %s50 = sphi 0, %s49
    %s64 = sphi 0, %s50
    %s68 = sphi 0, %s68
    %s70 = sphi 0, %s68
    %s71 = sphi 0, %s70
    %s85 = sphi 0, %s71
    %s89 = sphi 0, %s89
    %s91 = sphi 0, %s89
    %s92 = sphi 0, %s91
    %s106 = sphi 0, %s92
    %s110 = sphi 0, %s110
    %s112 = sphi 0, %s110
    %s113 = sphi 0, %s112
    %s127 = sphi 0, %s113
    %s133 = sphi 0, %s135
    %s136 = sphi 0, %s133
    %s137 = sphi 0, %s136
    %s153 = sphi 0, %s137
    %s159 = sphi 0, %s161
    %s162 = sphi 0, %s159
    %s163 = sphi 0, %s162
    %s179 = sphi 0, %s163
  $region4: #{dense_block_forward.5} parent=0 // loop_header_branch
    %16 = sbr.rel (%p14) target = $region8
  $region5: #{dense_block_forward.5} parent=0 // loop_body
    %s18 = ssub.s32 %s13, 1
    %s19 = ssub.s32 %s13, 2
    %s20 = sadd.s32 %s13, 1
    %s21 = ssub.s32 %s13, %s20
    %p22 = scmp.eq.s32.totalorder %s21, 0
    %s24 = sadd.s32 %s23, 1
    %s25 = scalar_select %p22, %s23, %s24
    %p28 = pneg %p22
    %p29 = scmp.eq.s32.totalorder %s13, 1
    %p30 = por %p28, %p29
    %p31 = scmp.ne.s32.totalorder %s23, %s26
    %p32 = scmp.eq.s32.totalorder %s13, 0
    %p33 = por %p31, %p32
    %p34 = scmp.ne.s32.totalorder %s23, %s26
    %p35 = scmp.eq.s32.totalorder %s18, 1
    %p36 = por %p34, %p35
    %p37 = scmp.ne.s32.totalorder %s26, %s27
    %p38 = scmp.eq.s32.totalorder %s18, 0
    %p39 = por %p37, %p38
    %p40 = scmp.ne.s32.totalorder %s26, %s27
    %p41 = scmp.eq.s32.totalorder %s19, 1
    %p42 = por %p40, %p41
    %p44 = scmp.ne.s32.totalorder %s27, %s43
    %p45 = scmp.eq.s32.totalorder %s19, 0
    %p46 = por %p44, %p45
    %s48 = sadd.s32 %s47, 1
    %p51 = scmp.eq.s32.totalorder %s13, 1
    %p52 = scmp.ne.s32.totalorder %s47, %s49
    %p53 = scmp.eq.s32.totalorder %s13, 0
    %p54 = por %p52, %p53
    %p55 = scmp.ne.s32.totalorder %s47, %s49
    %p56 = scmp.eq.s32.totalorder %s18, 1
    %p57 = por %p55, %p56
    %p58 = scmp.ne.s32.totalorder %s49, %s50
    %p59 = scmp.eq.s32.totalorder %s18, 0
    %p60 = por %p58, %p59
    %p61 = scmp.ne.s32.totalorder %s49, %s50
    %p62 = scmp.eq.s32.totalorder %s19, 1
    %p63 = por %p61, %p62
    %p65 = scmp.ne.s32.totalorder %s50, %s64
    %p66 = scmp.eq.s32.totalorder %s19, 0
    %p67 = por %p65, %p66
    %s69 = sadd.s32 %s68, 1
    %p72 = scmp.eq.s32.totalorder %s13, 1
    %p73 = scmp.ne.s32.totalorder %s68, %s70
    %p74 = scmp.eq.s32.totalorder %s13, 0
    %p75 = por %p73, %p74
    %p76 = scmp.ne.s32.totalorder %s68, %s70
    %p77 = scmp.eq.s32.totalorder %s18, 1
    %p78 = por %p76, %p77
    %p79 = scmp.ne.s32.totalorder %s70, %s71
    %p80 = scmp.eq.s32.totalorder %s18, 0
    %p81 = por %p79, %p80
    %p82 = scmp.ne.s32.totalorder %s70, %s71
    %p83 = scmp.eq.s32.totalorder %s19, 1
    %p84 = por %p82, %p83
    %p86 = scmp.ne.s32.totalorder %s71, %s85
    %p87 = scmp.eq.s32.totalorder %s19, 0
    %p88 = por %p86, %p87
    %s90 = sadd.s32 %s89, 1
    %p93 = scmp.eq.s32.totalorder %s13, 1
    %p94 = scmp.ne.s32.totalorder %s89, %s91
    %p95 = scmp.eq.s32.totalorder %s13, 0
    %p96 = por %p94, %p95
    %p97 = scmp.ne.s32.totalorder %s89, %s91
    %p98 = scmp.eq.s32.totalorder %s18, 1
    %p99 = por %p97, %p98
    %p100 = scmp.ne.s32.totalorder %s91, %s92
    %p101 = scmp.eq.s32.totalorder %s18, 0
    %p102 = por %p100, %p101
    %p103 = scmp.ne.s32.totalorder %s91, %s92
    %p104 = scmp.eq.s32.totalorder %s19, 1
    %p105 = por %p103, %p104
    %p107 = scmp.ne.s32.totalorder %s92, %s106
    %p108 = scmp.eq.s32.totalorder %s19, 0
    %p109 = por %p107, %p108
    %s111 = sadd.s32 %s110, 1
    %p114 = scmp.eq.s32.totalorder %s13, 1
    %p115 = scmp.ne.s32.totalorder %s110, %s112
    %p116 = scmp.eq.s32.totalorder %s13, 0
    %p117 = por %p115, %p116
    %p118 = scmp.ne.s32.totalorder %s110, %s112
    %p119 = scmp.eq.s32.totalorder %s18, 1
    %p120 = por %p118, %p119
    %p121 = scmp.ne.s32.totalorder %s112, %s113
    %p122 = scmp.eq.s32.totalorder %s18, 0
    %p123 = por %p121, %p122
    %p124 = scmp.ne.s32.totalorder %s112, %s113
    %p125 = scmp.eq.s32.totalorder %s19, 1
    %p126 = por %p124, %p125
    %p128 = scmp.ne.s32.totalorder %s113, %s127
    %p129 = scmp.eq.s32.totalorder %s19, 0
    %p130 = por %p128, %p129
    %s131 = ssub.s32 %s13, %s20
    %p132 = scmp.eq.s32.totalorder %s131, 0
    %s134 = sadd.s32 %s133, 1
    %s135 = scalar_select %p132, %s133, %s134
    %p138 = pneg %p132
    %p139 = scmp.eq.s32.totalorder %s13, 1
    %p140 = por %p138, %p139
    %p141 = scmp.ne.s32.totalorder %s133, %s136
    %p142 = scmp.eq.s32.totalorder %s13, 0
    %p143 = por %p141, %p142
    %p144 = scmp.ne.s32.totalorder %s133, %s136
    %p145 = scmp.eq.s32.totalorder %s18, 1
    %p146 = por %p144, %p145
    %p147 = scmp.ne.s32.totalorder %s136, %s137
    %p148 = scmp.eq.s32.totalorder %s18, 0
    %p149 = por %p147, %p148
    %p150 = scmp.ne.s32.totalorder %s136, %s137
    %p151 = scmp.eq.s32.totalorder %s19, 1
    %p152 = por %p150, %p151
    %p154 = scmp.ne.s32.totalorder %s137, %s153
    %p155 = scmp.eq.s32.totalorder %s19, 0
    %p156 = por %p154, %p155
    %s157 = ssub.s32 %s13, %s20
    %p158 = scmp.eq.s32.totalorder %s157, 0
    %s160 = sadd.s32 %s159, 1
    %s161 = scalar_select %p158, %s159, %s160
    %p164 = pneg %p158
    %p165 = scmp.eq.s32.totalorder %s13, 1
    %p166 = por %p164, %p165
    %p167 = scmp.ne.s32.totalorder %s159, %s162
    %p168 = scmp.eq.s32.totalorder %s13, 0
    %p169 = por %p167, %p168
    %p170 = scmp.ne.s32.totalorder %s159, %s162
    %p171 = scmp.eq.s32.totalorder %s18, 1
    %p172 = por %p170, %p171
    %p173 = scmp.ne.s32.totalorder %s162, %s163
    %p174 = scmp.eq.s32.totalorder %s18, 0
    %p175 = por %p173, %p174
    %p176 = scmp.ne.s32.totalorder %s162, %s163
    %p177 = scmp.eq.s32.totalorder %s19, 1
    %p178 = por %p176, %p177
    %p180 = scmp.ne.s32.totalorder %s163, %s179
    %p181 = scmp.eq.s32.totalorder %s19, 0
    %p182 = por %p180, %p181
    %p183 = scmp.le.s32.totalorder 1, %s13
    %p184 = scmp.lt.s32.totalorder %s13, 3
    %p185 = pnand %p183, %p184
    %p186 = pneg %p185
    // Predicated region
    $region9: #{dense_block_forward.5} parent=5 // pred_check
      _
    $region10: #{dense_block_forward.5} parent=5 // pred_check_branch
      %188 = sbr.rel (%p185) target = $region12
    $region11: #{dense_block_forward.5} parent=5 // pred_region
      %s189 = ssub.s32 %s13, 1
      // Predicated region
      $region13: #{dense_block_forward.5} parent=11 // pred_check
        %p190 = pneg %p60
      $region14: #{dense_block_forward.5} parent=11 // pred_check_branch
        %192 = sbr.rel (%p190) target = $region16
      $region15: #{dense_block_forward.5} parent=11 // pred_region
        _
      $region16: #{dense_block_forward.5} parent=11 // pred_fallthru
        _
      // Predicated region
      $region17: #{dense_block_forward.5} parent=11 // pred_check
        %p193 = pneg %p81
      $region18: #{dense_block_forward.5} parent=11 // pred_check_branch
        %195 = sbr.rel (%p193) target = $region20
      $region19: #{dense_block_forward.5} parent=11 // pred_region
        _
      $region20: #{dense_block_forward.5} parent=11 // pred_fallthru
        _
      // Predicated region
      $region21: #{dense_block_forward.5} parent=11 // pred_check
        %p196 = pneg %p102
      $region22: #{dense_block_forward.5} parent=11 // pred_check_branch
        %198 = sbr.rel (%p196) target = $region24
      $region23: #{dense_block_forward.5} parent=11 // pred_region
        _
      $region24: #{dense_block_forward.5} parent=11 // pred_fallthru
        _
      // Predicated region
      $region25: #{dense_block_forward.5} parent=11 // pred_check
        %p199 = pneg %p123
      $region26: #{dense_block_forward.5} parent=11 // pred_check_branch
        %201 = sbr.rel (%p199) target = $region28
      $region27: #{dense_block_forward.5} parent=11 // pred_region
        _
      $region28: #{dense_block_forward.5} parent=11 // pred_fallthru
        _
    $region12: #{dense_block_forward.5} parent=5 // pred_fallthru
      _
    %p202 = scmp.lt.s32.totalorder %s13, 2
    // Predicated region
    $region29: #{dense_block_forward.5} parent=5 // pred_check
      %p203 = pneg %p202
    $region30: #{dense_block_forward.5} parent=5 // pred_check_branch
      %205 = sbr.rel (%p203) target = $region32
    $region31: #{dense_block_forward.5} parent=5 // pred_region
      // Predicated region
      $region33: #{dense_block_forward.5} parent=31 // pred_check
        %p206 = pneg %p33
      $region34: #{dense_block_forward.5} parent=31 // pred_check_branch
        %208 = sbr.rel (%p206) target = $region36
      $region35: #{dense_block_forward.5} parent=31 // pred_region
        %p209 = scmp.lt.s32.totalorder %s13, 1
        %s210 = scalar_select %p209, %s13, 1
        %s211 = smul.addr %s210, 13
        %s212 = smul.addr %s211, 8
        %s213 = scalar_lea.vmem %s0, %s212
      $region36: #{dense_block_forward.5} parent=31 // pred_fallthru
        _
    $region32: #{dense_block_forward.5} parent=5 // pred_fallthru
      _
    %p214 = scmp.le.s32.totalorder 1, %s13
    %p215 = scmp.lt.s32.totalorder %s13, 3
    %p216 = pnand %p214, %p215
    %p217 = pneg %p216
    // Predicated region
    $region37: #{dense_block_forward.5} parent=5 // pred_check
      _
    $region38: #{dense_block_forward.5} parent=5 // pred_check_branch
      %219 = sbr.rel (%p216) target = $region40
    $region39: #{dense_block_forward.5} parent=5 // pred_region
      %s220 = ssub.s32 %s13, 1
      %p221 = scmp.lt.s32.totalorder %s18, 1
      %s222 = scalar_select %p221, %s18, 1
      %s223 = smul.addr %s222, 13
      %s224 = smul.addr %s223, 8
      %s225 = scalar_lea.vmem %s0, %s224
      %p226 = pneg %p39
      %p227 = pneg %p36
      %p228 = pneg %p60
      %p229 = pneg %p57
      %p230 = pneg %p81
      %p231 = pneg %p78
      %p232 = pneg %p102
      %p233 = pneg %p99
      %p234 = pneg %p123
      %p235 = pneg %p120
      %p236 = pneg %p149
      %p237 = pneg %p146
      %p238 = scmp.lt.s32.totalorder %s18, 1
      %s239 = scalar_select %p238, %s18, 1
      %s240 = smul.addr %s239, 13
      %s241 = smul.addr %s240, 8
      %s242 = scalar_lea.vmem %s5, %s241
      %p243 = pneg %p175
      %p244 = pneg %p172
      %p245 = scmp.lt.s32.totalorder %s18, 1
      %s246 = scalar_select %p245, %s18, 1
      %s247 = scalar_lea.vmem %s6, %s246
      %p248 = scmp.lt.s32.totalorder %s18, 1
      %s249 = scalar_select %p248, %s18, 1
      %s250 = smul.addr %s249, 13
      %s251 = smul.addr %s250, 8
      %s252 = scalar_lea.vmem %s0, %s251
      %p253 = scmp.lt.s32.totalorder %s18, 1
      %s254 = scalar_select %p253, %s18, 1
      %s255 = smul.addr %s254, 13
      %s256 = smul.addr %s255, 8
      %s257 = scalar_lea.vmem %s5, %s256
      %p258 = scmp.lt.s32.totalorder %s18, 1
      %s259 = scalar_select %p258, %s18, 1
      %s260 = scalar_lea.vmem %s6, %s259
      %v261 = vld [vmem:[%s252] sm:$0xff]
      %v262 = vld [vmem:[%s252 + $0x8] sm:$0xff]
      %v263 = vld [vmem:[%s252 + $0x10] sm:$0xff]
      %v264 = vld [vmem:[%s252 + $0x18] sm:$0xff]
      %v265 = vld [vmem:[%s252 + $0x20] sm:$0xff]
      %v266 = vld [vmem:[%s252 + $0x28] sm:$0xff]
      %v267 = vld [vmem:[%s252 + $0x30] sm:$0xff]
      %v268 = vld [vmem:[%s252 + $0x38] sm:$0xff]
      %v269 = vld [vmem:[%s252 + $0x40] sm:$0xff]
      %v270 = vld [vmem:[%s252 + $0x48] sm:$0xff]
      %v271 = vld [vmem:[%s252 + $0x50] sm:$0xff]
      %v272 = vld [vmem:[%s252 + $0x58] sm:$0xff]
      %v273 = vld [vmem:[%s252 + $0x60] sm:$0xf]
      %v274 = vld [vmem:[%s1] sm:$0x1]
      %v276 = vlaneseq
      %v277 = vshrl.u32 %v276, 7
      %v278 = vsub.s32 0, %v277
      %v279 = vrot.slane %v274, %v278
      %v281 = vmul.f32 %v261, %v279
      %v282 = vmul.f32 %v262, %v279
      %v283 = vmul.f32 %v263, %v279
      %v284 = vmul.f32 %v264, %v279
      %v285 = vmul.f32 %v265, %v279
      %v286 = vmul.f32 %v266, %v279
      %v287 = vmul.f32 %v267, %v279
      %v288 = vmul.f32 %v268, %v279
      %v289 = vmul.f32 %v269, %v279
      %v290 = vmul.f32 %v270, %v279
      %v291 = vmul.f32 %v271, %v279
      %v292 = vmul.f32 %v272, %v279
      %v293 = vmul.f32 %v273, %v279
      %v294 = vld [vmem:[%s2] sm:$0x1]
      %v296 = vlaneseq
      %v297 = vshrl.u32 %v296, 7
      %v298 = vsub.s32 0, %v297
      %v299 = vrot.slane %v294, %v298
      %v301 = vadd.f32 %v281, %v299
      %v302 = vadd.f32 %v282, %v299
      %v303 = vadd.f32 %v283, %v299
      %v304 = vadd.f32 %v284, %v299
      %v305 = vadd.f32 %v285, %v299
      %v306 = vadd.f32 %v286, %v299
      %v307 = vadd.f32 %v287, %v299
      %v308 = vadd.f32 %v288, %v299
      %v309 = vadd.f32 %v289, %v299
      %v310 = vadd.f32 %v290, %v299
      %v311 = vadd.f32 %v291, %v299
      %v312 = vadd.f32 %v292, %v299
      %v313 = vadd.f32 %v293, %v299
      %v314 = vmax.f32 %v301, 0.0
      %v315 = vmax.f32 %v302, 0.0
      %v316 = vmax.f32 %v303, 0.0
      %v317 = vmax.f32 %v304, 0.0
      %v318 = vmax.f32 %v305, 0.0
      %v319 = vmax.f32 %v306, 0.0
      %v320 = vmax.f32 %v307, 0.0
      %v321 = vmax.f32 %v308, 0.0
      %v322 = vmax.f32 %v309, 0.0
      %v323 = vmax.f32 %v310, 0.0
      %v324 = vmax.f32 %v311, 0.0
      %v325 = vmax.f32 %v312, 0.0
      %v326 = vmax.f32 %v313, 0.0
      %v327 = vld [vmem:[%s3] sm:$0xff]
      %v328 = vld [vmem:[%s3 + $0x8] sm:$0xff]
      %v329 = vld [vmem:[%s3 + $0x10] sm:$0xff]
      %v330 = vld [vmem:[%s3 + $0x18] sm:$0xff]
      %v331 = vld [vmem:[%s3 + $0x20] sm:$0xff]
      %v332 = vld [vmem:[%s3 + $0x28] sm:$0xff]
      %v333 = vld [vmem:[%s3 + $0x30] sm:$0xff]
      %v334 = vld [vmem:[%s3 + $0x38] sm:$0xff]
      %v335 = vld [vmem:[%s3 + $0x40] sm:$0xff]
      %v336 = vld [vmem:[%s3 + $0x48] sm:$0xff]
      %v337 = vld [vmem:[%s3 + $0x50] sm:$0xff]
      %v338 = vld [vmem:[%s3 + $0x58] sm:$0xff]
      %v339 = vld [vmem:[%s3 + $0x60] sm:$0xf]
      %341 = vset.pattern.permute.xlu0 0
      %342 = vperm.xlu0 %341, %v327
      %v343 = vpop.permute.xlu0 %342
      %346 = vset.pattern.permute.xlu0 0
      %347 = vperm.xlu0 %346, %v328
      %v348 = vpop.permute.xlu0 %347
      %351 = vset.pattern.permute.xlu0 0
      %352 = vperm.xlu0 %351, %v329
      %v353 = vpop.permute.xlu0 %352
      %356 = vset.pattern.permute.xlu0 0
      %357 = vperm.xlu0 %356, %v330
      %v358 = vpop.permute.xlu0 %357
      %361 = vset.pattern.permute.xlu0 0
      %362 = vperm.xlu0 %361, %v331
      %v363 = vpop.permute.xlu0 %362
      %366 = vset.pattern.permute.xlu0 0
      %367 = vperm.xlu0 %366, %v332
      %v368 = vpop.permute.xlu0 %367
      %371 = vset.pattern.permute.xlu0 0
      %372 = vperm.xlu0 %371, %v333
      %v373 = vpop.permute.xlu0 %372
      %376 = vset.pattern.permute.xlu0 0
      %377 = vperm.xlu0 %376, %v334
      %v378 = vpop.permute.xlu0 %377
      %381 = vset.pattern.permute.xlu0 0
      %382 = vperm.xlu0 %381, %v335
      %v383 = vpop.permute.xlu0 %382
      %386 = vset.pattern.permute.xlu0 0
      %387 = vperm.xlu0 %386, %v336
      %v388 = vpop.permute.xlu0 %387
      %391 = vset.pattern.permute.xlu0 0
      %392 = vperm.xlu0 %391, %v337
      %v393 = vpop.permute.xlu0 %392
      %396 = vset.pattern.permute.xlu0 0
      %397 = vperm.xlu0 %396, %v338
      %v398 = vpop.permute.xlu0 %397
      %401 = vset.pattern.permute.xlu0 0
      %402 = vperm.xlu0 %401, %v339
      %v403 = vpop.permute.xlu0 %402
      %v405 = vmul.f32 %v314, %v343
      %v406 = vmul.f32 %v315, %v348
      %v407 = vmul.f32 %v316, %v353
      %v408 = vmul.f32 %v317, %v358
      %v409 = vmul.f32 %v318, %v363
      %v410 = vmul.f32 %v319, %v368
      %v411 = vmul.f32 %v320, %v373
      %v412 = vmul.f32 %v321, %v378
      %v413 = vmul.f32 %v322, %v383
      %v414 = vmul.f32 %v323, %v388
      %v415 = vmul.f32 %v324, %v393
      %v416 = vmul.f32 %v325, %v398
      %v417 = vmul.f32 %v326, %v403
      %vm418 = vcmp.gt.f32.partialorder %v405, 1.5
      %vm419 = vcmp.gt.f32.partialorder %v406, 1.5
      %vm420 = vcmp.gt.f32.partialorder %v407, 1.5
      %vm421 = vcmp.gt.f32.partialorder %v408, 1.5
      %vm422 = vcmp.gt.f32.partialorder %v409, 1.5
      %vm423 = vcmp.gt.f32.partialorder %v410, 1.5
      %vm424 = vcmp.gt.f32.partialorder %v411, 1.5
      %vm425 = vcmp.gt.f32.partialorder %v412, 1.5
      %vm426 = vcmp.gt.f32.partialorder %v413, 1.5
      %vm427 = vcmp.gt.f32.partialorder %v414, 1.5
      %vm428 = vcmp.gt.f32.partialorder %v415, 1.5
      %vm429 = vcmp.gt.f32.partialorder %v416, 1.5
      %vm430 = vcmp.gt.f32.partialorder %v417, 1.5
      %v431 = vsel %vm418, 1.5, 0.0
      %v432 = vsel %vm419, 1.5, 0.0
      %v433 = vsel %vm420, 1.5, 0.0
      %v434 = vsel %vm421, 1.5, 0.0
      %v435 = vsel %vm422, 1.5, 0.0
      %v436 = vsel %vm423, 1.5, 0.0
      %v437 = vsel %vm424, 1.5, 0.0
      %v438 = vsel %vm425, 1.5, 0.0
      %v439 = vsel %vm426, 1.5, 0.0
      %v440 = vsel %vm427, 1.5, 0.0
      %v441 = vsel %vm428, 1.5, 0.0
      %v442 = vsel %vm429, 1.5, 0.0
      %v443 = vsel %vm430, 1.5, 0.0
      %v444 = vsub.f32 %v405, %v431
      %v445 = vsub.f32 %v406, %v432
      %v446 = vsub.f32 %v407, %v433
      %v447 = vsub.f32 %v408, %v434
      %v448 = vsub.f32 %v409, %v435
      %v449 = vsub.f32 %v410, %v436
      %v450 = vsub.f32 %v411, %v437
      %v451 = vsub.f32 %v412, %v438
      %v452 = vsub.f32 %v413, %v439
      %v453 = vsub.f32 %v414, %v440
      %v454 = vsub.f32 %v415, %v441
      %v455 = vsub.f32 %v416, %v442
      %v456 = vsub.f32 %v417, %v443
      %v457 = vadd.f32 %v431, 0.0
      %v458 = vadd.f32 %v432, 0.0
      %v459 = vadd.f32 %v433, 0.0
      %v460 = vadd.f32 %v434, 0.0
      %v461 = vadd.f32 %v435, 0.0
      %v462 = vadd.f32 %v436, 0.0
      %v463 = vadd.f32 %v437, 0.0
      %v464 = vadd.f32 %v438, 0.0
      %v465 = vadd.f32 %v439, 0.0
      %v466 = vadd.f32 %v440, 0.0
      %v467 = vadd.f32 %v441, 0.0
      %v468 = vadd.f32 %v442, 0.0
      %v469 = vadd.f32 %v443, 0.0
      %v470 = vadd.f32 %v431, %v432
      %v471 = vadd.f32 %v470, %v433
      %v472 = vadd.f32 %v471, %v434
      %v473 = vadd.f32 %v472, %v435
      %v474 = vadd.f32 %v473, %v436
      %v475 = vadd.f32 %v474, %v437
      %v476 = vadd.f32 %v475, %v438
      %v477 = vadd.f32 %v476, %v439
      %v478 = vadd.f32 %v477, %v440
      %v479 = vadd.f32 %v478, %v441
      %v480 = vadd.f32 %v479, %v442
      %vm481 = vcmask 1043456
      %v482 = vsel %vm481, %v443, 0.0
      %v483 = vadd.f32 %v480, %v482
      %v484 = vrot.slane %v483, 4
      %v485 = vadd.f32 %v483, %v484
      %v486 = vrot.slane %v485, 2
      %v487 = vadd.f32 %v485, %v486
      %v488 = vrot.slane %v487, 1
      %v489 = vadd.f32 %v487, %v488
      %v490 = vmul.f32 %v489, 0.6666667
      %v491 = vadd.f32 %v490, 0.0
      %vm492 = vcmp.gt.f32.partialorder %v444, 0.75
      %vm493 = vcmp.gt.f32.partialorder %v445, 0.75
      %vm494 = vcmp.gt.f32.partialorder %v446, 0.75
      %vm495 = vcmp.gt.f32.partialorder %v447, 0.75
      %vm496 = vcmp.gt.f32.partialorder %v448, 0.75
      %vm497 = vcmp.gt.f32.partialorder %v449, 0.75
      %vm498 = vcmp.gt.f32.partialorder %v450, 0.75
      %vm499 = vcmp.gt.f32.partialorder %v451, 0.75
      %vm500 = vcmp.gt.f32.partialorder %v452, 0.75
      %vm501 = vcmp.gt.f32.partialorder %v453, 0.75
      %vm502 = vcmp.gt.f32.partialorder %v454, 0.75
      %vm503 = vcmp.gt.f32.partialorder %v455, 0.75
      %vm504 = vcmp.gt.f32.partialorder %v456, 0.75
      %v505 = vsel %vm492, 0.75, 0.0
      %v506 = vsel %vm493, 0.75, 0.0
      %v507 = vsel %vm494, 0.75, 0.0
      %v508 = vsel %vm495, 0.75, 0.0
      %v509 = vsel %vm496, 0.75, 0.0
      %v510 = vsel %vm497, 0.75, 0.0
      %v511 = vsel %vm498, 0.75, 0.0
      %v512 = vsel %vm499, 0.75, 0.0
      %v513 = vsel %vm500, 0.75, 0.0
      %v514 = vsel %vm501, 0.75, 0.0
      %v515 = vsel %vm502, 0.75, 0.0
      %v516 = vsel %vm503, 0.75, 0.0
      %v517 = vsel %vm504, 0.75, 0.0
      %v518 = vsub.f32 %v444, %v505
      %v519 = vsub.f32 %v445, %v506
      %v520 = vsub.f32 %v446, %v507
      %v521 = vsub.f32 %v447, %v508
      %v522 = vsub.f32 %v448, %v509
      %v523 = vsub.f32 %v449, %v510
      %v524 = vsub.f32 %v450, %v511
      %v525 = vsub.f32 %v451, %v512
      %v526 = vsub.f32 %v452, %v513
      %v527 = vsub.f32 %v453, %v514
      %v528 = vsub.f32 %v454, %v515
      %v529 = vsub.f32 %v455, %v516
      %v530 = vsub.f32 %v456, %v517
      %v531 = vadd.f32 %v457, %v505
      %v532 = vadd.f32 %v458, %v506
      %v533 = vadd.f32 %v459, %v507
      %v534 = vadd.f32 %v460, %v508
      %v535 = vadd.f32 %v461, %v509
      %v536 = vadd.f32 %v462, %v510
      %v537 = vadd.f32 %v463, %v511
      %v538 = vadd.f32 %v464, %v512
      %v539 = vadd.f32 %v465, %v513
      %v540 = vadd.f32 %v466, %v514
      %v541 = vadd.f32 %v467, %v515
      %v542 = vadd.f32 %v468, %v516
      %v543 = vadd.f32 %v469, %v517
      %v544 = vadd.f32 %v505, %v506
      %v545 = vadd.f32 %v544, %v507
      %v546 = vadd.f32 %v545, %v508
      %v547 = vadd.f32 %v546, %v509
      %v548 = vadd.f32 %v547, %v510
      %v549 = vadd.f32 %v548, %v511
      %v550 = vadd.f32 %v549, %v512
      %v551 = vadd.f32 %v550, %v513
      %v552 = vadd.f32 %v551, %v514
      %v553 = vadd.f32 %v552, %v515
      %v554 = vadd.f32 %v553, %v516
      %v555 = vsel %vm481, %v517, 0.0
      %v556 = vadd.f32 %v554, %v555
      %v557 = vrot.slane %v556, 4
      %v558 = vadd.f32 %v556, %v557
      %v559 = vrot.slane %v558, 2
      %v560 = vadd.f32 %v558, %v559
      %v561 = vrot.slane %v560, 1
      %v562 = vadd.f32 %v560, %v561
      %v563 = vmul.f32 %v562, 1.3333334
      %v564 = vadd.f32 %v491, %v563
      %vm565 = vcmp.gt.f32.partialorder %v518, 0.3725
      %vm566 = vcmp.gt.f32.partialorder %v519, 0.3725
      %vm567 = vcmp.gt.f32.partialorder %v520, 0.3725
      %vm568 = vcmp.gt.f32.partialorder %v521, 0.3725
      %vm569 = vcmp.gt.f32.partialorder %v522, 0.3725
      %vm570 = vcmp.gt.f32.partialorder %v523, 0.3725
      %vm571 = vcmp.gt.f32.partialorder %v524, 0.3725
      %vm572 = vcmp.gt.f32.partialorder %v525, 0.3725
      %vm573 = vcmp.gt.f32.partialorder %v526, 0.3725
      %vm574 = vcmp.gt.f32.partialorder %v527, 0.3725
      %vm575 = vcmp.gt.f32.partialorder %v528, 0.3725
      %vm576 = vcmp.gt.f32.partialorder %v529, 0.3725
      %vm577 = vcmp.gt.f32.partialorder %v530, 0.3725
      %v578 = vsel %vm565, 0.3725, 0.0
      %v579 = vsel %vm566, 0.3725, 0.0
      %v580 = vsel %vm567, 0.3725, 0.0
      %v581 = vsel %vm568, 0.3725, 0.0
      %v582 = vsel %vm569, 0.3725, 0.0
      %v583 = vsel %vm570, 0.3725, 0.0
      %v584 = vsel %vm571, 0.3725, 0.0
      %v585 = vsel %vm572, 0.3725, 0.0
      %v586 = vsel %vm573, 0.3725, 0.0
      %v587 = vsel %vm574, 0.3725, 0.0
      %v588 = vsel %vm575, 0.3725, 0.0
      %v589 = vsel %vm576, 0.3725, 0.0
      %v590 = vsel %vm577, 0.3725, 0.0
      %v591 = vsub.f32 %v518, %v578
      %v592 = vsub.f32 %v519, %v579
      %v593 = vsub.f32 %v520, %v580
      %v594 = vsub.f32 %v521, %v581
      %v595 = vsub.f32 %v522, %v582
      %v596 = vsub.f32 %v523, %v583
      %v597 = vsub.f32 %v524, %v584
      %v598 = vsub.f32 %v525, %v585
      %v599 = vsub.f32 %v526, %v586
      %v600 = vsub.f32 %v527, %v587
      %v601 = vsub.f32 %v528, %v588
      %v602 = vsub.f32 %v529, %v589
      %v603 = vsub.f32 %v530, %v590
      %v604 = vadd.f32 %v531, %v578
      %v605 = vadd.f32 %v532, %v579
      %v606 = vadd.f32 %v533, %v580
      %v607 = vadd.f32 %v534, %v581
      %v608 = vadd.f32 %v535, %v582
      %v609 = vadd.f32 %v536, %v583
      %v610 = vadd.f32 %v537, %v584
      %v611 = vadd.f32 %v538, %v585
      %v612 = vadd.f32 %v539, %v586
      %v613 = vadd.f32 %v540, %v587
      %v614 = vadd.f32 %v541, %v588
      %v615 = vadd.f32 %v542, %v589
      %v616 = vadd.f32 %v543, %v590
      %v617 = vadd.f32 %v578, %v579
      %v618 = vadd.f32 %v617, %v580
      %v619 = vadd.f32 %v618, %v581
      %v620 = vadd.f32 %v619, %v582
      %v621 = vadd.f32 %v620, %v583
      %v622 = vadd.f32 %v621, %v584
      %v623 = vadd.f32 %v622, %v585
      %v624 = vadd.f32 %v623, %v586
      %v625 = vadd.f32 %v624, %v587
      %v626 = vadd.f32 %v625, %v588
      %v627 = vadd.f32 %v626, %v589
      %v628 = vsel %vm481, %v590, 0.0
      %v629 = vadd.f32 %v627, %v628
      %v630 = vrot.slane %v629, 4
      %v631 = vadd.f32 %v629, %v630
      %v632 = vrot.slane %v631, 2
      %v633 = vadd.f32 %v631, %v632
      %v634 = vrot.slane %v633, 1
      %v635 = vadd.f32 %v633, %v634
      %v636 = vmul.f32 %v635, 2.6845639
      %v637 = vadd.f32 %v564, %v636
      %vm638 = vcmp.gt.f32.partialorder %v591, 0.18625
      %vm639 = vcmp.gt.f32.partialorder %v592, 0.18625
      %vm640 = vcmp.gt.f32.partialorder %v593, 0.18625
      %vm641 = vcmp.gt.f32.partialorder %v594, 0.18625
      %vm642 = vcmp.gt.f32.partialorder %v595, 0.18625
      %vm643 = vcmp.gt.f32.partialorder %v596, 0.18625
      %vm644 = vcmp.gt.f32.partialorder %v597, 0.18625
      %vm645 = vcmp.gt.f32.partialorder %v598, 0.18625
      %vm646 = vcmp.gt.f32.partialorder %v599, 0.18625
      %vm647 = vcmp.gt.f32.partialorder %v600, 0.18625
      %vm648 = vcmp.gt.f32.partialorder %v601, 0.18625
      %vm649 = vcmp.gt.f32.partialorder %v602, 0.18625
      %vm650 = vcmp.gt.f32.partialorder %v603, 0.18625
      %v651 = vsel %vm638, 0.18625, 0.0
      %v652 = vsel %vm639, 0.18625, 0.0
      %v653 = vsel %vm640, 0.18625, 0.0
      %v654 = vsel %vm641, 0.18625, 0.0
      %v655 = vsel %vm642, 0.18625, 0.0
      %v656 = vsel %vm643, 0.18625, 0.0
      %v657 = vsel %vm644, 0.18625, 0.0
      %v658 = vsel %vm645, 0.18625, 0.0
      %v659 = vsel %vm646, 0.18625, 0.0
      %v660 = vsel %vm647, 0.18625, 0.0
      %v661 = vsel %vm648, 0.18625, 0.0
      %v662 = vsel %vm649, 0.18625, 0.0
      %v663 = vsel %vm650, 0.18625, 0.0
      %v664 = vsub.f32 %v591, %v651
      %v665 = vsub.f32 %v592, %v652
      %v666 = vsub.f32 %v593, %v653
      %v667 = vsub.f32 %v594, %v654
      %v668 = vsub.f32 %v595, %v655
      %v669 = vsub.f32 %v596, %v656
      %v670 = vsub.f32 %v597, %v657
      %v671 = vsub.f32 %v598, %v658
      %v672 = vsub.f32 %v599, %v659
      %v673 = vsub.f32 %v600, %v660
      %v674 = vsub.f32 %v601, %v661
      %v675 = vsub.f32 %v602, %v662
      %v676 = vsub.f32 %v603, %v663
      %v677 = vadd.f32 %v604, %v651
      %v678 = vadd.f32 %v605, %v652
      %v679 = vadd.f32 %v606, %v653
      %v680 = vadd.f32 %v607, %v654
      %v681 = vadd.f32 %v608, %v655
      %v682 = vadd.f32 %v609, %v656
      %v683 = vadd.f32 %v610, %v657
      %v684 = vadd.f32 %v611, %v658
      %v685 = vadd.f32 %v612, %v659
      %v686 = vadd.f32 %v613, %v660
      %v687 = vadd.f32 %v614, %v661
      %v688 = vadd.f32 %v615, %v662
      %v689 = vadd.f32 %v616, %v663
      %v690 = vadd.f32 %v651, %v652
      %v691 = vadd.f32 %v690, %v653
      %v692 = vadd.f32 %v691, %v654
      %v693 = vadd.f32 %v692, %v655
      %v694 = vadd.f32 %v693, %v656
      %v695 = vadd.f32 %v694, %v657
      %v696 = vadd.f32 %v695, %v658
      %v697 = vadd.f32 %v696, %v659
      %v698 = vadd.f32 %v697, %v660
      %v699 = vadd.f32 %v698, %v661
      %v700 = vadd.f32 %v699, %v662
      %v701 = vsel %vm481, %v663, 0.0
      %v702 = vadd.f32 %v700, %v701
      %v703 = vrot.slane %v702, 4
      %v704 = vadd.f32 %v702, %v703
      %v705 = vrot.slane %v704, 2
      %v706 = vadd.f32 %v704, %v705
      %v707 = vrot.slane %v706, 1
      %v708 = vadd.f32 %v706, %v707
      %v709 = vmul.f32 %v708, 5.3691278
      %v710 = vadd.f32 %v637, %v709
      %vm711 = vcmp.gt.f32.partialorder %v664, 0.093125
      %vm712 = vcmp.gt.f32.partialorder %v665, 0.093125
      %vm713 = vcmp.gt.f32.partialorder %v666, 0.093125
      %vm714 = vcmp.gt.f32.partialorder %v667, 0.093125
      %vm715 = vcmp.gt.f32.partialorder %v668, 0.093125
      %vm716 = vcmp.gt.f32.partialorder %v669, 0.093125
      %vm717 = vcmp.gt.f32.partialorder %v670, 0.093125
      %vm718 = vcmp.gt.f32.partialorder %v671, 0.093125
      %vm719 = vcmp.gt.f32.partialorder %v672, 0.093125
      %vm720 = vcmp.gt.f32.partialorder %v673, 0.093125
      %vm721 = vcmp.gt.f32.partialorder %v674, 0.093125
      %vm722 = vcmp.gt.f32.partialorder %v675, 0.093125
      %vm723 = vcmp.gt.f32.partialorder %v676, 0.093125
      %v724 = vsel %vm711, 0.093125, 0.0
      %v725 = vsel %vm712, 0.093125, 0.0
      %v726 = vsel %vm713, 0.093125, 0.0
      %v727 = vsel %vm714, 0.093125, 0.0
      %v728 = vsel %vm715, 0.093125, 0.0
      %v729 = vsel %vm716, 0.093125, 0.0
      %v730 = vsel %vm717, 0.093125, 0.0
      %v731 = vsel %vm718, 0.093125, 0.0
      %v732 = vsel %vm719, 0.093125, 0.0
      %v733 = vsel %vm720, 0.093125, 0.0
      %v734 = vsel %vm721, 0.093125, 0.0
      %v735 = vsel %vm722, 0.093125, 0.0
      %v736 = vsel %vm723, 0.093125, 0.0
      %v737 = vadd.f32 %v677, %v724
      %v738 = vadd.f32 %v678, %v725
      %v739 = vadd.f32 %v679, %v726
      %v740 = vadd.f32 %v680, %v727
      %v741 = vadd.f32 %v681, %v728
      %v742 = vadd.f32 %v682, %v729
      %v743 = vadd.f32 %v683, %v730
      %v744 = vadd.f32 %v684, %v731
      %v745 = vadd.f32 %v685, %v732
      %v746 = vadd.f32 %v686, %v733
      %v747 = vadd.f32 %v687, %v734
      %v748 = vadd.f32 %v688, %v735
      %v749 = vadd.f32 %v689, %v736
      %v750 = vadd.f32 %v724, %v725
      %v751 = vadd.f32 %v750, %v726
      %v752 = vadd.f32 %v751, %v727
      %v753 = vadd.f32 %v752, %v728
      %v754 = vadd.f32 %v753, %v729
      %v755 = vadd.f32 %v754, %v730
      %v756 = vadd.f32 %v755, %v731
      %v757 = vadd.f32 %v756, %v732
      %v758 = vadd.f32 %v757, %v733
      %v759 = vadd.f32 %v758, %v734
      %v760 = vadd.f32 %v759, %v735
      %v761 = vsel %vm481, %v736, 0.0
      %v762 = vadd.f32 %v760, %v761
      %v763 = vrot.slane %v762, 4
      %v764 = vadd.f32 %v762, %v763
      %v765 = vrot.slane %v764, 2
      %v766 = vadd.f32 %v764, %v765
      %v767 = vrot.slane %v766, 1
      %v768 = vadd.f32 %v766, %v767
      %v769 = vmul.f32 %v768, 10.7382555
      %v770 = vadd.f32 %v710, %v769
      %771 = vst [vmem:[#allocation2] sm:$0xff] 0.0
      %772 = vst [vmem:[#allocation2 + $0x8] sm:$0xff] 0.0
      %773 = vst [vmem:[#allocation2 + $0x74] sm:$0xff] 0.0
      %774 = vst [vmem:[#allocation2 + $0x7c] sm:$0xff] 0.0
      %775 = vst [vmem:[#allocation2 + $0x10] sm:$0xff] %v737
      %776 = vst [vmem:[#allocation2 + $0x18] sm:$0xff] %v738
      %777 = vst [vmem:[#allocation2 + $0x20] sm:$0xff] %v739
      %778 = vst [vmem:[#allocation2 + $0x28] sm:$0xff] %v740
      %779 = vst [vmem:[#allocation2 + $0x30] sm:$0xff] %v741
      %780 = vst [vmem:[#allocation2 + $0x38] sm:$0xff] %v742
      %781 = vst [vmem:[#allocation2 + $0x40] sm:$0xff] %v743
      %782 = vst [vmem:[#allocation2 + $0x48] sm:$0xff] %v744
      %783 = vst [vmem:[#allocation2 + $0x50] sm:$0xff] %v745
      %784 = vst [vmem:[#allocation2 + $0x58] sm:$0xff] %v746
      %785 = vst [vmem:[#allocation2 + $0x60] sm:$0xff] %v747
      %786 = vst [vmem:[#allocation2 + $0x68] sm:$0xff] %v748
      %787 = vst [vmem:[#allocation2 + $0x70] sm:$0xf] %v749
      %v788 = vld [vmem:[#allocation2 + $0x5] sm:$0xff]
      %v789 = vld [vmem:[#allocation2 + $0xd] sm:$0xff]
      %v790 = vld [vmem:[#allocation2 + $0x15] sm:$0xff]
      %v791 = vld [vmem:[#allocation2 + $0x1d] sm:$0xff]
      %v792 = vld [vmem:[#allocation2 + $0x25] sm:$0xff]
      %v793 = vld [vmem:[#allocation2 + $0x2d] sm:$0xff]
      %v794 = vld [vmem:[#allocation2 + $0x35] sm:$0xff]
      %v795 = vld [vmem:[#allocation2 + $0x3d] sm:$0xff]
      %v796 = vld [vmem:[#allocation2 + $0x45] sm:$0xff]
      %v797 = vld [vmem:[#allocation2 + $0x4d] sm:$0xff]
      %v798 = vld [vmem:[#allocation2 + $0x55] sm:$0xff]
      %v799 = vld [vmem:[#allocation2 + $0x5d] sm:$0xff]
      %v800 = vld [vmem:[#allocation2 + $0x65] sm:$0xf]
      %v801 = vld [vmem:[%s4] sm:$0xff]
      %v802 = vld [vmem:[%s4 + $0x8] sm:$0xff]
      %v803 = vld [vmem:[%s4 + $0x10] sm:$0xff]
      %v804 = vld [vmem:[%s4 + $0x18] sm:$0xff]
      %v805 = vld [vmem:[%s4 + $0x20] sm:$0xff]
      %v806 = vld [vmem:[%s4 + $0x28] sm:$0xff]
      %v807 = vld [vmem:[%s4 + $0x30] sm:$0xff]
      %v808 = vld [vmem:[%s4 + $0x38] sm:$0xff]
      %v809 = vld [vmem:[%s4 + $0x40] sm:$0xff]
      %v810 = vld [vmem:[%s4 + $0x48] sm:$0xff]
      %v811 = vld [vmem:[%s4 + $0x50] sm:$0xff]
      %v812 = vld [vmem:[%s4 + $0x58] sm:$0xff]
      %v813 = vld [vmem:[%s4 + $0x60] sm:$0xff]
      %v814 = vld [vmem:[%s4 + $0x68] sm:$0xff]
      %v815 = vld [vmem:[%s4 + $0x70] sm:$0xff]
      %v816 = vld [vmem:[%s4 + $0x78] sm:$0xff]
      %v817 = vld [vmem:[#allocation2 + $0x6] sm:$0xff]
      %v818 = vld [vmem:[#allocation2 + $0xe] sm:$0xff]
      %v819 = vld [vmem:[#allocation2 + $0x16] sm:$0xff]
      %v820 = vld [vmem:[#allocation2 + $0x1e] sm:$0xff]
      %v821 = vld [vmem:[#allocation2 + $0x26] sm:$0xff]
      %v822 = vld [vmem:[#allocation2 + $0x2e] sm:$0xff]
      %v823 = vld [vmem:[#allocation2 + $0x36] sm:$0xff]
      %v824 = vld [vmem:[#allocation2 + $0x3e] sm:$0xff]
      %v825 = vld [vmem:[#allocation2 + $0x46] sm:$0xff]
      %v826 = vld [vmem:[#allocation2 + $0x4e] sm:$0xff]
      %v827 = vld [vmem:[#allocation2 + $0x56] sm:$0xff]
      %v828 = vld [vmem:[#allocation2 + $0x5e] sm:$0xff]
      %v829 = vld [vmem:[#allocation2 + $0x66] sm:$0xf]
      %s830 = scalar_lea.vmem %s4, 128
      %v831 = vld [vmem:[%s830] sm:$0xff]
      %v832 = vld [vmem:[%s830 + $0x8] sm:$0xff]
      %v833 = vld [vmem:[%s830 + $0x10] sm:$0xff]
      %v834 = vld [vmem:[%s830 + $0x18] sm:$0xff]
      %v835 = vld [vmem:[%s830 + $0x20] sm:$0xff]
      %v836 = vld [vmem:[%s830 + $0x28] sm:$0xff]
      %v837 = vld [vmem:[%s830 + $0x30] sm:$0xff]
      %v838 = vld [vmem:[%s830 + $0x38] sm:$0xff]
      %v839 = vld [vmem:[%s830 + $0x40] sm:$0xff]
      %v840 = vld [vmem:[%s830 + $0x48] sm:$0xff]
      %v841 = vld [vmem:[%s830 + $0x50] sm:$0xff]
      %v842 = vld [vmem:[%s830 + $0x58] sm:$0xff]
      %v843 = vld [vmem:[%s830 + $0x60] sm:$0xff]
      %v844 = vld [vmem:[%s830 + $0x68] sm:$0xff]
      %v845 = vld [vmem:[%s830 + $0x70] sm:$0xff]
      %v846 = vld [vmem:[%s830 + $0x78] sm:$0xff]
      %847 = vmatprep.subr.mxu0 0.0
      %848 = vmatpush1.msra.mxu0 %v831
      %849 = vmatprep.subr.mxu0 0.0
      %850 = vmatpush1.msra.mxu0 %v832
      %851 = vmatprep.subr.mxu0 0.0
      %852 = vmatpush1.msra.mxu0 %v833
      %853 = vmatprep.subr.mxu0 0.0
      %854 = vmatpush1.msra.mxu0 %v834
      %855 = vmatprep.subr.mxu0 0.0
      %856 = vmatpush1.msra.mxu0 %v835
      %857 = vmatprep.subr.mxu0 0.0
      %858 = vmatpush1.msra.mxu0 %v836
      %859 = vmatprep.subr.mxu0 0.0
      %860 = vmatpush1.msra.mxu0 %v837
      %861 = vmatprep.subr.mxu0 0.0
      %862 = vmatpush1.msra.mxu0 %v838
      %863 = vmatprep.subr.mxu0 0.0
      %864 = vmatpush1.msra.mxu0 %v839
      %865 = vmatprep.subr.mxu0 0.0
      %866 = vmatpush1.msra.mxu0 %v840
      %867 = vmatprep.subr.mxu0 0.0
      %868 = vmatpush1.msra.mxu0 %v841
      %869 = vmatprep.subr.mxu0 0.0
      %870 = vmatpush1.msra.mxu0 %v842
      %871 = vmatprep.subr.mxu0 0.0
      %872 = vmatpush1.msra.mxu0 %v843
      %873 = vmatprep.subr.mxu0 0.0
      %874 = vmatpush1.msra.mxu0 %v844
      %875 = vmatprep.subr.mxu0 0.0
      %876 = vmatpush1.msra.mxu0 %v845
      %877 = vmatprep.subr.mxu0 0.0
      %878 = vmatpush1.msra.mxu0 %v846
      %879 = vmatprep.subr.mxu0 0.0
      %880 = vmatpush1.msra.mxu0 0.0
      %881 = vmatprep.subr.mxu0 0.0
      %882 = vmatpush1.msra.mxu0 0.0
      %883 = vmatprep.subr.mxu0 0.0
      %884 = vmatpush1.msra.mxu0 0.0
      %885 = vmatprep.subr.mxu0 0.0
      %886 = vmatpush1.msra.mxu0 0.0
      %887 = vmatprep.subr.mxu0 0.0
      %888 = vmatpush1.msra.mxu0 0.0
      %889 = vmatprep.subr.mxu0 0.0
      %890 = vmatpush1.msra.mxu0 0.0
      %891 = vmatprep.subr.mxu0 0.0
      %892 = vmatpush1.msra.mxu0 0.0
      %893 = vmatprep.subr.mxu0 0.0
      %894 = vmatpush1.msra.mxu0 0.0
      %895 = vmatprep.subr.mxu0 0.0
      %896 = vmatpush1.msra.mxu0 0.0
      %897 = vmatprep.subr.mxu0 0.0
      %898 = vmatpush1.msra.mxu0 0.0
      %899 = vmatprep.subr.mxu0 0.0
      %900 = vmatpush1.msra.mxu0 0.0
      %901 = vmatprep.subr.mxu0 0.0
      %902 = vmatpush1.msra.mxu0 0.0
      %903 = vmatprep.subr.mxu0 0.0
      %904 = vmatpush1.msra.mxu0 0.0
      %905 = vmatprep.subr.mxu0 0.0
      %906 = vmatpush1.msra.mxu0 0.0
      %907 = vmatprep.subr.mxu0 0.0
      %908 = vmatpush1.msra.mxu0 0.0
      %909 = vmatprep.subr.mxu0 0.0
      %910 = vmatpush1.msra.mxu0 0.0
      %911 = vmatprep.mubr.f32.mxu0 0.0
      %912 = vmatmul.mubr.f32.gmra.mrb[0].mxu0 %v817
      %v913 = vpop.f32.mrb[0].mxu0
      %v914 = vadd.f32 0.0, %v913
      %v915 = vpop.f32.mrb[0].mxu0
      %916 = vmatprep.mubr.f32.mxu0 0.0
      %917 = vmatmul.mubr.f32.gmra.mrb[0].mxu0 %v818
      %v918 = vpop.f32.mrb[0].mxu0
      %v919 = vadd.f32 0.0, %v918
      %v920 = vpop.f32.mrb[0].mxu0
      %921 = vmatprep.mubr.f32.mxu0 0.0
      %922 = vmatmul.mubr.f32.gmra.mrb[0].mxu0 %v819
      %v923 = vpop.f32.mrb[0].mxu0
      %v924 = vadd.f32 0.0, %v923
      %v925 = vpop.f32.mrb[0].mxu0
      %926 = vmatprep.mubr.f32.mxu0 0.0
      %927 = vmatmul.mubr.f32.gmra.mrb[0].mxu0 %v820
      %v928 = vpop.f32.mrb[0].mxu0
      %v929 = vadd.f32 0.0, %v928
      %v930 = vpop.f32.mrb[0].mxu0
      %931 = vmatprep.mubr.f32.mxu0 0.0
      %932 = vmatmul.mubr.f32.gmra.mrb[0].mxu0 %v821
      %v933 = vpop.f32.mrb[0].mxu0
      %v934 = vadd.f32 0.0, %v933
      %v935 = vpop.f32.mrb[0].mxu0
      %936 = vmatprep.mubr.f32.mxu0 0.0
      %937 = vmatmul.mubr.f32.gmra.mrb[0].mxu0 %v822
      %v938 = vpop.f32.mrb[0].mxu0
      %v939 = vadd.f32 0.0, %v938
      %v940 = vpop.f32.mrb[0].mxu0
      %941 = vmatprep.mubr.f32.mxu0 0.0
      %942 = vmatmul.mubr.f32.gmra.mrb[0].mxu0 %v823
      %v943 = vpop.f32.mrb[0].mxu0
      %v944 = vadd.f32 0.0, %v943
      %v945 = vpop.f32.mrb[0].mxu0
      %946 = vmatprep.mubr.f32.mxu0 0.0
      %947 = vmatmul.mubr.f32.gmra.mrb[0].mxu0 %v824
      %v948 = vpop.f32.mrb[0].mxu0
      %v949 = vadd.f32 0.0, %v948
      %v950 = vpop.f32.mrb[0].mxu0
      %951 = vmatprep.mubr.f32.mxu0 0.0
      %952 = vmatmul.mubr.f32.gmra.mrb[0].mxu0 %v825
      %v953 = vpop.f32.mrb[0].mxu0
      %v954 = vadd.f32 0.0, %v953
      %v955 = vpop.f32.mrb[0].mxu0
      %956 = vmatprep.mubr.f32.mxu0 0.0
      %957 = vmatmul.mubr.f32.gmra.mrb[0].mxu0 %v826
      %v958 = vpop.f32.mrb[0].mxu0
      %v959 = vadd.f32 0.0, %v958
      %v960 = vpop.f32.mrb[0].mxu0
      %961 = vmatprep.mubr.f32.mxu0 0.0
      %962 = vmatmul.mubr.f32.gmra.mrb[0].mxu0 %v827
      %v963 = vpop.f32.mrb[0].mxu0
      %v964 = vadd.f32 0.0, %v963
      %v965 = vpop.f32.mrb[0].mxu0
      %966 = vmatprep.mubr.f32.mxu0 0.0
      %967 = vmatmul.mubr.f32.gmra.mrb[0].mxu0 %v828
      %v968 = vpop.f32.mrb[0].mxu0
      %v969 = vadd.f32 0.0, %v968
      %v970 = vpop.f32.mrb[0].mxu0
      %971 = vmatprep.mubr.f32.mxu0 0.0
      %972 = vmatmul.mubr.f32.gmra.mrb[0].mxu0 %v829
      %v973 = vpop.f32.mrb[0].mxu0
      %v974 = vadd.f32 0.0, %v973
      %v975 = vpop.f32.mrb[0].mxu0
      %976 = vdwg.mxu0
      %977 = vmatprep.subr.mxu0 0.0
      %978 = vmatpush1.msra.mxu0 %v801
      %979 = vmatprep.subr.mxu0 0.0
      %980 = vmatpush1.msra.mxu0 %v802
      %981 = vmatprep.subr.mxu0 0.0
      %982 = vmatpush1.msra.mxu0 %v803
      %983 = vmatprep.subr.mxu0 0.0
      %984 = vmatpush1.msra.mxu0 %v804
      %985 = vmatprep.subr.mxu0 0.0
      %986 = vmatpush1.msra.mxu0 %v805
      %987 = vmatprep.subr.mxu0 0.0
      %988 = vmatpush1.msra.mxu0 %v806
      %989 = vmatprep.subr.mxu0 0.0
      %990 = vmatpush1.msra.mxu0 %v807
      %991 = vmatprep.subr.mxu0 0.0
      %992 = vmatpush1.msra.mxu0 %v808
      %993 = vmatprep.subr.mxu0 0.0
      %994 = vmatpush1.msra.mxu0 %v809
      %995 = vmatprep.subr.mxu0 0.0
      %996 = vmatpush1.msra.mxu0 %v810
      %997 = vmatprep.subr.mxu0 0.0
      %998 = vmatpush1.msra.mxu0 %v811
      %999 = vmatprep.subr.mxu0 0.0
      %1000 = vmatpush1.msra.mxu0 %v812
      %1001 = vmatprep.subr.mxu0 0.0
      %1002 = vmatpush1.msra.mxu0 %v813
      %1003 = vmatprep.subr.mxu0 0.0
      %1004 = vmatpush1.msra.mxu0 %v814
      %1005 = vmatprep.subr.mxu0 0.0
      %1006 = vmatpush1.msra.mxu0 %v815
      %1007 = vmatprep.subr.mxu0 0.0
      %1008 = vmatpush1.msra.mxu0 %v816
      %1009 = vmatprep.subr.mxu0 0.0
      %1010 = vmatpush1.msra.mxu0 0.0
      %1011 = vmatprep.subr.mxu0 0.0
      %1012 = vmatpush1.msra.mxu0 0.0
      %1013 = vmatprep.subr.mxu0 0.0
      %1014 = vmatpush1.msra.mxu0 0.0
      %1015 = vmatprep.subr.mxu0 0.0
      %1016 = vmatpush1.msra.mxu0 0.0
      %1017 = vmatprep.subr.mxu0 0.0
      %1018 = vmatpush1.msra.mxu0 0.0
      %1019 = vmatprep.subr.mxu0 0.0
      %1020 = vmatpush1.msra.mxu0 0.0
      %1021 = vmatprep.subr.mxu0 0.0
      %1022 = vmatpush1.msra.mxu0 0.0
      %1023 = vmatprep.subr.mxu0 0.0
      %1024 = vmatpush1.msra.mxu0 0.0
      %1025 = vmatprep.subr.mxu0 0.0
      %1026 = vmatpush1.msra.mxu0 0.0
      %1027 = vmatprep.subr.mxu0 0.0
      %1028 = vmatpush1.msra.mxu0 0.0
      %1029 = vmatprep.subr.mxu0 0.0
      %1030 = vmatpush1.msra.mxu0 0.0
      %1031 = vmatprep.subr.mxu0 0.0
      %1032 = vmatpush1.msra.mxu0 0.0
      %1033 = vmatprep.subr.mxu0 0.0
      %1034 = vmatpush1.msra.mxu0 0.0
      %1035 = vmatprep.subr.mxu0 0.0
      %1036 = vmatpush1.msra.mxu0 0.0
      %1037 = vmatprep.subr.mxu0 0.0
      %1038 = vmatpush1.msra.mxu0 0.0
      %1039 = vmatprep.subr.mxu0 0.0
      %1040 = vmatpush1.msra.mxu0 0.0
      %1041 = vmatprep.mubr.f32.mxu0 0.0
      %1042 = vmatmul.mubr.f32.gmra.mrb[0].mxu0 %v788
      %v1043 = vpop.f32.mrb[0].mxu0
      %v1044 = vadd.f32 %v914, %v1043
      %v1045 = vpop.f32.mrb[0].mxu0
      %1046 = vmatprep.mubr.f32.mxu0 0.0
      %1047 = vmatmul.mubr.f32.gmra.mrb[0].mxu0 %v789
      %v1048 = vpop.f32.mrb[0].mxu0
      %v1049 = vadd.f32 %v919, %v1048
      %v1050 = vpop.f32.mrb[0].mxu0
      %1051 = vmatprep.mubr.f32.mxu0 0.0
      %1052 = vmatmul.mubr.f32.gmra.mrb[0].mxu0 %v790
      %v1053 = vpop.f32.mrb[0].mxu0
      %v1054 = vadd.f32 %v924, %v1053
      %v1055 = vpop.f32.mrb[0].mxu0
      %1056 = vmatprep.mubr.f32.mxu0 0.0
      %1057 = vmatmul.mubr.f32.gmra.mrb[0].mxu0 %v791
      %v1058 = vpop.f32.mrb[0].mxu0
      %v1059 = vadd.f32 %v929, %v1058
      %v1060 = vpop.f32.mrb[0].mxu0
      %1061 = vmatprep.mubr.f32.mxu0 0.0
      %1062 = vmatmul.mubr.f32.gmra.mrb[0].mxu0 %v792
      %v1063 = vpop.f32.mrb[0].mxu0
      %v1064 = vadd.f32 %v934, %v1063
      %v1065 = vpop.f32.mrb[0].mxu0
      %1066 = vmatprep.mubr.f32.mxu0 0.0
      %1067 = vmatmul.mubr.f32.gmra.mrb[0].mxu0 %v793
      %v1068 = vpop.f32.mrb[0].mxu0
      %v1069 = vadd.f32 %v939, %v1068
      %v1070 = vpop.f32.mrb[0].mxu0
      %1071 = vmatprep.mubr.f32.mxu0 0.0
      %1072 = vmatmul.mubr.f32.gmra.mrb[0].mxu0 %v794
      %v1073 = vpop.f32.mrb[0].mxu0
      %v1074 = vadd.f32 %v944, %v1073
      %v1075 = vpop.f32.mrb[0].mxu0
      %1076 = vmatprep.mubr.f32.mxu0 0.0
      %1077 = vmatmul.mubr.f32.gmra.mrb[0].mxu0 %v795
      %v1078 = vpop.f32.mrb[0].mxu0
      %v1079 = vadd.f32 %v949, %v1078
      %v1080 = vpop.f32.mrb[0].mxu0
      %1081 = vmatprep.mubr.f32.mxu0 0.0
      %1082 = vmatmul.mubr.f32.gmra.mrb[0].mxu0 %v796
      %v1083 = vpop.f32.mrb[0].mxu0
      %v1084 = vadd.f32 %v954, %v1083
      %v1085 = vpop.f32.mrb[0].mxu0
      %1086 = vmatprep.mubr.f32.mxu0 0.0
      %1087 = vmatmul.mubr.f32.gmra.mrb[0].mxu0 %v797
      %v1088 = vpop.f32.mrb[0].mxu0
      %v1089 = vadd.f32 %v959, %v1088
      %v1090 = vpop.f32.mrb[0].mxu0
      %1091 = vmatprep.mubr.f32.mxu0 0.0
      %1092 = vmatmul.mubr.f32.gmra.mrb[0].mxu0 %v798
      %v1093 = vpop.f32.mrb[0].mxu0
      %v1094 = vadd.f32 %v964, %v1093
      %v1095 = vpop.f32.mrb[0].mxu0
      %1096 = vmatprep.mubr.f32.mxu0 0.0
      %1097 = vmatmul.mubr.f32.gmra.mrb[0].mxu0 %v799
      %v1098 = vpop.f32.mrb[0].mxu0
      %v1099 = vadd.f32 %v969, %v1098
      %v1100 = vpop.f32.mrb[0].mxu0
      %1101 = vmatprep.mubr.f32.mxu0 0.0
      %1102 = vmatmul.mubr.f32.gmra.mrb[0].mxu0 %v800
      %v1103 = vpop.f32.mrb[0].mxu0
      %v1104 = vadd.f32 %v974, %v1103
      %v1105 = vpop.f32.mrb[0].mxu0
      %1106 = vdwg.mxu0
      %v1107 = vld [vmem:[#allocation2 + $0x7] sm:$0xff]
      %v1108 = vld [vmem:[#allocation2 + $0xf] sm:$0xff]
      %v1109 = vld [vmem:[#allocation2 + $0x17] sm:$0xff]
      %v1110 = vld [vmem:[#allocation2 + $0x1f] sm:$0xff]
      %v1111 = vld [vmem:[#allocation2 + $0x27] sm:$0xff]
      %v1112 = vld [vmem:[#allocation2 + $0x2f] sm:$0xff]
      %v1113 = vld [vmem:[#allocation2 + $0x37] sm:$0xff]
      %v1114 = vld [vmem:[#allocation2 + $0x3f] sm:$0xff]
      %v1115 = vld [vmem:[#allocation2 + $0x47] sm:$0xff]
      %v1116 = vld [vmem:[#allocation2 + $0x4f] sm:$0xff]
      %v1117 = vld [vmem:[#allocation2 + $0x57] sm:$0xff]
      %v1118 = vld [vmem:[#allocation2 + $0x5f] sm:$0xff]
      %v1119 = vld [vmem:[#allocation2 + $0x67] sm:$0xf]
      %s1120 = scalar_lea.vmem %s4, 256
      %v1121 = vld [vmem:[%s1120] sm:$0xff]
      %v1122 = vld [vmem:[%s1120 + $0x8] sm:$0xff]
      %v1123 = vld [vmem:[%s1120 + $0x10] sm:$0xff]
      %v1124 = vld [vmem:[%s1120 + $0x18] sm:$0xff]
      %v1125 = vld [vmem:[%s1120 + $0x20] sm:$0xff]
      %v1126 = vld [vmem:[%s1120 + $0x28] sm:$0xff]
      %v1127 = vld [vmem:[%s1120 + $0x30] sm:$0xff]
      %v1128 = vld [vmem:[%s1120 + $0x38] sm:$0xff]
      %v1129 = vld [vmem:[%s1120 + $0x40] sm:$0xff]
      %v1130 = vld [vmem:[%s1120 + $0x48] sm:$0xff]
      %v1131 = vld [vmem:[%s1120 + $0x50] sm:$0xff]
      %v1132 = vld [vmem:[%s1120 + $0x58] sm:$0xff]
      %v1133 = vld [vmem:[%s1120 + $0x60] sm:$0xff]
      %v1134 = vld [vmem:[%s1120 + $0x68] sm:$0xff]
      %v1135 = vld [vmem:[%s1120 + $0x70] sm:$0xff]
      %v1136 = vld [vmem:[%s1120 + $0x78] sm:$0xff]
      %1137 = vmatprep.subr.mxu0 0.0
      %1138 = vmatpush1.msra.mxu0 %v1121
      %1139 = vmatprep.subr.mxu0 0.0
      %1140 = vmatpush1.msra.mxu0 %v1122
      %1141 = vmatprep.subr.mxu0 0.0
      %1142 = vmatpush1.msra.mxu0 %v1123
      %1143 = vmatprep.subr.mxu0 0.0
      %1144 = vmatpush1.msra.mxu0 %v1124
      %1145 = vmatprep.subr.mxu0 0.0
      %1146 = vmatpush1.msra.mxu0 %v1125
      %1147 = vmatprep.subr.mxu0 0.0
      %1148 = vmatpush1.msra.mxu0 %v1126
      %1149 = vmatprep.subr.mxu0 0.0
      %1150 = vmatpush1.msra.mxu0 %v1127
      %1151 = vmatprep.subr.mxu0 0.0
      %1152 = vmatpush1.msra.mxu0 %v1128
      %1153 = vmatprep.subr.mxu0 0.0
      %1154 = vmatpush1.msra.mxu0 %v1129
      %1155 = vmatprep.subr.mxu0 0.0
      %1156 = vmatpush1.msra.mxu0 %v1130
      %1157 = vmatprep.subr.mxu0 0.0
      %1158 = vmatpush1.msra.mxu0 %v1131
      %1159 = vmatprep.subr.mxu0 0.0
      %1160 = vmatpush1.msra.mxu0 %v1132
      %1161 = vmatprep.subr.mxu0 0.0
      %1162 = vmatpush1.msra.mxu0 %v1133
      %1163 = vmatprep.subr.mxu0 0.0
      %1164 = vmatpush1.msra.mxu0 %v1134
      %1165 = vmatprep.subr.mxu0 0.0
      %1166 = vmatpush1.msra.mxu0 %v1135
      %1167 = vmatprep.subr.mxu0 0.0
      %1168 = vmatpush1.msra.mxu0 %v1136
      %1169 = vmatprep.subr.mxu0 0.0
      %1170 = vmatpush1.msra.mxu0 0.0
      %1171 = vmatprep.subr.mxu0 0.0
      %1172 = vmatpush1.msra.mxu0 0.0
      %1173 = vmatprep.subr.mxu0 0.0
      %1174 = vmatpush1.msra.mxu0 0.0
      %1175 = vmatprep.subr.mxu0 0.0
      %1176 = vmatpush1.msra.mxu0 0.0
      %1177 = vmatprep.subr.mxu0 0.0
      %1178 = vmatpush1.msra.mxu0 0.0
      %1179 = vmatprep.subr.mxu0 0.0
      %1180 = vmatpush1.msra.mxu0 0.0
      %1181 = vmatprep.subr.mxu0 0.0
      %1182 = vmatpush1.msra.mxu0 0.0
      %1183 = vmatprep.subr.mxu0 0.0
      %1184 = vmatpush1.msra.mxu0 0.0
      %1185 = vmatprep.subr.mxu0 0.0
      %1186 = vmatpush1.msra.mxu0 0.0
      %1187 = vmatprep.subr.mxu0 0.0
      %1188 = vmatpush1.msra.mxu0 0.0
      %1189 = vmatprep.subr.mxu0 0.0
      %1190 = vmatpush1.msra.mxu0 0.0
      %1191 = vmatprep.subr.mxu0 0.0
      %1192 = vmatpush1.msra.mxu0 0.0
      %1193 = vmatprep.subr.mxu0 0.0
      %1194 = vmatpush1.msra.mxu0 0.0
      %1195 = vmatprep.subr.mxu0 0.0
      %1196 = vmatpush1.msra.mxu0 0.0
      %1197 = vmatprep.subr.mxu0 0.0
      %1198 = vmatpush1.msra.mxu0 0.0
      %1199 = vmatprep.subr.mxu0 0.0
      %1200 = vmatpush1.msra.mxu0 0.0
      %1201 = vmatprep.mubr.f32.mxu0 0.0
      %1202 = vmatmul.mubr.f32.gmra.mrb[0].mxu0 %v1107
      %v1203 = vpop.f32.mrb[0].mxu0
      %v1204 = vadd.f32 0.0, %v1203
      %v1205 = vpop.f32.mrb[0].mxu0
      %1206 = vmatprep.mubr.f32.mxu0 0.0
      %1207 = vmatmul.mubr.f32.gmra.mrb[0].mxu0 %v1108
      %v1208 = vpop.f32.mrb[0].mxu0
      %v1209 = vadd.f32 0.0, %v1208
      %v1210 = vpop.f32.mrb[0].mxu0
      %1211 = vmatprep.mubr.f32.mxu0 0.0
      %1212 = vmatmul.mubr.f32.gmra.mrb[0].mxu0 %v1109
      %v1213 = vpop.f32.mrb[0].mxu0
      %v1214 = vadd.f32 0.0, %v1213
      %v1215 = vpop.f32.mrb[0].mxu0
      %1216 = vmatprep.mubr.f32.mxu0 0.0
      %1217 = vmatmul.mubr.f32.gmra.mrb[0].mxu0 %v1110
      %v1218 = vpop.f32.mrb[0].mxu0
      %v1219 = vadd.f32 0.0, %v1218
      %v1220 = vpop.f32.mrb[0].mxu0
      %1221 = vmatprep.mubr.f32.mxu0 0.0
      %1222 = vmatmul.mubr.f32.gmra.mrb[0].mxu0 %v1111
      %v1223 = vpop.f32.mrb[0].mxu0
      %v1224 = vadd.f32 0.0, %v1223
      %v1225 = vpop.f32.mrb[0].mxu0
      %1226 = vmatprep.mubr.f32.mxu0 0.0
      %1227 = vmatmul.mubr.f32.gmra.mrb[0].mxu0 %v1112
      %v1228 = vpop.f32.mrb[0].mxu0
      %v1229 = vadd.f32 0.0, %v1228
      %v1230 = vpop.f32.mrb[0].mxu0
      %1231 = vmatprep.mubr.f32.mxu0 0.0
      %1232 = vmatmul.mubr.f32.gmra.mrb[0].mxu0 %v1113
      %v1233 = vpop.f32.mrb[0].mxu0
      %v1234 = vadd.f32 0.0, %v1233
      %v1235 = vpop.f32.mrb[0].mxu0
      %1236 = vmatprep.mubr.f32.mxu0 0.0
      %1237 = vmatmul.mubr.f32.gmra.mrb[0].mxu0 %v1114
      %v1238 = vpop.f32.mrb[0].mxu0
      %v1239 = vadd.f32 0.0, %v1238
      %v1240 = vpop.f32.mrb[0].mxu0
      %1241 = vmatprep.mubr.f32.mxu0 0.0
      %1242 = vmatmul.mubr.f32.gmra.mrb[0].mxu0 %v1115
      %v1243 = vpop.f32.mrb[0].mxu0
      %v1244 = vadd.f32 0.0, %v1243
      %v1245 = vpop.f32.mrb[0].mxu0
      %1246 = vmatprep.mubr.f32.mxu0 0.0
      %1247 = vmatmul.mubr.f32.gmra.mrb[0].mxu0 %v1116
      %v1248 = vpop.f32.mrb[0].mxu0
      %v1249 = vadd.f32 0.0, %v1248
      %v1250 = vpop.f32.mrb[0].mxu0
      %1251 = vmatprep.mubr.f32.mxu0 0.0
      %1252 = vmatmul.mubr.f32.gmra.mrb[0].mxu0 %v1117
      %v1253 = vpop.f32.mrb[0].mxu0
      %v1254 = vadd.f32 0.0, %v1253
      %v1255 = vpop.f32.mrb[0].mxu0
      %1256 = vmatprep.mubr.f32.mxu0 0.0
      %1257 = vmatmul.mubr.f32.gmra.mrb[0].mxu0 %v1118
      %v1258 = vpop.f32.mrb[0].mxu0
      %v1259 = vadd.f32 0.0, %v1258
      %v1260 = vpop.f32.mrb[0].mxu0
      %1261 = vmatprep.mubr.f32.mxu0 0.0
      %1262 = vmatmul.mubr.f32.gmra.mrb[0].mxu0 %v1119
      %v1263 = vpop.f32.mrb[0].mxu0
      %v1264 = vadd.f32 0.0, %v1263
      %v1265 = vpop.f32.mrb[0].mxu0
      %1266 = vdwg.mxu0
      %v1267 = vadd.f32 %v1044, %v1204
      %v1268 = vadd.f32 %v1049, %v1209
      %v1269 = vadd.f32 %v1054, %v1214
      %v1270 = vadd.f32 %v1059, %v1219
      %v1271 = vadd.f32 %v1064, %v1224
      %v1272 = vadd.f32 %v1069, %v1229
      %v1273 = vadd.f32 %v1074, %v1234
      %v1274 = vadd.f32 %v1079, %v1239
      %v1275 = vadd.f32 %v1084, %v1244
      %v1276 = vadd.f32 %v1089, %v1249
      %v1277 = vadd.f32 %v1094, %v1254
      %v1278 = vadd.f32 %v1099, %v1259
      %v1279 = vadd.f32 %v1104, %v1264
      %v1280 = vld [vmem:[#allocation2 + $0xf] sm:$0xff]
      %v1281 = vld [vmem:[#allocation2 + $0x17] sm:$0xff]
      %v1282 = vld [vmem:[#allocation2 + $0x1f] sm:$0xff]
      %v1283 = vld [vmem:[#allocation2 + $0x27] sm:$0xff]
      %v1284 = vld [vmem:[#allocation2 + $0x2f] sm:$0xff]
      %v1285 = vld [vmem:[#allocation2 + $0x37] sm:$0xff]
      %v1286 = vld [vmem:[#allocation2 + $0x3f] sm:$0xff]
      %v1287 = vld [vmem:[#allocation2 + $0x47] sm:$0xff]
      %v1288 = vld [vmem:[#allocation2 + $0x4f] sm:$0xff]
      %v1289 = vld [vmem:[#allocation2 + $0x57] sm:$0xff]
      %v1290 = vld [vmem:[#allocation2 + $0x5f] sm:$0xff]
      %v1291 = vld [vmem:[#allocation2 + $0x67] sm:$0xff]
      %v1292 = vld [vmem:[#allocation2 + $0x6f] sm:$0xf]
      %s1293 = scalar_lea.vmem %s4, 384
      %v1294 = vld [vmem:[%s1293] sm:$0xff]
      %v1295 = vld [vmem:[%s1293 + $0x8] sm:$0xff]
      %v1296 = vld [vmem:[%s1293 + $0x10] sm:$0xff]
      %v1297 = vld [vmem:[%s1293 + $0x18] sm:$0xff]
      %v1298 = vld [vmem:[%s1293 + $0x20] sm:$0xff]
      %v1299 = vld [vmem:[%s1293 + $0x28] sm:$0xff]
      %v1300 = vld [vmem:[%s1293 + $0x30] sm:$0xff]
      %v1301 = vld [vmem:[%s1293 + $0x38] sm:$0xff]
      %v1302 = vld [vmem:[%s1293 + $0x40] sm:$0xff]
      %v1303 = vld [vmem:[%s1293 + $0x48] sm:$0xff]
      %v1304 = vld [vmem:[%s1293 + $0x50] sm:$0xff]
      %v1305 = vld [vmem:[%s1293 + $0x58] sm:$0xff]
      %v1306 = vld [vmem:[%s1293 + $0x60] sm:$0xff]
      %v1307 = vld [vmem:[%s1293 + $0x68] sm:$0xff]
      %v1308 = vld [vmem:[%s1293 + $0x70] sm:$0xff]
      %v1309 = vld [vmem:[%s1293 + $0x78] sm:$0xff]
      %1310 = vmatprep.subr.mxu0 0.0
      %1311 = vmatpush1.msra.mxu0 %v1294
      %1312 = vmatprep.subr.mxu0 0.0
      %1313 = vmatpush1.msra.mxu0 %v1295
      %1314 = vmatprep.subr.mxu0 0.0
      %1315 = vmatpush1.msra.mxu0 %v1296
      %1316 = vmatprep.subr.mxu0 0.0
      %1317 = vmatpush1.msra.mxu0 %v1297
      %1318 = vmatprep.subr.mxu0 0.0
      %1319 = vmatpush1.msra.mxu0 %v1298
      %1320 = vmatprep.subr.mxu0 0.0
      %1321 = vmatpush1.msra.mxu0 %v1299
      %1322 = vmatprep.subr.mxu0 0.0
      %1323 = vmatpush1.msra.mxu0 %v1300
      %1324 = vmatprep.subr.mxu0 0.0
      %1325 = vmatpush1.msra.mxu0 %v1301
      %1326 = vmatprep.subr.mxu0 0.0
      %1327 = vmatpush1.msra.mxu0 %v1302
      %1328 = vmatprep.subr.mxu0 0.0
      %1329 = vmatpush1.msra.mxu0 %v1303
      %1330 = vmatprep.subr.mxu0 0.0
      %1331 = vmatpush1.msra.mxu0 %v1304
      %1332 = vmatprep.subr.mxu0 0.0
      %1333 = vmatpush1.msra.mxu0 %v1305
      %1334 = vmatprep.subr.mxu0 0.0
      %1335 = vmatpush1.msra.mxu0 %v1306
      %1336 = vmatprep.subr.mxu0 0.0
      %1337 = vmatpush1.msra.mxu0 %v1307
      %1338 = vmatprep.subr.mxu0 0.0
      %1339 = vmatpush1.msra.mxu0 %v1308
      %1340 = vmatprep.subr.mxu0 0.0
      %1341 = vmatpush1.msra.mxu0 %v1309
      %1342 = vmatprep.subr.mxu0 0.0
      %1343 = vmatpush1.msra.mxu0 0.0
      %1344 = vmatprep.subr.mxu0 0.0
      %1345 = vmatpush1.msra.mxu0 0.0
      %1346 = vmatprep.subr.mxu0 0.0
      %1347 = vmatpush1.msra.mxu0 0.0
      %1348 = vmatprep.subr.mxu0 0.0
      %1349 = vmatpush1.msra.mxu0 0.0
      %1350 = vmatprep.subr.mxu0 0.0
      %1351 = vmatpush1.msra.mxu0 0.0
      %1352 = vmatprep.subr.mxu0 0.0
      %1353 = vmatpush1.msra.mxu0 0.0
      %1354 = vmatprep.subr.mxu0 0.0
      %1355 = vmatpush1.msra.mxu0 0.0
      %1356 = vmatprep.subr.mxu0 0.0
      %1357 = vmatpush1.msra.mxu0 0.0
      %1358 = vmatprep.subr.mxu0 0.0
      %1359 = vmatpush1.msra.mxu0 0.0
      %1360 = vmatprep.subr.mxu0 0.0
      %1361 = vmatpush1.msra.mxu0 0.0
      %1362 = vmatprep.subr.mxu0 0.0
      %1363 = vmatpush1.msra.mxu0 0.0
      %1364 = vmatprep.subr.mxu0 0.0
      %1365 = vmatpush1.msra.mxu0 0.0
      %1366 = vmatprep.subr.mxu0 0.0
      %1367 = vmatpush1.msra.mxu0 0.0
      %1368 = vmatprep.subr.mxu0 0.0
      %1369 = vmatpush1.msra.mxu0 0.0
      %1370 = vmatprep.subr.mxu0 0.0
      %1371 = vmatpush1.msra.mxu0 0.0
      %1372 = vmatprep.subr.mxu0 0.0
      %1373 = vmatpush1.msra.mxu0 0.0
      %1374 = vmatprep.mubr.f32.mxu0 0.0
      %1375 = vmatmul.mubr.f32.gmra.mrb[0].mxu0 %v1280
      %v1376 = vpop.f32.mrb[0].mxu0
      %v1377 = vadd.f32 0.0, %v1376
      %v1378 = vpop.f32.mrb[0].mxu0
      %1379 = vmatprep.mubr.f32.mxu0 0.0
      %1380 = vmatmul.mubr.f32.gmra.mrb[0].mxu0 %v1281
      %v1381 = vpop.f32.mrb[0].mxu0
      %v1382 = vadd.f32 0.0, %v1381
      %v1383 = vpop.f32.mrb[0].mxu0
      %1384 = vmatprep.mubr.f32.mxu0 0.0
      %1385 = vmatmul.mubr.f32.gmra.mrb[0].mxu0 %v1282
      %v1386 = vpop.f32.mrb[0].mxu0
      %v1387 = vadd.f32 0.0, %v1386
      %v1388 = vpop.f32.mrb[0].mxu0
      %1389 = vmatprep.mubr.f32.mxu0 0.0
      %1390 = vmatmul.mubr.f32.gmra.mrb[0].mxu0 %v1283
      %v1391 = vpop.f32.mrb[0].mxu0
      %v1392 = vadd.f32 0.0, %v1391
      %v1393 = vpop.f32.mrb[0].mxu0
      %1394 = vmatprep.mubr.f32.mxu0 0.0
      %1395 = vmatmul.mubr.f32.gmra.mrb[0].mxu0 %v1284
      %v1396 = vpop.f32.mrb[0].mxu0
      %v1397 = vadd.f32 0.0, %v1396
      %v1398 = vpop.f32.mrb[0].mxu0
      %1399 = vmatprep.mubr.f32.mxu0 0.0
      %1400 = vmatmul.mubr.f32.gmra.mrb[0].mxu0 %v1285
      %v1401 = vpop.f32.mrb[0].mxu0
      %v1402 = vadd.f32 0.0, %v1401
      %v1403 = vpop.f32.mrb[0].mxu0
      %1404 = vmatprep.mubr.f32.mxu0 0.0
      %1405 = vmatmul.mubr.f32.gmra.mrb[0].mxu0 %v1286
      %v1406 = vpop.f32.mrb[0].mxu0
      %v1407 = vadd.f32 0.0, %v1406
      %v1408 = vpop.f32.mrb[0].mxu0
      %1409 = vmatprep.mubr.f32.mxu0 0.0
      %1410 = vmatmul.mubr.f32.gmra.mrb[0].mxu0 %v1287
      %v1411 = vpop.f32.mrb[0].mxu0
      %v1412 = vadd.f32 0.0, %v1411
      %v1413 = vpop.f32.mrb[0].mxu0
      %1414 = vmatprep.mubr.f32.mxu0 0.0
      %1415 = vmatmul.mubr.f32.gmra.mrb[0].mxu0 %v1288
      %v1416 = vpop.f32.mrb[0].mxu0
      %v1417 = vadd.f32 0.0, %v1416
      %v1418 = vpop.f32.mrb[0].mxu0
      %1419 = vmatprep.mubr.f32.mxu0 0.0
      %1420 = vmatmul.mubr.f32.gmra.mrb[0].mxu0 %v1289
      %v1421 = vpop.f32.mrb[0].mxu0
      %v1422 = vadd.f32 0.0, %v1421
      %v1423 = vpop.f32.mrb[0].mxu0
      %1424 = vmatprep.mubr.f32.mxu0 0.0
      %1425 = vmatmul.mubr.f32.gmra.mrb[0].mxu0 %v1290
      %v1426 = vpop.f32.mrb[0].mxu0
      %v1427 = vadd.f32 0.0, %v1426
      %v1428 = vpop.f32.mrb[0].mxu0
      %1429 = vmatprep.mubr.f32.mxu0 0.0
      %1430 = vmatmul.mubr.f32.gmra.mrb[0].mxu0 %v1291
      %v1431 = vpop.f32.mrb[0].mxu0
      %v1432 = vadd.f32 0.0, %v1431
      %v1433 = vpop.f32.mrb[0].mxu0
      %1434 = vmatprep.mubr.f32.mxu0 0.0
      %1435 = vmatmul.mubr.f32.gmra.mrb[0].mxu0 %v1292
      %v1436 = vpop.f32.mrb[0].mxu0
      %v1437 = vadd.f32 0.0, %v1436
      %v1438 = vpop.f32.mrb[0].mxu0
      %1439 = vdwg.mxu0
      %v1440 = vadd.f32 %v1267, %v1377
      %v1441 = vadd.f32 %v1268, %v1382
      %v1442 = vadd.f32 %v1269, %v1387
      %v1443 = vadd.f32 %v1270, %v1392
      %v1444 = vadd.f32 %v1271, %v1397
      %v1445 = vadd.f32 %v1272, %v1402
      %v1446 = vadd.f32 %v1273, %v1407
      %v1447 = vadd.f32 %v1274, %v1412
      %v1448 = vadd.f32 %v1275, %v1417
      %v1449 = vadd.f32 %v1276, %v1422
      %v1450 = vadd.f32 %v1277, %v1427
      %v1451 = vadd.f32 %v1278, %v1432
      %v1452 = vadd.f32 %v1279, %v1437
      %v1453 = vld [vmem:[#allocation2 + $0x10] sm:$0xff]
      %v1454 = vld [vmem:[#allocation2 + $0x18] sm:$0xff]
      %v1455 = vld [vmem:[#allocation2 + $0x20] sm:$0xff]
      %v1456 = vld [vmem:[#allocation2 + $0x28] sm:$0xff]
      %v1457 = vld [vmem:[#allocation2 + $0x30] sm:$0xff]
      %v1458 = vld [vmem:[#allocation2 + $0x38] sm:$0xff]
      %v1459 = vld [vmem:[#allocation2 + $0x40] sm:$0xff]
      %v1460 = vld [vmem:[#allocation2 + $0x48] sm:$0xff]
      %v1461 = vld [vmem:[#allocation2 + $0x50] sm:$0xff]
      %v1462 = vld [vmem:[#allocation2 + $0x58] sm:$0xff]
      %v1463 = vld [vmem:[#allocation2 + $0x60] sm:$0xff]
      %v1464 = vld [vmem:[#allocation2 + $0x68] sm:$0xff]
      %v1465 = vld [vmem:[#allocation2 + $0x70] sm:$0xf]
      %s1466 = scalar_lea.vmem %s4, 512
      %v1467 = vld [vmem:[%s1466] sm:$0xff]
      %v1468 = vld [vmem:[%s1466 + $0x8] sm:$0xff]
      %v1469 = vld [vmem:[%s1466 + $0x10] sm:$0xff]
      %v1470 = vld [vmem:[%s1466 + $0x18] sm:$0xff]
      %v1471 = vld [vmem:[%s1466 + $0x20] sm:$0xff]
      %v1472 = vld [vmem:[%s1466 + $0x28] sm:$0xff]
      %v1473 = vld [vmem:[%s1466 + $0x30] sm:$0xff]
      %v1474 = vld [vmem:[%s1466 + $0x38] sm:$0xff]
      %v1475 = vld [vmem:[%s1466 + $0x40] sm:$0xff]
      %v1476 = vld [vmem:[%s1466 + $0x48] sm:$0xff]
      %v1477 = vld [vmem:[%s1466 + $0x50] sm:$0xff]
      %v1478 = vld [vmem:[%s1466 + $0x58] sm:$0xff]
      %v1479 = vld [vmem:[%s1466 + $0x60] sm:$0xff]
      %v1480 = vld [vmem:[%s1466 + $0x68] sm:$0xff]
      %v1481 = vld [vmem:[%s1466 + $0x70] sm:$0xff]
      %v1482 = vld [vmem:[%s1466 + $0x78] sm:$0xff]
      %1483 = vmatprep.subr.mxu0 0.0
      %1484 = vmatpush1.msra.mxu0 %v1467
      %1485 = vmatprep.subr.mxu0 0.0
      %1486 = vmatpush1.msra.mxu0 %v1468
      %1487 = vmatprep.subr.mxu0 0.0
      %1488 = vmatpush1.msra.mxu0 %v1469
      %1489 = vmatprep.subr.mxu0 0.0
      %1490 = vmatpush1.msra.mxu0 %v1470
      %1491 = vmatprep.subr.mxu0 0.0
      %1492 = vmatpush1.msra.mxu0 %v1471
      %1493 = vmatprep.subr.mxu0 0.0
      %1494 = vmatpush1.msra.mxu0 %v1472
      %1495 = vmatprep.subr.mxu0 0.0
      %1496 = vmatpush1.msra.mxu0 %v1473
      %1497 = vmatprep.subr.mxu0 0.0
      %1498 = vmatpush1.msra.mxu0 %v1474
      %1499 = vmatprep.subr.mxu0 0.0
      %1500 = vmatpush1.msra.mxu0 %v1475
      %1501 = vmatprep.subr.mxu0 0.0
      %1502 = vmatpush1.msra.mxu0 %v1476
      %1503 = vmatprep.subr.mxu0 0.0
      %1504 = vmatpush1.msra.mxu0 %v1477
      %1505 = vmatprep.subr.mxu0 0.0
      %1506 = vmatpush1.msra.mxu0 %v1478
      %1507 = vmatprep.subr.mxu0 0.0
      %1508 = vmatpush1.msra.mxu0 %v1479
      %1509 = vmatprep.subr.mxu0 0.0
      %1510 = vmatpush1.msra.mxu0 %v1480
      %1511 = vmatprep.subr.mxu0 0.0
      %1512 = vmatpush1.msra.mxu0 %v1481
      %1513 = vmatprep.subr.mxu0 0.0
      %1514 = vmatpush1.msra.mxu0 %v1482
      %1515 = vmatprep.subr.mxu0 0.0
      %1516 = vmatpush1.msra.mxu0 0.0
      %1517 = vmatprep.subr.mxu0 0.0
      %1518 = vmatpush1.msra.mxu0 0.0
      %1519 = vmatprep.subr.mxu0 0.0
      %1520 = vmatpush1.msra.mxu0 0.0
      %1521 = vmatprep.subr.mxu0 0.0
      %1522 = vmatpush1.msra.mxu0 0.0
      %1523 = vmatprep.subr.mxu0 0.0
      %1524 = vmatpush1.msra.mxu0 0.0
      %1525 = vmatprep.subr.mxu0 0.0
      %1526 = vmatpush1.msra.mxu0 0.0
      %1527 = vmatprep.subr.mxu0 0.0
      %1528 = vmatpush1.msra.mxu0 0.0
      %1529 = vmatprep.subr.mxu0 0.0
      %1530 = vmatpush1.msra.mxu0 0.0
      %1531 = vmatprep.subr.mxu0 0.0
      %1532 = vmatpush1.msra.mxu0 0.0
      %1533 = vmatprep.subr.mxu0 0.0
      %1534 = vmatpush1.msra.mxu0 0.0
      %1535 = vmatprep.subr.mxu0 0.0
      %1536 = vmatpush1.msra.mxu0 0.0
      %1537 = vmatprep.subr.mxu0 0.0
      %1538 = vmatpush1.msra.mxu0 0.0
      %1539 = vmatprep.subr.mxu0 0.0
      %1540 = vmatpush1.msra.mxu0 0.0
      %1541 = vmatprep.subr.mxu0 0.0
      %1542 = vmatpush1.msra.mxu0 0.0
      %1543 = vmatprep.subr.mxu0 0.0
      %1544 = vmatpush1.msra.mxu0 0.0
      %1545 = vmatprep.subr.mxu0 0.0
      %1546 = vmatpush1.msra.mxu0 0.0
      %1547 = vmatprep.mubr.f32.mxu0 0.0
      %1548 = vmatmul.mubr.f32.gmra.mrb[0].mxu0 %v1453
      %v1549 = vpop.f32.mrb[0].mxu0
      %v1550 = vadd.f32 0.0, %v1549
      %v1551 = vpop.f32.mrb[0].mxu0
      %1552 = vmatprep.mubr.f32.mxu0 0.0
      %1553 = vmatmul.mubr.f32.gmra.mrb[0].mxu0 %v1454
      %v1554 = vpop.f32.mrb[0].mxu0
      %v1555 = vadd.f32 0.0, %v1554
      %v1556 = vpop.f32.mrb[0].mxu0
      %1557 = vmatprep.mubr.f32.mxu0 0.0
      %1558 = vmatmul.mubr.f32.gmra.mrb[0].mxu0 %v1455
      %v1559 = vpop.f32.mrb[0].mxu0
      %v1560 = vadd.f32 0.0, %v1559
      %v1561 = vpop.f32.mrb[0].mxu0
      %1562 = vmatprep.mubr.f32.mxu0 0.0
      %1563 = vmatmul.mubr.f32.gmra.mrb[0].mxu0 %v1456
      %v1564 = vpop.f32.mrb[0].mxu0
      %v1565 = vadd.f32 0.0, %v1564
      %v1566 = vpop.f32.mrb[0].mxu0
      %1567 = vmatprep.mubr.f32.mxu0 0.0
      %1568 = vmatmul.mubr.f32.gmra.mrb[0].mxu0 %v1457
      %v1569 = vpop.f32.mrb[0].mxu0
      %v1570 = vadd.f32 0.0, %v1569
      %v1571 = vpop.f32.mrb[0].mxu0
      %1572 = vmatprep.mubr.f32.mxu0 0.0
      %1573 = vmatmul.mubr.f32.gmra.mrb[0].mxu0 %v1458
      %v1574 = vpop.f32.mrb[0].mxu0
      %v1575 = vadd.f32 0.0, %v1574
      %v1576 = vpop.f32.mrb[0].mxu0
      %1577 = vmatprep.mubr.f32.mxu0 0.0
      %1578 = vmatmul.mubr.f32.gmra.mrb[0].mxu0 %v1459
      %v1579 = vpop.f32.mrb[0].mxu0
      %v1580 = vadd.f32 0.0, %v1579
      %v1581 = vpop.f32.mrb[0].mxu0
      %1582 = vmatprep.mubr.f32.mxu0 0.0
      %1583 = vmatmul.mubr.f32.gmra.mrb[0].mxu0 %v1460
      %v1584 = vpop.f32.mrb[0].mxu0
      %v1585 = vadd.f32 0.0, %v1584
      %v1586 = vpop.f32.mrb[0].mxu0
      %1587 = vmatprep.mubr.f32.mxu0 0.0
      %1588 = vmatmul.mubr.f32.gmra.mrb[0].mxu0 %v1461
      %v1589 = vpop.f32.mrb[0].mxu0
      %v1590 = vadd.f32 0.0, %v1589
      %v1591 = vpop.f32.mrb[0].mxu0
      %1592 = vmatprep.mubr.f32.mxu0 0.0
      %1593 = vmatmul.mubr.f32.gmra.mrb[0].mxu0 %v1462
      %v1594 = vpop.f32.mrb[0].mxu0
      %v1595 = vadd.f32 0.0, %v1594
      %v1596 = vpop.f32.mrb[0].mxu0
      %1597 = vmatprep.mubr.f32.mxu0 0.0
      %1598 = vmatmul.mubr.f32.gmra.mrb[0].mxu0 %v1463
      %v1599 = vpop.f32.mrb[0].mxu0
      %v1600 = vadd.f32 0.0, %v1599
      %v1601 = vpop.f32.mrb[0].mxu0
      %1602 = vmatprep.mubr.f32.mxu0 0.0
      %1603 = vmatmul.mubr.f32.gmra.mrb[0].mxu0 %v1464
      %v1604 = vpop.f32.mrb[0].mxu0
      %v1605 = vadd.f32 0.0, %v1604
      %v1606 = vpop.f32.mrb[0].mxu0
      %1607 = vmatprep.mubr.f32.mxu0 0.0
      %1608 = vmatmul.mubr.f32.gmra.mrb[0].mxu0 %v1465
      %v1609 = vpop.f32.mrb[0].mxu0
      %v1610 = vadd.f32 0.0, %v1609
      %v1611 = vpop.f32.mrb[0].mxu0
      %1612 = vdwg.mxu0
      %v1613 = vadd.f32 %v1440, %v1550
      %v1614 = vadd.f32 %v1441, %v1555
      %v1615 = vadd.f32 %v1442, %v1560
      %v1616 = vadd.f32 %v1443, %v1565
      %v1617 = vadd.f32 %v1444, %v1570
      %v1618 = vadd.f32 %v1445, %v1575
      %v1619 = vadd.f32 %v1446, %v1580
      %v1620 = vadd.f32 %v1447, %v1585
      %v1621 = vadd.f32 %v1448, %v1590
      %v1622 = vadd.f32 %v1449, %v1595
      %v1623 = vadd.f32 %v1450, %v1600
      %v1624 = vadd.f32 %v1451, %v1605
      %v1625 = vadd.f32 %v1452, %v1610
      %v1626 = vld [vmem:[#allocation2 + $0x11] sm:$0xff]
      %v1627 = vld [vmem:[#allocation2 + $0x19] sm:$0xff]
      %v1628 = vld [vmem:[#allocation2 + $0x21] sm:$0xff]
      %v1629 = vld [vmem:[#allocation2 + $0x29] sm:$0xff]
      %v1630 = vld [vmem:[#allocation2 + $0x31] sm:$0xff]
      %v1631 = vld [vmem:[#allocation2 + $0x39] sm:$0xff]
      %v1632 = vld [vmem:[#allocation2 + $0x41] sm:$0xff]
      %v1633 = vld [vmem:[#allocation2 + $0x49] sm:$0xff]
      %v1634 = vld [vmem:[#allocation2 + $0x51] sm:$0xff]
      %v1635 = vld [vmem:[#allocation2 + $0x59] sm:$0xff]
      %v1636 = vld [vmem:[#allocation2 + $0x61] sm:$0xff]
      %v1637 = vld [vmem:[#allocation2 + $0x69] sm:$0xff]
      %v1638 = vld [vmem:[#allocation2 + $0x71] sm:$0xf]
      %s1639 = scalar_lea.vmem %s4, 640
      %v1640 = vld [vmem:[%s1639] sm:$0xff]
      %v1641 = vld [vmem:[%s1639 + $0x8] sm:$0xff]
      %v1642 = vld [vmem:[%s1639 + $0x10] sm:$0xff]
      %v1643 = vld [vmem:[%s1639 + $0x18] sm:$0xff]
      %v1644 = vld [vmem:[%s1639 + $0x20] sm:$0xff]
      %v1645 = vld [vmem:[%s1639 + $0x28] sm:$0xff]
      %v1646 = vld [vmem:[%s1639 + $0x30] sm:$0xff]
      %v1647 = vld [vmem:[%s1639 + $0x38] sm:$0xff]
      %v1648 = vld [vmem:[%s1639 + $0x40] sm:$0xff]
      %v1649 = vld [vmem:[%s1639 + $0x48] sm:$0xff]
      %v1650 = vld [vmem:[%s1639 + $0x50] sm:$0xff]
      %v1651 = vld [vmem:[%s1639 + $0x58] sm:$0xff]
      %v1652 = vld [vmem:[%s1639 + $0x60] sm:$0xff]
      %v1653 = vld [vmem:[%s1639 + $0x68] sm:$0xff]
      %v1654 = vld [vmem:[%s1639 + $0x70] sm:$0xff]
      %v1655 = vld [vmem:[%s1639 + $0x78] sm:$0xff]
      %1656 = vmatprep.subr.mxu0 0.0
      %1657 = vmatpush1.msra.mxu0 %v1640
      %1658 = vmatprep.subr.mxu0 0.0
      %1659 = vmatpush1.msra.mxu0 %v1641
      %1660 = vmatprep.subr.mxu0 0.0
      %1661 = vmatpush1.msra.mxu0 %v1642
      %1662 = vmatprep.subr.mxu0 0.0
      %1663 = vmatpush1.msra.mxu0 %v1643
      %1664 = vmatprep.subr.mxu0 0.0
      %1665 = vmatpush1.msra.mxu0 %v1644
      %1666 = vmatprep.subr.mxu0 0.0
      %1667 = vmatpush1.msra.mxu0 %v1645
      %1668 = vmatprep.subr.mxu0 0.0
      %1669 = vmatpush1.msra.mxu0 %v1646
      %1670 = vmatprep.subr.mxu0 0.0
      %1671 = vmatpush1.msra.mxu0 %v1647
      %1672 = vmatprep.subr.mxu0 0.0
      %1673 = vmatpush1.msra.mxu0 %v1648
      %1674 = vmatprep.subr.mxu0 0.0
      %1675 = vmatpush1.msra.mxu0 %v1649
      %1676 = vmatprep.subr.mxu0 0.0
      %1677 = vmatpush1.msra.mxu0 %v1650
      %1678 = vmatprep.subr.mxu0 0.0
      %1679 = vmatpush1.msra.mxu0 %v1651
      %1680 = vmatprep.subr.mxu0 0.0
      %1681 = vmatpush1.msra.mxu0 %v1652
      %1682 = vmatprep.subr.mxu0 0.0
      %1683 = vmatpush1.msra.mxu0 %v1653
      %1684 = vmatprep.subr.mxu0 0.0
      %1685 = vmatpush1.msra.mxu0 %v1654
      %1686 = vmatprep.subr.mxu0 0.0
      %1687 = vmatpush1.msra.mxu0 %v1655
      %1688 = vmatprep.subr.mxu0 0.0
      %1689 = vmatpush1.msra.mxu0 0.0
      %1690 = vmatprep.subr.mxu0 0.0
      %1691 = vmatpush1.msra.mxu0 0.0
      %1692 = vmatprep.subr.mxu0 0.0
      %1693 = vmatpush1.msra.mxu0 0.0
      %1694 = vmatprep.subr.mxu0 0.0
      %1695 = vmatpush1.msra.mxu0 0.0
      %1696 = vmatprep.subr.mxu0 0.0
      %1697 = vmatpush1.msra.mxu0 0.0
      %1698 = vmatprep.subr.mxu0 0.0
      %1699 = vmatpush1.msra.mxu0 0.0
      %1700 = vmatprep.subr.mxu0 0.0
      %1701 = vmatpush1.msra.mxu0 0.0
      %1702 = vmatprep.subr.mxu0 0.0
      %1703 = vmatpush1.msra.mxu0 0.0
      %1704 = vmatprep.subr.mxu0 0.0
      %1705 = vmatpush1.msra.mxu0 0.0
      %1706 = vmatprep.subr.mxu0 0.0
      %1707 = vmatpush1.msra.mxu0 0.0
      %1708 = vmatprep.subr.mxu0 0.0
      %1709 = vmatpush1.msra.mxu0 0.0
      %1710 = vmatprep.subr.mxu0 0.0
      %1711 = vmatpush1.msra.mxu0 0.0
      %1712 = vmatprep.subr.mxu0 0.0
      %1713 = vmatpush1.msra.mxu0 0.0
      %1714 = vmatprep.subr.mxu0 0.0
      %1715 = vmatpush1.msra.mxu0 0.0
      %1716 = vmatprep.subr.mxu0 0.0
      %1717 = vmatpush1.msra.mxu0 0.0
      %1718 = vmatprep.subr.mxu0 0.0
      %1719 = vmatpush1.msra.mxu0 0.0
      %1720 = vmatprep.mubr.f32.mxu0 0.0
      %1721 = vmatmul.mubr.f32.gmra.mrb[0].mxu0 %v1626
      %v1722 = vpop.f32.mrb[0].mxu0
      %v1723 = vadd.f32 0.0, %v1722
      %v1724 = vpop.f32.mrb[0].mxu0
      %1725 = vmatprep.mubr.f32.mxu0 0.0
      %1726 = vmatmul.mubr.f32.gmra.mrb[0].mxu0 %v1627
      %v1727 = vpop.f32.mrb[0].mxu0
      %v1728 = vadd.f32 0.0, %v1727
      %v1729 = vpop.f32.mrb[0].mxu0
      %1730 = vmatprep.mubr.f32.mxu0 0.0
      %1731 = vmatmul.mubr.f32.gmra.mrb[0].mxu0 %v1628
      %v1732 = vpop.f32.mrb[0].mxu0
      %v1733 = vadd.f32 0.0, %v1732
      %v1734 = vpop.f32.mrb[0].mxu0
      %1735 = vmatprep.mubr.f32.mxu0 0.0
      %1736 = vmatmul.mubr.f32.gmra.mrb[0].mxu0 %v1629
      %v1737 = vpop.f32.mrb[0].mxu0
      %v1738 = vadd.f32 0.0, %v1737
      %v1739 = vpop.f32.mrb[0].mxu0
      %1740 = vmatprep.mubr.f32.mxu0 0.0
      %1741 = vmatmul.mubr.f32.gmra.mrb[0].mxu0 %v1630
      %v1742 = vpop.f32.mrb[0].mxu0
      %v1743 = vadd.f32 0.0, %v1742
      %v1744 = vpop.f32.mrb[0].mxu0
      %1745 = vmatprep.mubr.f32.mxu0 0.0
      %1746 = vmatmul.mubr.f32.gmra.mrb[0].mxu0 %v1631
      %v1747 = vpop.f32.mrb[0].mxu0
      %v1748 = vadd.f32 0.0, %v1747
      %v1749 = vpop.f32.mrb[0].mxu0
      %1750 = vmatprep.mubr.f32.mxu0 0.0
      %1751 = vmatmul.mubr.f32.gmra.mrb[0].mxu0 %v1632
      %v1752 = vpop.f32.mrb[0].mxu0
      %v1753 = vadd.f32 0.0, %v1752
      %v1754 = vpop.f32.mrb[0].mxu0
      %1755 = vmatprep.mubr.f32.mxu0 0.0
      %1756 = vmatmul.mubr.f32.gmra.mrb[0].mxu0 %v1633
      %v1757 = vpop.f32.mrb[0].mxu0
      %v1758 = vadd.f32 0.0, %v1757
      %v1759 = vpop.f32.mrb[0].mxu0
      %1760 = vmatprep.mubr.f32.mxu0 0.0
      %1761 = vmatmul.mubr.f32.gmra.mrb[0].mxu0 %v1634
      %v1762 = vpop.f32.mrb[0].mxu0
      %v1763 = vadd.f32 0.0, %v1762
      %v1764 = vpop.f32.mrb[0].mxu0
      %1765 = vmatprep.mubr.f32.mxu0 0.0
      %1766 = vmatmul.mubr.f32.gmra.mrb[0].mxu0 %v1635
      %v1767 = vpop.f32.mrb[0].mxu0
      %v1768 = vadd.f32 0.0, %v1767
      %v1769 = vpop.f32.mrb[0].mxu0
      %1770 = vmatprep.mubr.f32.mxu0 0.0
      %1771 = vmatmul.mubr.f32.gmra.mrb[0].mxu0 %v1636
      %v1772 = vpop.f32.mrb[0].mxu0
      %v1773 = vadd.f32 0.0, %v1772
      %v1774 = vpop.f32.mrb[0].mxu0
      %1775 = vmatprep.mubr.f32.mxu0 0.0
      %1776 = vmatmul.mubr.f32.gmra.mrb[0].mxu0 %v1637
      %v1777 = vpop.f32.mrb[0].mxu0
      %v1778 = vadd.f32 0.0, %v1777
      %v1779 = vpop.f32.mrb[0].mxu0
      %1780 = vmatprep.mubr.f32.mxu0 0.0
      %1781 = vmatmul.mubr.f32.gmra.mrb[0].mxu0 %v1638
      %v1782 = vpop.f32.mrb[0].mxu0
      %v1783 = vadd.f32 0.0, %v1782
      %v1784 = vpop.f32.mrb[0].mxu0
      %1785 = vdwg.mxu0
      %v1786 = vadd.f32 %v1613, %v1723
      %v1787 = vadd.f32 %v1614, %v1728
      %v1788 = vadd.f32 %v1615, %v1733
      %v1789 = vadd.f32 %v1616, %v1738
      %v1790 = vadd.f32 %v1617, %v1743
      %v1791 = vadd.f32 %v1618, %v1748
      %v1792 = vadd.f32 %v1619, %v1753
      %v1793 = vadd.f32 %v1620, %v1758
      %v1794 = vadd.f32 %v1621, %v1763
      %v1795 = vadd.f32 %v1622, %v1768
      %v1796 = vadd.f32 %v1623, %v1773
      %v1797 = vadd.f32 %v1624, %v1778
      %v1798 = vadd.f32 %v1625, %v1783
      %v1799 = vld [vmem:[#allocation2 + $0x19] sm:$0xff]
      %v1800 = vld [vmem:[#allocation2 + $0x21] sm:$0xff]
      %v1801 = vld [vmem:[#allocation2 + $0x29] sm:$0xff]
      %v1802 = vld [vmem:[#allocation2 + $0x31] sm:$0xff]
      %v1803 = vld [vmem:[#allocation2 + $0x39] sm:$0xff]
      %v1804 = vld [vmem:[#allocation2 + $0x41] sm:$0xff]
      %v1805 = vld [vmem:[#allocation2 + $0x49] sm:$0xff]
      %v1806 = vld [vmem:[#allocation2 + $0x51] sm:$0xff]
      %v1807 = vld [vmem:[#allocation2 + $0x59] sm:$0xff]
      %v1808 = vld [vmem:[#allocation2 + $0x61] sm:$0xff]
      %v1809 = vld [vmem:[#allocation2 + $0x69] sm:$0xff]
      %v1810 = vld [vmem:[#allocation2 + $0x71] sm:$0xff]
      %v1811 = vld [vmem:[#allocation2 + $0x79] sm:$0xf]
      %s1812 = scalar_lea.vmem %s4, 768
      %v1813 = vld [vmem:[%s1812] sm:$0xff]
      %v1814 = vld [vmem:[%s1812 + $0x8] sm:$0xff]
      %v1815 = vld [vmem:[%s1812 + $0x10] sm:$0xff]
      %v1816 = vld [vmem:[%s1812 + $0x18] sm:$0xff]
      %v1817 = vld [vmem:[%s1812 + $0x20] sm:$0xff]
      %v1818 = vld [vmem:[%s1812 + $0x28] sm:$0xff]
      %v1819 = vld [vmem:[%s1812 + $0x30] sm:$0xff]
      %v1820 = vld [vmem:[%s1812 + $0x38] sm:$0xff]
      %v1821 = vld [vmem:[%s1812 + $0x40] sm:$0xff]
      %v1822 = vld [vmem:[%s1812 + $0x48] sm:$0xff]
      %v1823 = vld [vmem:[%s1812 + $0x50] sm:$0xff]
      %v1824 = vld [vmem:[%s1812 + $0x58] sm:$0xff]
      %v1825 = vld [vmem:[%s1812 + $0x60] sm:$0xff]
      %v1826 = vld [vmem:[%s1812 + $0x68] sm:$0xff]
      %v1827 = vld [vmem:[%s1812 + $0x70] sm:$0xff]
      %v1828 = vld [vmem:[%s1812 + $0x78] sm:$0xff]
      %1829 = vmatprep.subr.mxu0 0.0
      %1830 = vmatpush1.msra.mxu0 %v1813
      %1831 = vmatprep.subr.mxu0 0.0
      %1832 = vmatpush1.msra.mxu0 %v1814
      %1833 = vmatprep.subr.mxu0 0.0
      %1834 = vmatpush1.msra.mxu0 %v1815
      %1835 = vmatprep.subr.mxu0 0.0
      %1836 = vmatpush1.msra.mxu0 %v1816
      %1837 = vmatprep.subr.mxu0 0.0
      %1838 = vmatpush1.msra.mxu0 %v1817
      %1839 = vmatprep.subr.mxu0 0.0
      %1840 = vmatpush1.msra.mxu0 %v1818
      %1841 = vmatprep.subr.mxu0 0.0
      %1842 = vmatpush1.msra.mxu0 %v1819
      %1843 = vmatprep.subr.mxu0 0.0
      %1844 = vmatpush1.msra.mxu0 %v1820
      %1845 = vmatprep.subr.mxu0 0.0
      %1846 = vmatpush1.msra.mxu0 %v1821
      %1847 = vmatprep.subr.mxu0 0.0
      %1848 = vmatpush1.msra.mxu0 %v1822
      %1849 = vmatprep.subr.mxu0 0.0
      %1850 = vmatpush1.msra.mxu0 %v1823
      %1851 = vmatprep.subr.mxu0 0.0
      %1852 = vmatpush1.msra.mxu0 %v1824
      %1853 = vmatprep.subr.mxu0 0.0
      %1854 = vmatpush1.msra.mxu0 %v1825
      %1855 = vmatprep.subr.mxu0 0.0
      %1856 = vmatpush1.msra.mxu0 %v1826
      %1857 = vmatprep.subr.mxu0 0.0
      %1858 = vmatpush1.msra.mxu0 %v1827
      %1859 = vmatprep.subr.mxu0 0.0
      %1860 = vmatpush1.msra.mxu0 %v1828
      %1861 = vmatprep.subr.mxu0 0.0
      %1862 = vmatpush1.msra.mxu0 0.0
      %1863 = vmatprep.subr.mxu0 0.0
      %1864 = vmatpush1.msra.mxu0 0.0
      %1865 = vmatprep.subr.mxu0 0.0
      %1866 = vmatpush1.msra.mxu0 0.0
      %1867 = vmatprep.subr.mxu0 0.0
      %1868 = vmatpush1.msra.mxu0 0.0
      %1869 = vmatprep.subr.mxu0 0.0
      %1870 = vmatpush1.msra.mxu0 0.0
      %1871 = vmatprep.subr.mxu0 0.0
      %1872 = vmatpush1.msra.mxu0 0.0
      %1873 = vmatprep.subr.mxu0 0.0
      %1874 = vmatpush1.msra.mxu0 0.0
      %1875 = vmatprep.subr.mxu0 0.0
      %1876 = vmatpush1.msra.mxu0 0.0
      %1877 = vmatprep.subr.mxu0 0.0
      %1878 = vmatpush1.msra.mxu0 0.0
      %1879 = vmatprep.subr.mxu0 0.0
      %1880 = vmatpush1.msra.mxu0 0.0
      %1881 = vmatprep.subr.mxu0 0.0
      %1882 = vmatpush1.msra.mxu0 0.0
      %1883 = vmatprep.subr.mxu0 0.0
      %1884 = vmatpush1.msra.mxu0 0.0
      %1885 = vmatprep.subr.mxu0 0.0
      %1886 = vmatpush1.msra.mxu0 0.0
      %1887 = vmatprep.subr.mxu0 0.0
      %1888 = vmatpush1.msra.mxu0 0.0
      %1889 = vmatprep.subr.mxu0 0.0
      %1890 = vmatpush1.msra.mxu0 0.0
      %1891 = vmatprep.subr.mxu0 0.0
      %1892 = vmatpush1.msra.mxu0 0.0
      %1893 = vmatprep.mubr.f32.mxu0 0.0
      %1894 = vmatmul.mubr.f32.gmra.mrb[0].mxu0 %v1799
      %v1895 = vpop.f32.mrb[0].mxu0
      %v1896 = vadd.f32 0.0, %v1895
      %v1897 = vpop.f32.mrb[0].mxu0
      %1898 = vmatprep.mubr.f32.mxu0 0.0
      %1899 = vmatmul.mubr.f32.gmra.mrb[0].mxu0 %v1800
      %v1900 = vpop.f32.mrb[0].mxu0
      %v1901 = vadd.f32 0.0, %v1900
      %v1902 = vpop.f32.mrb[0].mxu0
      %1903 = vmatprep.mubr.f32.mxu0 0.0
      %1904 = vmatmul.mubr.f32.gmra.mrb[0].mxu0 %v1801
      %v1905 = vpop.f32.mrb[0].mxu0
      %v1906 = vadd.f32 0.0, %v1905
      %v1907 = vpop.f32.mrb[0].mxu0
      %1908 = vmatprep.mubr.f32.mxu0 0.0
      %1909 = vmatmul.mubr.f32.gmra.mrb[0].mxu0 %v1802
      %v1910 = vpop.f32.mrb[0].mxu0
      %v1911 = vadd.f32 0.0, %v1910
      %v1912 = vpop.f32.mrb[0].mxu0
      %1913 = vmatprep.mubr.f32.mxu0 0.0
      %1914 = vmatmul.mubr.f32.gmra.mrb[0].mxu0 %v1803
      %v1915 = vpop.f32.mrb[0].mxu0
      %v1916 = vadd.f32 0.0, %v1915
      %v1917 = vpop.f32.mrb[0].mxu0
      %1918 = vmatprep.mubr.f32.mxu0 0.0
      %1919 = vmatmul.mubr.f32.gmra.mrb[0].mxu0 %v1804
      %v1920 = vpop.f32.mrb[0].mxu0
      %v1921 = vadd.f32 0.0, %v1920
      %v1922 = vpop.f32.mrb[0].mxu0
      %1923 = vmatprep.mubr.f32.mxu0 0.0
      %1924 = vmatmul.mubr.f32.gmra.mrb[0].mxu0 %v1805
      %v1925 = vpop.f32.mrb[0].mxu0
      %v1926 = vadd.f32 0.0, %v1925
      %v1927 = vpop.f32.mrb[0].mxu0
      %1928 = vmatprep.mubr.f32.mxu0 0.0
      %1929 = vmatmul.mubr.f32.gmra.mrb[0].mxu0 %v1806
      %v1930 = vpop.f32.mrb[0].mxu0
      %v1931 = vadd.f32 0.0, %v1930
      %v1932 = vpop.f32.mrb[0].mxu0
      %1933 = vmatprep.mubr.f32.mxu0 0.0
      %1934 = vmatmul.mubr.f32.gmra.mrb[0].mxu0 %v1807
      %v1935 = vpop.f32.mrb[0].mxu0
      %v1936 = vadd.f32 0.0, %v1935
      %v1937 = vpop.f32.mrb[0].mxu0
      %1938 = vmatprep.mubr.f32.mxu0 0.0
      %1939 = vmatmul.mubr.f32.gmra.mrb[0].mxu0 %v1808
      %v1940 = vpop.f32.mrb[0].mxu0
      %v1941 = vadd.f32 0.0, %v1940
      %v1942 = vpop.f32.mrb[0].mxu0
      %1943 = vmatprep.mubr.f32.mxu0 0.0
      %1944 = vmatmul.mubr.f32.gmra.mrb[0].mxu0 %v1809
      %v1945 = vpop.f32.mrb[0].mxu0
      %v1946 = vadd.f32 0.0, %v1945
      %v1947 = vpop.f32.mrb[0].mxu0
      %1948 = vmatprep.mubr.f32.mxu0 0.0
      %1949 = vmatmul.mubr.f32.gmra.mrb[0].mxu0 %v1810
      %v1950 = vpop.f32.mrb[0].mxu0
      %v1951 = vadd.f32 0.0, %v1950
      %v1952 = vpop.f32.mrb[0].mxu0
      %1953 = vmatprep.mubr.f32.mxu0 0.0
      %1954 = vmatmul.mubr.f32.gmra.mrb[0].mxu0 %v1811
      %v1955 = vpop.f32.mrb[0].mxu0
      %v1956 = vadd.f32 0.0, %v1955
      %v1957 = vpop.f32.mrb[0].mxu0
      %1958 = vdwg.mxu0
      %v1959 = vadd.f32 %v1786, %v1896
      %v1960 = vadd.f32 %v1787, %v1901
      %v1961 = vadd.f32 %v1788, %v1906
      %v1962 = vadd.f32 %v1789, %v1911
      %v1963 = vadd.f32 %v1790, %v1916
      %v1964 = vadd.f32 %v1791, %v1921
      %v1965 = vadd.f32 %v1792, %v1926
      %v1966 = vadd.f32 %v1793, %v1931
      %v1967 = vadd.f32 %v1794, %v1936
      %v1968 = vadd.f32 %v1795, %v1941
      %v1969 = vadd.f32 %v1796, %v1946
      %v1970 = vadd.f32 %v1797, %v1951
      %v1971 = vadd.f32 %v1798, %v1956
      %v1972 = vld [vmem:[#allocation2 + $0x1a] sm:$0xff]
      %v1973 = vld [vmem:[#allocation2 + $0x22] sm:$0xff]
      %v1974 = vld [vmem:[#allocation2 + $0x2a] sm:$0xff]
      %v1975 = vld [vmem:[#allocation2 + $0x32] sm:$0xff]
      %v1976 = vld [vmem:[#allocation2 + $0x3a] sm:$0xff]
      %v1977 = vld [vmem:[#allocation2 + $0x42] sm:$0xff]
      %v1978 = vld [vmem:[#allocation2 + $0x4a] sm:$0xff]
      %v1979 = vld [vmem:[#allocation2 + $0x52] sm:$0xff]
      %v1980 = vld [vmem:[#allocation2 + $0x5a] sm:$0xff]
      %v1981 = vld [vmem:[#allocation2 + $0x62] sm:$0xff]
      %v1982 = vld [vmem:[#allocation2 + $0x6a] sm:$0xff]
      %v1983 = vld [vmem:[#allocation2 + $0x72] sm:$0xff]
      %v1984 = vld [vmem:[#allocation2 + $0x7a] sm:$0xf]
      %s1985 = scalar_lea.vmem %s4, 896
      %v1986 = vld [vmem:[%s1985] sm:$0xff]
      %v1987 = vld [vmem:[%s1985 + $0x8] sm:$0xff]
      %v1988 = vld [vmem:[%s1985 + $0x10] sm:$0xff]
      %v1989 = vld [vmem:[%s1985 + $0x18] sm:$0xff]
      %v1990 = vld [vmem:[%s1985 + $0x20] sm:$0xff]
      %v1991 = vld [vmem:[%s1985 + $0x28] sm:$0xff]
      %v1992 = vld [vmem:[%s1985 + $0x30] sm:$0xff]
      %v1993 = vld [vmem:[%s1985 + $0x38] sm:$0xff]
      %v1994 = vld [vmem:[%s1985 + $0x40] sm:$0xff]
      %v1995 = vld [vmem:[%s1985 + $0x48] sm:$0xff]
      %v1996 = vld [vmem:[%s1985 + $0x50] sm:$0xff]
      %v1997 = vld [vmem:[%s1985 + $0x58] sm:$0xff]
      %v1998 = vld [vmem:[%s1985 + $0x60] sm:$0xff]
      %v1999 = vld [vmem:[%s1985 + $0x68] sm:$0xff]
      %v2000 = vld [vmem:[%s1985 + $0x70] sm:$0xff]
      %v2001 = vld [vmem:[%s1985 + $0x78] sm:$0xff]
      %2002 = vmatprep.subr.mxu0 0.0
      %2003 = vmatpush1.msra.mxu0 %v1986
      %2004 = vmatprep.subr.mxu0 0.0
      %2005 = vmatpush1.msra.mxu0 %v1987
      %2006 = vmatprep.subr.mxu0 0.0
      %2007 = vmatpush1.msra.mxu0 %v1988
      %2008 = vmatprep.subr.mxu0 0.0
      %2009 = vmatpush1.msra.mxu0 %v1989
      %2010 = vmatprep.subr.mxu0 0.0
      %2011 = vmatpush1.msra.mxu0 %v1990
      %2012 = vmatprep.subr.mxu0 0.0
      %2013 = vmatpush1.msra.mxu0 %v1991
      %2014 = vmatprep.subr.mxu0 0.0
      %2015 = vmatpush1.msra.mxu0 %v1992
      %2016 = vmatprep.subr.mxu0 0.0
      %2017 = vmatpush1.msra.mxu0 %v1993
      %2018 = vmatprep.subr.mxu0 0.0
      %2019 = vmatpush1.msra.mxu0 %v1994
      %2020 = vmatprep.subr.mxu0 0.0
      %2021 = vmatpush1.msra.mxu0 %v1995
      %2022 = vmatprep.subr.mxu0 0.0
      %2023 = vmatpush1.msra.mxu0 %v1996
      %2024 = vmatprep.subr.mxu0 0.0
      %2025 = vmatpush1.msra.mxu0 %v1997
      %2026 = vmatprep.subr.mxu0 0.0
      %2027 = vmatpush1.msra.mxu0 %v1998
      %2028 = vmatprep.subr.mxu0 0.0
      %2029 = vmatpush1.msra.mxu0 %v1999
      %2030 = vmatprep.subr.mxu0 0.0
      %2031 = vmatpush1.msra.mxu0 %v2000
      %2032 = vmatprep.subr.mxu0 0.0
      %2033 = vmatpush1.msra.mxu0 %v2001
      %2034 = vmatprep.subr.mxu0 0.0
      %2035 = vmatpush1.msra.mxu0 0.0
      %2036 = vmatprep.subr.mxu0 0.0
      %2037 = vmatpush1.msra.mxu0 0.0
      %2038 = vmatprep.subr.mxu0 0.0
      %2039 = vmatpush1.msra.mxu0 0.0
      %2040 = vmatprep.subr.mxu0 0.0
      %2041 = vmatpush1.msra.mxu0 0.0
      %2042 = vmatprep.subr.mxu0 0.0
      %2043 = vmatpush1.msra.mxu0 0.0
      %2044 = vmatprep.subr.mxu0 0.0
      %2045 = vmatpush1.msra.mxu0 0.0
      %2046 = vmatprep.subr.mxu0 0.0
      %2047 = vmatpush1.msra.mxu0 0.0
      %2048 = vmatprep.subr.mxu0 0.0
      %2049 = vmatpush1.msra.mxu0 0.0
      %2050 = vmatprep.subr.mxu0 0.0
      %2051 = vmatpush1.msra.mxu0 0.0
      %2052 = vmatprep.subr.mxu0 0.0
      %2053 = vmatpush1.msra.mxu0 0.0
      %2054 = vmatprep.subr.mxu0 0.0
      %2055 = vmatpush1.msra.mxu0 0.0
      %2056 = vmatprep.subr.mxu0 0.0
      %2057 = vmatpush1.msra.mxu0 0.0
      %2058 = vmatprep.subr.mxu0 0.0
      %2059 = vmatpush1.msra.mxu0 0.0
      %2060 = vmatprep.subr.mxu0 0.0
      %2061 = vmatpush1.msra.mxu0 0.0
      %2062 = vmatprep.subr.mxu0 0.0
      %2063 = vmatpush1.msra.mxu0 0.0
      %2064 = vmatprep.subr.mxu0 0.0
      %2065 = vmatpush1.msra.mxu0 0.0
      %2066 = vmatprep.mubr.f32.mxu0 0.0
      %2067 = vmatmul.mubr.f32.gmra.mrb[0].mxu0 %v1972
      %v2068 = vpop.f32.mrb[0].mxu0
      %v2069 = vadd.f32 0.0, %v2068
      %v2070 = vpop.f32.mrb[0].mxu0
      %2071 = vmatprep.mubr.f32.mxu0 0.0
      %2072 = vmatmul.mubr.f32.gmra.mrb[0].mxu0 %v1973
      %v2073 = vpop.f32.mrb[0].mxu0
      %v2074 = vadd.f32 0.0, %v2073
      %v2075 = vpop.f32.mrb[0].mxu0
      %2076 = vmatprep.mubr.f32.mxu0 0.0
      %2077 = vmatmul.mubr.f32.gmra.mrb[0].mxu0 %v1974
      %v2078 = vpop.f32.mrb[0].mxu0
      %v2079 = vadd.f32 0.0, %v2078
      %v2080 = vpop.f32.mrb[0].mxu0
      %2081 = vmatprep.mubr.f32.mxu0 0.0
      %2082 = vmatmul.mubr.f32.gmra.mrb[0].mxu0 %v1975
      %v2083 = vpop.f32.mrb[0].mxu0
      %v2084 = vadd.f32 0.0, %v2083
      %v2085 = vpop.f32.mrb[0].mxu0
      %2086 = vmatprep.mubr.f32.mxu0 0.0
      %2087 = vmatmul.mubr.f32.gmra.mrb[0].mxu0 %v1976
      %v2088 = vpop.f32.mrb[0].mxu0
      %v2089 = vadd.f32 0.0, %v2088
      %v2090 = vpop.f32.mrb[0].mxu0
      %2091 = vmatprep.mubr.f32.mxu0 0.0
      %2092 = vmatmul.mubr.f32.gmra.mrb[0].mxu0 %v1977
      %v2093 = vpop.f32.mrb[0].mxu0
      %v2094 = vadd.f32 0.0, %v2093
      %v2095 = vpop.f32.mrb[0].mxu0
      %2096 = vmatprep.mubr.f32.mxu0 0.0
      %2097 = vmatmul.mubr.f32.gmra.mrb[0].mxu0 %v1978
      %v2098 = vpop.f32.mrb[0].mxu0
      %v2099 = vadd.f32 0.0, %v2098
      %v2100 = vpop.f32.mrb[0].mxu0
      %2101 = vmatprep.mubr.f32.mxu0 0.0
      %2102 = vmatmul.mubr.f32.gmra.mrb[0].mxu0 %v1979
      %v2103 = vpop.f32.mrb[0].mxu0
      %v2104 = vadd.f32 0.0, %v2103
      %v2105 = vpop.f32.mrb[0].mxu0
      %2106 = vmatprep.mubr.f32.mxu0 0.0
      %2107 = vmatmul.mubr.f32.gmra.mrb[0].mxu0 %v1980
      %v2108 = vpop.f32.mrb[0].mxu0
      %v2109 = vadd.f32 0.0, %v2108
      %v2110 = vpop.f32.mrb[0].mxu0
      %2111 = vmatprep.mubr.f32.mxu0 0.0
      %2112 = vmatmul.mubr.f32.gmra.mrb[0].mxu0 %v1981
      %v2113 = vpop.f32.mrb[0].mxu0
      %v2114 = vadd.f32 0.0, %v2113
      %v2115 = vpop.f32.mrb[0].mxu0
      %2116 = vmatprep.mubr.f32.mxu0 0.0
      %2117 = vmatmul.mubr.f32.gmra.mrb[0].mxu0 %v1982
      %v2118 = vpop.f32.mrb[0].mxu0
      %v2119 = vadd.f32 0.0, %v2118
      %v2120 = vpop.f32.mrb[0].mxu0
      %2121 = vmatprep.mubr.f32.mxu0 0.0
      %2122 = vmatmul.mubr.f32.gmra.mrb[0].mxu0 %v1983
      %v2123 = vpop.f32.mrb[0].mxu0
      %v2124 = vadd.f32 0.0, %v2123
      %v2125 = vpop.f32.mrb[0].mxu0
      %2126 = vmatprep.mubr.f32.mxu0 0.0
      %2127 = vmatmul.mubr.f32.gmra.mrb[0].mxu0 %v1984
      %v2128 = vpop.f32.mrb[0].mxu0
      %v2129 = vadd.f32 0.0, %v2128
      %v2130 = vpop.f32.mrb[0].mxu0
      %2131 = vdwg.mxu0
      %v2132 = vadd.f32 %v1959, %v2069
      %v2133 = vadd.f32 %v1960, %v2074
      %v2134 = vadd.f32 %v1961, %v2079
      %v2135 = vadd.f32 %v1962, %v2084
      %v2136 = vadd.f32 %v1963, %v2089
      %v2137 = vadd.f32 %v1964, %v2094
      %v2138 = vadd.f32 %v1965, %v2099
      %v2139 = vadd.f32 %v1966, %v2104
      %v2140 = vadd.f32 %v1967, %v2109
      %v2141 = vadd.f32 %v1968, %v2114
      %v2142 = vadd.f32 %v1969, %v2119
      %v2143 = vadd.f32 %v1970, %v2124
      %v2144 = vadd.f32 %v1971, %v2129
      %v2145 = vld [vmem:[#allocation2 + $0x1b] sm:$0xff]
      %v2146 = vld [vmem:[#allocation2 + $0x23] sm:$0xff]
      %v2147 = vld [vmem:[#allocation2 + $0x2b] sm:$0xff]
      %v2148 = vld [vmem:[#allocation2 + $0x33] sm:$0xff]
      %v2149 = vld [vmem:[#allocation2 + $0x3b] sm:$0xff]
      %v2150 = vld [vmem:[#allocation2 + $0x43] sm:$0xff]
      %v2151 = vld [vmem:[#allocation2 + $0x4b] sm:$0xff]
      %v2152 = vld [vmem:[#allocation2 + $0x53] sm:$0xff]
      %v2153 = vld [vmem:[#allocation2 + $0x5b] sm:$0xff]
      %v2154 = vld [vmem:[#allocation2 + $0x63] sm:$0xff]
      %v2155 = vld [vmem:[#allocation2 + $0x6b] sm:$0xff]
      %v2156 = vld [vmem:[#allocation2 + $0x73] sm:$0xff]
      %v2157 = vld [vmem:[#allocation2 + $0x7b] sm:$0xf]
      %s2158 = scalar_lea.vmem %s4, 1024
      %v2159 = vld [vmem:[%s2158] sm:$0xff]
      %v2160 = vld [vmem:[%s2158 + $0x8] sm:$0xff]
      %v2161 = vld [vmem:[%s2158 + $0x10] sm:$0xff]
      %v2162 = vld [vmem:[%s2158 + $0x18] sm:$0xff]
      %v2163 = vld [vmem:[%s2158 + $0x20] sm:$0xff]
      %v2164 = vld [vmem:[%s2158 + $0x28] sm:$0xff]
      %v2165 = vld [vmem:[%s2158 + $0x30] sm:$0xff]
      %v2166 = vld [vmem:[%s2158 + $0x38] sm:$0xff]
      %v2167 = vld [vmem:[%s2158 + $0x40] sm:$0xff]
      %v2168 = vld [vmem:[%s2158 + $0x48] sm:$0xff]
      %v2169 = vld [vmem:[%s2158 + $0x50] sm:$0xff]
      %v2170 = vld [vmem:[%s2158 + $0x58] sm:$0xff]
      %v2171 = vld [vmem:[%s2158 + $0x60] sm:$0xff]
      %v2172 = vld [vmem:[%s2158 + $0x68] sm:$0xff]
      %v2173 = vld [vmem:[%s2158 + $0x70] sm:$0xff]
      %v2174 = vld [vmem:[%s2158 + $0x78] sm:$0xff]
      %2175 = vmatprep.subr.mxu0 0.0
      %2176 = vmatpush1.msra.mxu0 %v2159
      %2177 = vmatprep.subr.mxu0 0.0
      %2178 = vmatpush1.msra.mxu0 %v2160
      %2179 = vmatprep.subr.mxu0 0.0
      %2180 = vmatpush1.msra.mxu0 %v2161
      %2181 = vmatprep.subr.mxu0 0.0
      %2182 = vmatpush1.msra.mxu0 %v2162
      %2183 = vmatprep.subr.mxu0 0.0
      %2184 = vmatpush1.msra.mxu0 %v2163
      %2185 = vmatprep.subr.mxu0 0.0
      %2186 = vmatpush1.msra.mxu0 %v2164
      %2187 = vmatprep.subr.mxu0 0.0
      %2188 = vmatpush1.msra.mxu0 %v2165
      %2189 = vmatprep.subr.mxu0 0.0
      %2190 = vmatpush1.msra.mxu0 %v2166
      %2191 = vmatprep.subr.mxu0 0.0
      %2192 = vmatpush1.msra.mxu0 %v2167
      %2193 = vmatprep.subr.mxu0 0.0
      %2194 = vmatpush1.msra.mxu0 %v2168
      %2195 = vmatprep.subr.mxu0 0.0
      %2196 = vmatpush1.msra.mxu0 %v2169
      %2197 = vmatprep.subr.mxu0 0.0
      %2198 = vmatpush1.msra.mxu0 %v2170
      %2199 = vmatprep.subr.mxu0 0.0
      %2200 = vmatpush1.msra.mxu0 %v2171
      %2201 = vmatprep.subr.mxu0 0.0
      %2202 = vmatpush1.msra.mxu0 %v2172
      %2203 = vmatprep.subr.mxu0 0.0
      %2204 = vmatpush1.msra.mxu0 %v2173
      %2205 = vmatprep.subr.mxu0 0.0
      %2206 = vmatpush1.msra.mxu0 %v2174
      %2207 = vmatprep.subr.mxu0 0.0
      %2208 = vmatpush1.msra.mxu0 0.0
      %2209 = vmatprep.subr.mxu0 0.0
      %2210 = vmatpush1.msra.mxu0 0.0
      %2211 = vmatprep.subr.mxu0 0.0
      %2212 = vmatpush1.msra.mxu0 0.0
      %2213 = vmatprep.subr.mxu0 0.0
      %2214 = vmatpush1.msra.mxu0 0.0
      %2215 = vmatprep.subr.mxu0 0.0
      %2216 = vmatpush1.msra.mxu0 0.0
      %2217 = vmatprep.subr.mxu0 0.0
      %2218 = vmatpush1.msra.mxu0 0.0
      %2219 = vmatprep.subr.mxu0 0.0
      %2220 = vmatpush1.msra.mxu0 0.0
      %2221 = vmatprep.subr.mxu0 0.0
      %2222 = vmatpush1.msra.mxu0 0.0
      %2223 = vmatprep.subr.mxu0 0.0
      %2224 = vmatpush1.msra.mxu0 0.0
      %2225 = vmatprep.subr.mxu0 0.0
      %2226 = vmatpush1.msra.mxu0 0.0
      %2227 = vmatprep.subr.mxu0 0.0
      %2228 = vmatpush1.msra.mxu0 0.0
      %2229 = vmatprep.subr.mxu0 0.0
      %2230 = vmatpush1.msra.mxu0 0.0
      %2231 = vmatprep.subr.mxu0 0.0
      %2232 = vmatpush1.msra.mxu0 0.0
      %2233 = vmatprep.subr.mxu0 0.0
      %2234 = vmatpush1.msra.mxu0 0.0
      %2235 = vmatprep.subr.mxu0 0.0
      %2236 = vmatpush1.msra.mxu0 0.0
      %2237 = vmatprep.subr.mxu0 0.0
      %2238 = vmatpush1.msra.mxu0 0.0
      %2239 = vmatprep.mubr.f32.mxu0 0.0
      %2240 = vmatmul.mubr.f32.gmra.mrb[0].mxu0 %v2145
      %v2241 = vpop.f32.mrb[0].mxu0
      %v2242 = vadd.f32 0.0, %v2241
      %v2243 = vpop.f32.mrb[0].mxu0
      %2244 = vmatprep.mubr.f32.mxu0 0.0
      %2245 = vmatmul.mubr.f32.gmra.mrb[0].mxu0 %v2146
      %v2246 = vpop.f32.mrb[0].mxu0
      %v2247 = vadd.f32 0.0, %v2246
      %v2248 = vpop.f32.mrb[0].mxu0
      %2249 = vmatprep.mubr.f32.mxu0 0.0
      %2250 = vmatmul.mubr.f32.gmra.mrb[0].mxu0 %v2147
      %v2251 = vpop.f32.mrb[0].mxu0
      %v2252 = vadd.f32 0.0, %v2251
      %v2253 = vpop.f32.mrb[0].mxu0
      %2254 = vmatprep.mubr.f32.mxu0 0.0
      %2255 = vmatmul.mubr.f32.gmra.mrb[0].mxu0 %v2148
      %v2256 = vpop.f32.mrb[0].mxu0
      %v2257 = vadd.f32 0.0, %v2256
      %v2258 = vpop.f32.mrb[0].mxu0
      %2259 = vmatprep.mubr.f32.mxu0 0.0
      %2260 = vmatmul.mubr.f32.gmra.mrb[0].mxu0 %v2149
      %v2261 = vpop.f32.mrb[0].mxu0
      %v2262 = vadd.f32 0.0, %v2261
      %v2263 = vpop.f32.mrb[0].mxu0
      %2264 = vmatprep.mubr.f32.mxu0 0.0
      %2265 = vmatmul.mubr.f32.gmra.mrb[0].mxu0 %v2150
      %v2266 = vpop.f32.mrb[0].mxu0
      %v2267 = vadd.f32 0.0, %v2266
      %v2268 = vpop.f32.mrb[0].mxu0
      %2269 = vmatprep.mubr.f32.mxu0 0.0
      %2270 = vmatmul.mubr.f32.gmra.mrb[0].mxu0 %v2151
      %v2271 = vpop.f32.mrb[0].mxu0
      %v2272 = vadd.f32 0.0, %v2271
      %v2273 = vpop.f32.mrb[0].mxu0
      %2274 = vmatprep.mubr.f32.mxu0 0.0
      %2275 = vmatmul.mubr.f32.gmra.mrb[0].mxu0 %v2152
      %v2276 = vpop.f32.mrb[0].mxu0
      %v2277 = vadd.f32 0.0, %v2276
      %v2278 = vpop.f32.mrb[0].mxu0
      %2279 = vmatprep.mubr.f32.mxu0 0.0
      %2280 = vmatmul.mubr.f32.gmra.mrb[0].mxu0 %v2153
      %v2281 = vpop.f32.mrb[0].mxu0
      %v2282 = vadd.f32 0.0, %v2281
      %v2283 = vpop.f32.mrb[0].mxu0
      %2284 = vmatprep.mubr.f32.mxu0 0.0
      %2285 = vmatmul.mubr.f32.gmra.mrb[0].mxu0 %v2154
      %v2286 = vpop.f32.mrb[0].mxu0
      %v2287 = vadd.f32 0.0, %v2286
      %v2288 = vpop.f32.mrb[0].mxu0
      %2289 = vmatprep.mubr.f32.mxu0 0.0
      %2290 = vmatmul.mubr.f32.gmra.mrb[0].mxu0 %v2155
      %v2291 = vpop.f32.mrb[0].mxu0
      %v2292 = vadd.f32 0.0, %v2291
      %v2293 = vpop.f32.mrb[0].mxu0
      %2294 = vmatprep.mubr.f32.mxu0 0.0
      %2295 = vmatmul.mubr.f32.gmra.mrb[0].mxu0 %v2156
      %v2296 = vpop.f32.mrb[0].mxu0
      %v2297 = vadd.f32 0.0, %v2296
      %v2298 = vpop.f32.mrb[0].mxu0
      %2299 = vmatprep.mubr.f32.mxu0 0.0
      %2300 = vmatmul.mubr.f32.gmra.mrb[0].mxu0 %v2157
      %v2301 = vpop.f32.mrb[0].mxu0
      %v2302 = vadd.f32 0.0, %v2301
      %v2303 = vpop.f32.mrb[0].mxu0
      %2304 = vdwg.mxu0
      %v2305 = vadd.f32 %v2132, %v2242
      %v2306 = vadd.f32 %v2133, %v2247
      %v2307 = vadd.f32 %v2134, %v2252
      %v2308 = vadd.f32 %v2135, %v2257
      %v2309 = vadd.f32 %v2136, %v2262
      %v2310 = vadd.f32 %v2137, %v2267
      %v2311 = vadd.f32 %v2138, %v2272
      %v2312 = vadd.f32 %v2139, %v2277
      %v2313 = vadd.f32 %v2140, %v2282
      %v2314 = vadd.f32 %v2141, %v2287
      %v2315 = vadd.f32 %v2142, %v2292
      %v2316 = vadd.f32 %v2143, %v2297
      %v2317 = vadd.f32 %v2144, %v2302
      %2318 = vst [vmem:[%s257] sm:$0xff] %v2305
      %2319 = vst [vmem:[%s257 + $0x8] sm:$0xff] %v2306
      %2320 = vst [vmem:[%s257 + $0x10] sm:$0xff] %v2307
      %2321 = vst [vmem:[%s257 + $0x18] sm:$0xff] %v2308
      %2322 = vst [vmem:[%s257 + $0x20] sm:$0xff] %v2309
      %2323 = vst [vmem:[%s257 + $0x28] sm:$0xff] %v2310
      %2324 = vst [vmem:[%s257 + $0x30] sm:$0xff] %v2311
      %2325 = vst [vmem:[%s257 + $0x38] sm:$0xff] %v2312
      %2326 = vst [vmem:[%s257 + $0x40] sm:$0xff] %v2313
      %2327 = vst [vmem:[%s257 + $0x48] sm:$0xff] %v2314
      %2328 = vst [vmem:[%s257 + $0x50] sm:$0xff] %v2315
      %2329 = vst [vmem:[%s257 + $0x58] sm:$0xff] %v2316
      %2330 = vst [vmem:[%s257 + $0x60] sm:$0xf] %v2317
      %2331 = vst [vmem:[%s260] sm:$0x1] %v770
      %p2332 = scmp.lt.s32.totalorder %s18, 1
      %s2333 = scalar_select %p2332, %s18, 1
      %s2334 = smul.addr %s2333, 13
      %s2335 = smul.addr %s2334, 8
      %s2336 = scalar_lea.vmem %s5, %s2335
      %p2337 = scmp.lt.s32.totalorder %s18, 1
      %s2338 = scalar_select %p2337, %s18, 1
      %s2339 = scalar_lea.vmem %s6, %s2338
      // Predicated region
      $region41: #{dense_block_forward.5} parent=39 // pred_check
        %p2340 = pneg %p146
      $region42: #{dense_block_forward.5} parent=39 // pred_check_branch
        %2342 = sbr.rel (%p2340) target = $region44
      $region43: #{dense_block_forward.5} parent=39 // pred_region
        _
      $region44: #{dense_block_forward.5} parent=39 // pred_fallthru
        _
      // Predicated region
      $region45: #{dense_block_forward.5} parent=39 // pred_check
        %p2343 = pneg %p172
      $region46: #{dense_block_forward.5} parent=39 // pred_check_branch
        %2345 = sbr.rel (%p2343) target = $region48
      $region47: #{dense_block_forward.5} parent=39 // pred_region
        _
      $region48: #{dense_block_forward.5} parent=39 // pred_fallthru
        _
    $region40: #{dense_block_forward.5} parent=5 // pred_fallthru
      _
    %p2346 = scmp.le.s32.totalorder 2, %s13
    // Predicated region
    $region49: #{dense_block_forward.5} parent=5 // pred_check
      %p2347 = pneg %p2346
    $region50: #{dense_block_forward.5} parent=5 // pred_check_branch
      %2349 = sbr.rel (%p2347) target = $region52
    $region51: #{dense_block_forward.5} parent=5 // pred_region
      %s2350 = ssub.s32 %s13, 2
      // Predicated region
      $region53: #{dense_block_forward.5} parent=51 // pred_check
        %p2351 = pneg %p152
      $region54: #{dense_block_forward.5} parent=51 // pred_check_branch
        %2353 = sbr.rel (%p2351) target = $region56
      $region55: #{dense_block_forward.5} parent=51 // pred_region
        %p2354 = scmp.lt.s32.totalorder %s19, 1
        %s2355 = scalar_select %p2354, %s19, 1
        %s2356 = smul.addr %s2355, 13
        %s2357 = smul.addr %s2356, 8
        %s2358 = scalar_lea.vmem %s5, %s2357
      $region56: #{dense_block_forward.5} parent=51 // pred_fallthru
        _
      // Predicated region
      $region57: #{dense_block_forward.5} parent=51 // pred_check
        %p2359 = pneg %p178
      $region58: #{dense_block_forward.5} parent=51 // pred_check_branch
        %2361 = sbr.rel (%p2359) target = $region60
      $region59: #{dense_block_forward.5} parent=51 // pred_region
        %p2362 = scmp.lt.s32.totalorder %s19, 1
        %s2363 = scalar_select %p2362, %s19, 1
        %s2364 = scalar_lea.vmem %s6, %s2363
      $region60: #{dense_block_forward.5} parent=51 // pred_fallthru
        _
    $region52: #{dense_block_forward.5} parent=5 // pred_fallthru
      _
  $region6: #{dense_block_forward.5} parent=0 // loop_footer
    %s17 = sadd.s32 1, %s13
  $region7: #{dense_block_forward.5} parent=0 // loop_footer_branch
    %12 = sbr.rel target = $region3
  $region8: #{dense_block_forward.5} parent=0 // loop_exit
    _

</llo_original>
